<compile_context>
chip_gen: v7x
topology: tpu7x:2x2x1
jax: 0.10.0
libtpu: 0.0.40
codegen_flags: <defaults>
</compile_context>

<pallas_src>
import functools

import jax
import jax.numpy as jnp
import numpy as np
from jax.experimental import pallas as pl
from jax.experimental.pallas import tpu as pltpu


# ---------------------------------------------------------------------------
# Fused Stage kernel: one (C, L) slab per grid step, L = B_TILE * H * W.
# ---------------------------------------------------------------------------
def _stage_kernel(x_ref, mask_ref, wblk_ref, bblk_ref, wpw_ref, wf_ref, bf_ref,
                  o_ref, *, W):
    C, L = x_ref.shape
    n_blocks = wblk_ref.shape[0]
    masks = mask_ref[...]                                    # (9, L) f32, 0/1

    tap_off = [dy * W + dx for dy in (-1, 0, 1) for dx in (-1, 0, 1)]

    def patch_of(t):
        # im2col of a (C, L) map: 9 shifted+masked copies stacked -> (9C, L).
        # roll + mask == SAME zero padding; cross-image wrap hits masked taps.
        taps = []
        for i, off in enumerate(tap_off):
            if off == 0:
                taps.append(t)
            else:
                taps.append(pltpu.roll(t, (-off) % L, axis=1) * masks[i:i + 1, :])
        return jnp.concatenate(taps, axis=0).astype(jnp.bfloat16)

    x0 = x_ref[...]                                          # (C, L) f32
    res = x0
    # TODO(synk): switch to lax.fori_loop with dynamic wblk_ref[bi] indexing if
    # n_blocks grows beyond ~4 (static unroll is fine at n_blocks=2).
    for bi in range(n_blocks):
        Wb = wblk_ref[bi]            # (4C, 9C) bf16: [w1; w2_x; w2_out1; dw]
        Bb = bblk_ref[bi]            # (4C, 1)  f32:  [b1; b2; bdw; bpw]

        # conv1 + conv2(x-part) share patch_r -> single MXU matmul.
        patch_r = patch_of(res)
        y12 = jnp.dot(Wb[0:2 * C], patch_r, preferred_element_type=jnp.float32)
        out1 = jnp.maximum(y12[0:C] + Bb[0:C], 0.0)

        # conv2(concat([res, out1])) == conv(res, w2_x) + conv(out1, w2_out1)
        out2 = (y12[C:2 * C] + Bb[C:2 * C]
                + jnp.dot(Wb[2 * C:3 * C], patch_of(out1),
                          preferred_element_type=jnp.float32))

        # NA: depthwise 3x3 (as dense block-diag matmul) + ReLU -> 1x1 -> sigmoid
        dw = jnp.maximum(
            jnp.dot(Wb[3 * C:4 * C], patch_of(out2),
                    preferred_element_type=jnp.float32) + Bb[2 * C:3 * C], 0.0)
        att = jax.nn.sigmoid(
            jnp.dot(wpw_ref[bi], dw.astype(jnp.bfloat16),
                    preferred_element_type=jnp.float32) + Bb[3 * C:4 * C])

        res = att * out2 + res                               # gate + block residual

    # Final conv + stage residual
    o_ref[...] = (jnp.dot(wf_ref[...], patch_of(res),
                          preferred_element_type=jnp.float32)
                  + bf_ref[...] + x0)


# ---------------------------------------------------------------------------
# Host-side helpers: masks, tiling choice, specs.
# ---------------------------------------------------------------------------
def _border_masks(H, W, b_tile):
    """(9, b_tile*H*W) f32 validity masks for the 9 taps of a SAME 3x3 conv."""
    yy, xx = np.divmod(np.arange(H * W), W)
    rows = []
    for dy in (-1, 0, 1):
        for dx in (-1, 0, 1):
            ok = ((yy + dy >= 0) & (yy + dy < H) &
                  (xx + dx >= 0) & (xx + dx < W))
            rows.append(ok.astype(np.float32))
    return np.tile(np.stack(rows), (1, b_tile))


def _pick_b_tile(N, HW, max_lanes=2048, min_grid=2):
    """Largest per-step image fold that keeps lanes <= max_lanes and (when
    possible) >= min_grid parallel grid steps for v7x's two TensorCores."""
    cands = [bt for bt in range(1, N + 1)
             if N % bt == 0 and bt * HW <= max_lanes]
    if not cands:
        return 1
    par = [bt for bt in cands if N // bt >= min_grid]
    return max(par) if par else max(cands)


def _const_spec(a):
    # Grid-invariant operand: full-array block, same block index every step.
    return pl.BlockSpec(a.shape, lambda g, _nd=a.ndim: (0,) * _nd)


@functools.partial(jax.jit, static_argnums=(2,))
def _stage_call(x_nchw, p, b_tile):
    N, C, H, W = x_nchw.shape
    HW = H * W
    L = b_tile * HW
    G = N // b_tile
    # Wrapper-side layout: channels -> sublanes, (image, spatial) -> lanes.
    x = (x_nchw.reshape(G, b_tile, C, HW)
                .transpose(0, 2, 1, 3)
                .reshape(G, C, L))
    masks = jnp.asarray(_border_masks(H, W, b_tile))
    consts = (masks, p["wblk"], p["bblk"], p["wpw"], p["wf"], p["bf"])

    out = pl.pallas_call(
        functools.partial(_stage_kernel, W=W),
        out_shape=jax.ShapeDtypeStruct((G, C, L), jnp.float32),
        grid=(G,),
        in_specs=[pl.BlockSpec((None, C, L), lambda g: (g, 0, 0))]
                 + [_const_spec(a) for a in consts],
        out_specs=pl.BlockSpec((None, C, L), lambda g: (g, 0, 0)),
        compiler_params=pltpu.CompilerParams(
            dimension_semantics=("parallel",)),
    )(x, *consts)

    return (out.reshape(G, C, b_tile, HW)
               .transpose(0, 2, 1, 3)
               .reshape(N, C, H, W))


def stage_forward(x_nchw, packed, *, max_lanes=2048, min_grid=2):
    """x_nchw: (N, C, H, W) float32; packed: see pack_params."""
    N, C, H, W = x_nchw.shape
    assert (H * W) % 128 == 0 and C % 8 == 0, "layout assumes (8,128) alignment"
    b_tile = _pick_b_tile(N, H * W, max_lanes, min_grid)
    return _stage_call(x_nchw, packed, b_tile)


# ---------------------------------------------------------------------------
# Parameter init (canonical conv layouts) and packing into kernel layout.
# ---------------------------------------------------------------------------
def init_params(key, C, n_blocks):
    blocks = []
    keys = jax.random.split(key, n_blocks + 1)
    for i in range(n_blocks):
        ks = jax.random.split(keys[i], 8)
        blocks.append(dict(
            w1=0.1 * jax.random.normal(ks[0], (3, 3, C, C), jnp.float32),
            b1=0.1 * jax.random.normal(ks[1], (C,), jnp.float32),
            w2=0.1 * jax.random.normal(ks[2], (3, 3, 2 * C, C), jnp.float32),
            b2=0.1 * jax.random.normal(ks[3], (C,), jnp.float32),
            wdw=0.1 * jax.random.normal(ks[4], (3, 3, C), jnp.float32),
            bdw=0.1 * jax.random.normal(ks[5], (C,), jnp.float32),
            wpw=0.1 * jax.random.normal(ks[6], (C, C), jnp.float32),  # (Cout, Cin)
            bpw=0.1 * jax.random.normal(ks[7], (C,), jnp.float32),
        ))
    kf = jax.random.split(keys[-1], 2)
    return dict(blocks=blocks,
                wf=0.1 * jax.random.normal(kf[0], (3, 3, C, C), jnp.float32),
                bf=0.1 * jax.random.normal(kf[1], (C,), jnp.float32))


def pack_params(canon):
    blocks = canon["blocks"]
    C = blocks[0]["b1"].shape[0]

    def w2k(w):   # (3, 3, Cin, Cout) -> (Cout, 9*Cin), tap-major columns
        return jnp.transpose(w, (3, 0, 1, 2)).reshape(w.shape[3], -1)

    def dw_dense(wdw):   # depthwise (3, 3, C) -> dense (C, 9C) block-diagonal
        w9 = wdw.reshape(9, C)
        return jnp.concatenate([jnp.diag(w9[t]) for t in range(9)], axis=1)

    col = lambda v: v.reshape(-1, 1)
    wblk, bblk, wpw = [], [], []
    for b in blocks:
        w12 = jnp.concatenate([w2k(b["w1"]), w2k(b["w2"][:, :, :C, :])], axis=0)
        wblk.append(jnp.concatenate(
            [w12, w2k(b["w2"][:, :, C:, :]), dw_dense(b["wdw"])], axis=0))
        bblk.append(jnp.concatenate(
            [col(b["b1"]), col(b["b2"]), col(b["bdw"]), col(b["bpw"])], axis=0))
        wpw.append(b["wpw"])

    return dict(
        wblk=jnp.stack(wblk).astype(jnp.bfloat16),   # (nb, 4C, 9C)
        bblk=jnp.stack(bblk).astype(jnp.float32),    # (nb, 4C, 1)
        wpw=jnp.stack(wpw).astype(jnp.bfloat16),     # (nb, C, C)
        wf=w2k(canon["wf"]).astype(jnp.bfloat16),    # (C, 9C)
        bf=col(canon["bf"]).astype(jnp.float32),     # (C, 1)
    )


# ---------------------------------------------------------------------------
# Pure-JAX f32 reference (NHWC) for correctness check.
# ---------------------------------------------------------------------------
def _ref_conv(x, w_hwio, b):
    y = jax.lax.conv_general_dilated(
        x, w_hwio, (1, 1), "SAME",
        dimension_numbers=("NHWC", "HWIO", "NHWC"),
        precision=jax.lax.Precision.HIGHEST)
    return y + b


def _ref_dwconv(x, wdw, b):
    C = x.shape[-1]
    y = jax.lax.conv_general_dilated(
        x, wdw.reshape(3, 3, 1, C), (1, 1), "SAME",
        dimension_numbers=("NHWC", "HWIO", "NHWC"),
        feature_group_count=C,
        precision=jax.lax.Precision.HIGHEST)
    return y + b


def ref_stage(x_nhwc, canon):
    res = x_nhwc
    for bp in canon["blocks"]:
        out1 = jnp.maximum(_ref_conv(res, bp["w1"], bp["b1"]), 0.0)
        dense = jnp.concatenate([res, out1], axis=-1)
        out2 = _ref_conv(dense, bp["w2"], bp["b2"])
        a = jnp.maximum(_ref_dwconv(out2, bp["wdw"], bp["bdw"]), 0.0)
        att = jax.nn.sigmoid(
            jnp.einsum("nhwc,dc->nhwd", a, bp["wpw"],
                       precision=jax.lax.Precision.HIGHEST) + bp["bpw"])
        res = att * out2 + res
    return _ref_conv(res, canon["wf"], canon["bf"]) + x_nhwc


# ---------------------------------------------------------------------------
if __name__ == "__main__":
    N, C, H, W = 4, 8, 16, 16          # NCHW; dim=8, kernel_size=3, blocks=2
    n_blocks = 2

    key = jax.random.PRNGKey(0)
    key, kx, kp = jax.random.split(key, 3)
    x_nchw = jax.random.normal(kx, (N, C, H, W), jnp.float32)
    canon = init_params(kp, C, n_blocks)
    packed = pack_params(canon)

    out = jax.block_until_ready(stage_forward(x_nchw, packed))

    ref_nhwc = ref_stage(jnp.transpose(x_nchw, (0, 2, 3, 1)), canon)
    ref = jnp.transpose(ref_nhwc, (0, 3, 1, 2))
    # bf16 MXU operands (f32 accumulation) vs an f32 reference -> loosened
    # tolerance; structural errors would be O(1) and still caught.
    np.testing.assert_allclose(np.asarray(out), np.asarray(ref),
                               rtol=1e-1, atol=1e-1)
    print("KERNEL_OK")
</pallas_src>

<mosaic_0001>
module attributes {stable_mosaic.version = 11 : i64} {
  func.func @_stage_kernel(%arg0: i32, %arg1: memref<1x8x512xf32, #tpu.memory_space<vmem>>, %arg2: memref<9x512xf32, #tpu.memory_space<vmem>>, %arg3: memref<2x32x72xbf16, #tpu.memory_space<vmem>>, %arg4: memref<2x32x1xf32, #tpu.memory_space<vmem>>, %arg5: memref<2x8x8xbf16, #tpu.memory_space<vmem>>, %arg6: memref<8x72xbf16, #tpu.memory_space<vmem>>, %arg7: memref<8x1xf32, #tpu.memory_space<vmem>>, %arg8: memref<1x8x512xf32, #tpu.memory_space<vmem>>) attributes {dimension_semantics = [#tpu.dimension_semantics<parallel>], iteration_bounds = array<i64: 2>, scalar_prefetch = 0 : i64, scratch_operands = 0 : i64, tpu.core_type = #tpu.core_type<tc>, window_params = [{transform_indices = @transform_0, window_bounds = array<i64: 1, 8, 512>}, {pipeline_mode = #tpu.pipeline_mode<synchronous>, transform_indices = @transform_1, window_bounds = array<i64: 9, 512>}, {pipeline_mode = #tpu.pipeline_mode<synchronous>, transform_indices = @transform_2, window_bounds = array<i64: 2, 32, 72>}, {pipeline_mode = #tpu.pipeline_mode<synchronous>, transform_indices = @transform_3, window_bounds = array<i64: 2, 32, 1>}, {pipeline_mode = #tpu.pipeline_mode<synchronous>, transform_indices = @transform_4, window_bounds = array<i64: 2, 8, 8>}, {pipeline_mode = #tpu.pipeline_mode<synchronous>, transform_indices = @transform_5, window_bounds = array<i64: 8, 72>}, {pipeline_mode = #tpu.pipeline_mode<synchronous>, transform_indices = @transform_6, window_bounds = array<i64: 8, 1>}, {transform_indices = @transform_7, window_bounds = array<i64: 1, 8, 512>}]} {
    %c0 = arith.constant 0 : index
    %c0_0 = arith.constant 0 : index
    %0 = vector.load %arg2[%c0, %c0_0] : memref<9x512xf32, #tpu.memory_space<vmem>>, vector<9x512xf32>
    %c0_1 = arith.constant 0 : index
    %c0_2 = arith.constant 0 : index
    %c0_3 = arith.constant 0 : index
    %1 = vector.load %arg1[%c0_1, %c0_2, %c0_3] : memref<1x8x512xf32, #tpu.memory_space<vmem>>, vector<1x8x512xf32>
    %2 = vector.shape_cast %1 : vector<1x8x512xf32> to vector<8x512xf32>
    %c0_4 = arith.constant 0 : index
    %c0_5 = arith.constant 0 : index
    %c0_6 = arith.constant 0 : index
    %3 = vector.load %arg3[%c0_4, %c0_5, %c0_6] : memref<2x32x72xbf16, #tpu.memory_space<vmem>>, vector<1x32x72xbf16>
    %4 = vector.shape_cast %3 : vector<1x32x72xbf16> to vector<32x72xbf16>
    %c0_7 = arith.constant 0 : index
    %c0_8 = arith.constant 0 : index
    %c0_9 = arith.constant 0 : index
    %5 = vector.load %arg4[%c0_7, %c0_8, %c0_9] : memref<2x32x1xf32, #tpu.memory_space<vmem>>, vector<1x32x1xf32>
    %6 = vector.shape_cast %5 : vector<1x32x1xf32> to vector<32x1xf32>
    %c17_i32 = arith.constant 17 : i32
    %7 = tpu.dynamic_rotate %2 by %c17_i32 dim 1 : vector<8x512xf32>, i32 -> vector<8x512xf32>
    %8 = vector.extract_strided_slice %0 {offsets = [0, 0], sizes = [1, 512], strides = [1, 1]} : vector<9x512xf32> to vector<1x512xf32>
    %9 = vector.broadcast %8 : vector<1x512xf32> to vector<8x512xf32>
    %10 = arith.mulf %7, %9 : vector<8x512xf32>
    %c16_i32 = arith.constant 16 : i32
    %11 = tpu.dynamic_rotate %2 by %c16_i32 dim 1 : vector<8x512xf32>, i32 -> vector<8x512xf32>
    %12 = vector.extract_strided_slice %0 {offsets = [1, 0], sizes = [1, 512], strides = [1, 1]} : vector<9x512xf32> to vector<1x512xf32>
    %13 = vector.broadcast %12 : vector<1x512xf32> to vector<8x512xf32>
    %14 = arith.mulf %11, %13 : vector<8x512xf32>
    %c15_i32 = arith.constant 15 : i32
    %15 = tpu.dynamic_rotate %2 by %c15_i32 dim 1 : vector<8x512xf32>, i32 -> vector<8x512xf32>
    %16 = vector.extract_strided_slice %0 {offsets = [2, 0], sizes = [1, 512], strides = [1, 1]} : vector<9x512xf32> to vector<1x512xf32>
    %17 = vector.broadcast %16 : vector<1x512xf32> to vector<8x512xf32>
    %18 = arith.mulf %15, %17 : vector<8x512xf32>
    %c1_i32 = arith.constant 1 : i32
    %19 = tpu.dynamic_rotate %2 by %c1_i32 dim 1 : vector<8x512xf32>, i32 -> vector<8x512xf32>
    %20 = vector.extract_strided_slice %0 {offsets = [3, 0], sizes = [1, 512], strides = [1, 1]} : vector<9x512xf32> to vector<1x512xf32>
    %21 = vector.broadcast %20 : vector<1x512xf32> to vector<8x512xf32>
    %22 = arith.mulf %19, %21 : vector<8x512xf32>
    %c511_i32 = arith.constant 511 : i32
    %23 = tpu.dynamic_rotate %2 by %c511_i32 dim 1 : vector<8x512xf32>, i32 -> vector<8x512xf32>
    %24 = vector.extract_strided_slice %0 {offsets = [5, 0], sizes = [1, 512], strides = [1, 1]} : vector<9x512xf32> to vector<1x512xf32>
    %25 = vector.broadcast %24 : vector<1x512xf32> to vector<8x512xf32>
    %26 = arith.mulf %23, %25 : vector<8x512xf32>
    %c497_i32 = arith.constant 497 : i32
    %27 = tpu.dynamic_rotate %2 by %c497_i32 dim 1 : vector<8x512xf32>, i32 -> vector<8x512xf32>
    %28 = vector.extract_strided_slice %0 {offsets = [6, 0], sizes = [1, 512], strides = [1, 1]} : vector<9x512xf32> to vector<1x512xf32>
    %29 = vector.broadcast %28 : vector<1x512xf32> to vector<8x512xf32>
    %30 = arith.mulf %27, %29 : vector<8x512xf32>
    %c496_i32 = arith.constant 496 : i32
    %31 = tpu.dynamic_rotate %2 by %c496_i32 dim 1 : vector<8x512xf32>, i32 -> vector<8x512xf32>
    %32 = vector.extract_strided_slice %0 {offsets = [7, 0], sizes = [1, 512], strides = [1, 1]} : vector<9x512xf32> to vector<1x512xf32>
    %33 = vector.broadcast %32 : vector<1x512xf32> to vector<8x512xf32>
    %34 = arith.mulf %31, %33 : vector<8x512xf32>
    %c495_i32 = arith.constant 495 : i32
    %35 = tpu.dynamic_rotate %2 by %c495_i32 dim 1 : vector<8x512xf32>, i32 -> vector<8x512xf32>
    %36 = vector.extract_strided_slice %0 {offsets = [8, 0], sizes = [1, 512], strides = [1, 1]} : vector<9x512xf32> to vector<1x512xf32>
    %37 = vector.broadcast %36 : vector<1x512xf32> to vector<8x512xf32>
    %38 = arith.mulf %35, %37 : vector<8x512xf32>
    %39 = tpu.concatenate %10, %14, %18, %22, %2, %26, %30, %34, %38 in 0 : vector<8x512xf32>, vector<8x512xf32>, vector<8x512xf32>, vector<8x512xf32>, vector<8x512xf32>, vector<8x512xf32>, vector<8x512xf32>, vector<8x512xf32>, vector<8x512xf32> -> vector<72x512xf32>
    %40 = arith.truncf %39 : vector<72x512xf32> to vector<72x512xbf16>
    %41 = vector.extract_strided_slice %4 {offsets = [0, 0], sizes = [16, 72], strides = [1, 1]} : vector<32x72xbf16> to vector<16x72xbf16>
    %cst = arith.constant dense<0.000000e+00> : vector<16x512xf32>
    %42 = tpu.matmul %41, %40, %cst {dimension_numbers = #tpu.dot_dimension_numbers<[1], [0], [0], [1], [0, 0, 1, 1], [], []>} : vector<16x72xbf16>, vector<72x512xbf16>, vector<16x512xf32> -> vector<16x512xf32>
    %43 = vector.extract_strided_slice %42 {offsets = [0, 0], sizes = [8, 512], strides = [1, 1]} : vector<16x512xf32> to vector<8x512xf32>
    %44 = vector.extract_strided_slice %6 {offsets = [0, 0], sizes = [8, 1], strides = [1, 1]} : vector<32x1xf32> to vector<8x1xf32>
    %45 = vector.broadcast %44 : vector<8x1xf32> to vector<8x512xf32>
    %46 = arith.addf %43, %45 : vector<8x512xf32>
    %cst_10 = arith.constant 0.000000e+00 : f32
    %47 = vector.broadcast %cst_10 : f32 to vector<8x512xf32>
    %48 = arith.maximumf %46, %47 : vector<8x512xf32>
    %49 = vector.extract_strided_slice %42 {offsets = [8, 0], sizes = [8, 512], strides = [1, 1]} : vector<16x512xf32> to vector<8x512xf32>
    %50 = vector.extract_strided_slice %6 {offsets = [8, 0], sizes = [8, 1], strides = [1, 1]} : vector<32x1xf32> to vector<8x1xf32>
    %51 = vector.broadcast %50 : vector<8x1xf32> to vector<8x512xf32>
    %52 = arith.addf %49, %51 : vector<8x512xf32>
    %53 = vector.extract_strided_slice %4 {offsets = [16, 0], sizes = [8, 72], strides = [1, 1]} : vector<32x72xbf16> to vector<8x72xbf16>
    %c17_i32_11 = arith.constant 17 : i32
    %54 = tpu.dynamic_rotate %48 by %c17_i32_11 dim 1 : vector<8x512xf32>, i32 -> vector<8x512xf32>
    %55 = vector.extract_strided_slice %0 {offsets = [0, 0], sizes = [1, 512], strides = [1, 1]} : vector<9x512xf32> to vector<1x512xf32>
    %56 = vector.broadcast %55 : vector<1x512xf32> to vector<8x512xf32>
    %57 = arith.mulf %54, %56 : vector<8x512xf32>
    %c16_i32_12 = arith.constant 16 : i32
    %58 = tpu.dynamic_rotate %48 by %c16_i32_12 dim 1 : vector<8x512xf32>, i32 -> vector<8x512xf32>
    %59 = vector.extract_strided_slice %0 {offsets = [1, 0], sizes = [1, 512], strides = [1, 1]} : vector<9x512xf32> to vector<1x512xf32>
    %60 = vector.broadcast %59 : vector<1x512xf32> to vector<8x512xf32>
    %61 = arith.mulf %58, %60 : vector<8x512xf32>
    %c15_i32_13 = arith.constant 15 : i32
    %62 = tpu.dynamic_rotate %48 by %c15_i32_13 dim 1 : vector<8x512xf32>, i32 -> vector<8x512xf32>
    %63 = vector.extract_strided_slice %0 {offsets = [2, 0], sizes = [1, 512], strides = [1, 1]} : vector<9x512xf32> to vector<1x512xf32>
    %64 = vector.broadcast %63 : vector<1x512xf32> to vector<8x512xf32>
    %65 = arith.mulf %62, %64 : vector<8x512xf32>
    %c1_i32_14 = arith.constant 1 : i32
    %66 = tpu.dynamic_rotate %48 by %c1_i32_14 dim 1 : vector<8x512xf32>, i32 -> vector<8x512xf32>
    %67 = vector.extract_strided_slice %0 {offsets = [3, 0], sizes = [1, 512], strides = [1, 1]} : vector<9x512xf32> to vector<1x512xf32>
    %68 = vector.broadcast %67 : vector<1x512xf32> to vector<8x512xf32>
    %69 = arith.mulf %66, %68 : vector<8x512xf32>
    %c511_i32_15 = arith.constant 511 : i32
    %70 = tpu.dynamic_rotate %48 by %c511_i32_15 dim 1 : vector<8x512xf32>, i32 -> vector<8x512xf32>
    %71 = vector.extract_strided_slice %0 {offsets = [5, 0], sizes = [1, 512], strides = [1, 1]} : vector<9x512xf32> to vector<1x512xf32>
    %72 = vector.broadcast %71 : vector<1x512xf32> to vector<8x512xf32>
    %73 = arith.mulf %70, %72 : vector<8x512xf32>
    %c497_i32_16 = arith.constant 497 : i32
    %74 = tpu.dynamic_rotate %48 by %c497_i32_16 dim 1 : vector<8x512xf32>, i32 -> vector<8x512xf32>
    %75 = vector.extract_strided_slice %0 {offsets = [6, 0], sizes = [1, 512], strides = [1, 1]} : vector<9x512xf32> to vector<1x512xf32>
    %76 = vector.broadcast %75 : vector<1x512xf32> to vector<8x512xf32>
    %77 = arith.mulf %74, %76 : vector<8x512xf32>
    %c496_i32_17 = arith.constant 496 : i32
    %78 = tpu.dynamic_rotate %48 by %c496_i32_17 dim 1 : vector<8x512xf32>, i32 -> vector<8x512xf32>
    %79 = vector.extract_strided_slice %0 {offsets = [7, 0], sizes = [1, 512], strides = [1, 1]} : vector<9x512xf32> to vector<1x512xf32>
    %80 = vector.broadcast %79 : vector<1x512xf32> to vector<8x512xf32>
    %81 = arith.mulf %78, %80 : vector<8x512xf32>
    %c495_i32_18 = arith.constant 495 : i32
    %82 = tpu.dynamic_rotate %48 by %c495_i32_18 dim 1 : vector<8x512xf32>, i32 -> vector<8x512xf32>
    %83 = vector.extract_strided_slice %0 {offsets = [8, 0], sizes = [1, 512], strides = [1, 1]} : vector<9x512xf32> to vector<1x512xf32>
    %84 = vector.broadcast %83 : vector<1x512xf32> to vector<8x512xf32>
    %85 = arith.mulf %82, %84 : vector<8x512xf32>
    %86 = tpu.concatenate %57, %61, %65, %69, %48, %73, %77, %81, %85 in 0 : vector<8x512xf32>, vector<8x512xf32>, vector<8x512xf32>, vector<8x512xf32>, vector<8x512xf32>, vector<8x512xf32>, vector<8x512xf32>, vector<8x512xf32>, vector<8x512xf32> -> vector<72x512xf32>
    %87 = arith.truncf %86 : vector<72x512xf32> to vector<72x512xbf16>
    %cst_19 = arith.constant dense<0.000000e+00> : vector<8x512xf32>
    %88 = tpu.matmul %53, %87, %cst_19 {dimension_numbers = #tpu.dot_dimension_numbers<[1], [0], [0], [1], [0, 0, 1, 1], [], []>} : vector<8x72xbf16>, vector<72x512xbf16>, vector<8x512xf32> -> vector<8x512xf32>
    %89 = arith.addf %52, %88 : vector<8x512xf32>
    %90 = vector.extract_strided_slice %4 {offsets = [24, 0], sizes = [8, 72], strides = [1, 1]} : vector<32x72xbf16> to vector<8x72xbf16>
    %c17_i32_20 = arith.constant 17 : i32
    %91 = tpu.dynamic_rotate %89 by %c17_i32_20 dim 1 : vector<8x512xf32>, i32 -> vector<8x512xf32>
    %92 = vector.extract_strided_slice %0 {offsets = [0, 0], sizes = [1, 512], strides = [1, 1]} : vector<9x512xf32> to vector<1x512xf32>
    %93 = vector.broadcast %92 : vector<1x512xf32> to vector<8x512xf32>
    %94 = arith.mulf %91, %93 : vector<8x512xf32>
    %c16_i32_21 = arith.constant 16 : i32
    %95 = tpu.dynamic_rotate %89 by %c16_i32_21 dim 1 : vector<8x512xf32>, i32 -> vector<8x512xf32>
    %96 = vector.extract_strided_slice %0 {offsets = [1, 0], sizes = [1, 512], strides = [1, 1]} : vector<9x512xf32> to vector<1x512xf32>
    %97 = vector.broadcast %96 : vector<1x512xf32> to vector<8x512xf32>
    %98 = arith.mulf %95, %97 : vector<8x512xf32>
    %c15_i32_22 = arith.constant 15 : i32
    %99 = tpu.dynamic_rotate %89 by %c15_i32_22 dim 1 : vector<8x512xf32>, i32 -> vector<8x512xf32>
    %100 = vector.extract_strided_slice %0 {offsets = [2, 0], sizes = [1, 512], strides = [1, 1]} : vector<9x512xf32> to vector<1x512xf32>
    %101 = vector.broadcast %100 : vector<1x512xf32> to vector<8x512xf32>
    %102 = arith.mulf %99, %101 : vector<8x512xf32>
    %c1_i32_23 = arith.constant 1 : i32
    %103 = tpu.dynamic_rotate %89 by %c1_i32_23 dim 1 : vector<8x512xf32>, i32 -> vector<8x512xf32>
    %104 = vector.extract_strided_slice %0 {offsets = [3, 0], sizes = [1, 512], strides = [1, 1]} : vector<9x512xf32> to vector<1x512xf32>
    %105 = vector.broadcast %104 : vector<1x512xf32> to vector<8x512xf32>
    %106 = arith.mulf %103, %105 : vector<8x512xf32>
    %c511_i32_24 = arith.constant 511 : i32
    %107 = tpu.dynamic_rotate %89 by %c511_i32_24 dim 1 : vector<8x512xf32>, i32 -> vector<8x512xf32>
    %108 = vector.extract_strided_slice %0 {offsets = [5, 0], sizes = [1, 512], strides = [1, 1]} : vector<9x512xf32> to vector<1x512xf32>
    %109 = vector.broadcast %108 : vector<1x512xf32> to vector<8x512xf32>
    %110 = arith.mulf %107, %109 : vector<8x512xf32>
    %c497_i32_25 = arith.constant 497 : i32
    %111 = tpu.dynamic_rotate %89 by %c497_i32_25 dim 1 : vector<8x512xf32>, i32 -> vector<8x512xf32>
    %112 = vector.extract_strided_slice %0 {offsets = [6, 0], sizes = [1, 512], strides = [1, 1]} : vector<9x512xf32> to vector<1x512xf32>
    %113 = vector.broadcast %112 : vector<1x512xf32> to vector<8x512xf32>
    %114 = arith.mulf %111, %113 : vector<8x512xf32>
    %c496_i32_26 = arith.constant 496 : i32
    %115 = tpu.dynamic_rotate %89 by %c496_i32_26 dim 1 : vector<8x512xf32>, i32 -> vector<8x512xf32>
    %116 = vector.extract_strided_slice %0 {offsets = [7, 0], sizes = [1, 512], strides = [1, 1]} : vector<9x512xf32> to vector<1x512xf32>
    %117 = vector.broadcast %116 : vector<1x512xf32> to vector<8x512xf32>
    %118 = arith.mulf %115, %117 : vector<8x512xf32>
    %c495_i32_27 = arith.constant 495 : i32
    %119 = tpu.dynamic_rotate %89 by %c495_i32_27 dim 1 : vector<8x512xf32>, i32 -> vector<8x512xf32>
    %120 = vector.extract_strided_slice %0 {offsets = [8, 0], sizes = [1, 512], strides = [1, 1]} : vector<9x512xf32> to vector<1x512xf32>
    %121 = vector.broadcast %120 : vector<1x512xf32> to vector<8x512xf32>
    %122 = arith.mulf %119, %121 : vector<8x512xf32>
    %123 = tpu.concatenate %94, %98, %102, %106, %89, %110, %114, %118, %122 in 0 : vector<8x512xf32>, vector<8x512xf32>, vector<8x512xf32>, vector<8x512xf32>, vector<8x512xf32>, vector<8x512xf32>, vector<8x512xf32>, vector<8x512xf32>, vector<8x512xf32> -> vector<72x512xf32>
    %124 = arith.truncf %123 : vector<72x512xf32> to vector<72x512xbf16>
    %cst_28 = arith.constant dense<0.000000e+00> : vector<8x512xf32>
    %125 = tpu.matmul %90, %124, %cst_28 {dimension_numbers = #tpu.dot_dimension_numbers<[1], [0], [0], [1], [0, 0, 1, 1], [], []>} : vector<8x72xbf16>, vector<72x512xbf16>, vector<8x512xf32> -> vector<8x512xf32>
    %126 = vector.extract_strided_slice %6 {offsets = [16, 0], sizes = [8, 1], strides = [1, 1]} : vector<32x1xf32> to vector<8x1xf32>
    %127 = vector.broadcast %126 : vector<8x1xf32> to vector<8x512xf32>
    %128 = arith.addf %125, %127 : vector<8x512xf32>
    %cst_29 = arith.constant 0.000000e+00 : f32
    %129 = vector.broadcast %cst_29 : f32 to vector<8x512xf32>
    %130 = arith.maximumf %128, %129 : vector<8x512xf32>
    %c0_30 = arith.constant 0 : index
    %c0_31 = arith.constant 0 : index
    %c0_32 = arith.constant 0 : index
    %131 = vector.load %arg5[%c0_30, %c0_31, %c0_32] : memref<2x8x8xbf16, #tpu.memory_space<vmem>>, vector<1x8x8xbf16>
    %132 = vector.shape_cast %131 : vector<1x8x8xbf16> to vector<8x8xbf16>
    %133 = arith.truncf %130 : vector<8x512xf32> to vector<8x512xbf16>
    %cst_33 = arith.constant dense<0.000000e+00> : vector<8x512xf32>
    %134 = tpu.matmul %132, %133, %cst_33 {dimension_numbers = #tpu.dot_dimension_numbers<[1], [0], [0], [1], [0, 0, 1, 1], [], []>} : vector<8x8xbf16>, vector<8x512xbf16>, vector<8x512xf32> -> vector<8x512xf32>
    %135 = vector.extract_strided_slice %6 {offsets = [24, 0], sizes = [8, 1], strides = [1, 1]} : vector<32x1xf32> to vector<8x1xf32>
    %136 = vector.broadcast %135 : vector<8x1xf32> to vector<8x512xf32>
    %137 = arith.addf %134, %136 : vector<8x512xf32>
    %138 = arith.negf %137 : vector<8x512xf32>
    %139 = math.exp %138 : vector<8x512xf32>
    %cst_34 = arith.constant 1.000000e+00 : f32
    %140 = vector.broadcast %cst_34 : f32 to vector<8x512xf32>
    %141 = arith.addf %140, %139 : vector<8x512xf32>
    %142 = arith.divf %140, %141 : vector<8x512xf32>
    %143 = arith.mulf %142, %89 : vector<8x512xf32>
    %144 = arith.addf %143, %2 : vector<8x512xf32>
    %c1 = arith.constant 1 : index
    %c0_35 = arith.constant 0 : index
    %c0_36 = arith.constant 0 : index
    %145 = vector.load %arg3[%c1, %c0_35, %c0_36] : memref<2x32x72xbf16, #tpu.memory_space<vmem>>, vector<1x32x72xbf16>
    %146 = vector.shape_cast %145 : vector<1x32x72xbf16> to vector<32x72xbf16>
    %c1_37 = arith.constant 1 : index
    %c0_38 = arith.constant 0 : index
    %c0_39 = arith.constant 0 : index
    %147 = vector.load %arg4[%c1_37, %c0_38, %c0_39] : memref<2x32x1xf32, #tpu.memory_space<vmem>>, vector<1x32x1xf32>
    %148 = vector.shape_cast %147 : vector<1x32x1xf32> to vector<32x1xf32>
    %c17_i32_40 = arith.constant 17 : i32
    %149 = tpu.dynamic_rotate %144 by %c17_i32_40 dim 1 : vector<8x512xf32>, i32 -> vector<8x512xf32>
    %150 = vector.extract_strided_slice %0 {offsets = [0, 0], sizes = [1, 512], strides = [1, 1]} : vector<9x512xf32> to vector<1x512xf32>
    %151 = vector.broadcast %150 : vector<1x512xf32> to vector<8x512xf32>
    %152 = arith.mulf %149, %151 : vector<8x512xf32>
    %c16_i32_41 = arith.constant 16 : i32
    %153 = tpu.dynamic_rotate %144 by %c16_i32_41 dim 1 : vector<8x512xf32>, i32 -> vector<8x512xf32>
    %154 = vector.extract_strided_slice %0 {offsets = [1, 0], sizes = [1, 512], strides = [1, 1]} : vector<9x512xf32> to vector<1x512xf32>
    %155 = vector.broadcast %154 : vector<1x512xf32> to vector<8x512xf32>
    %156 = arith.mulf %153, %155 : vector<8x512xf32>
    %c15_i32_42 = arith.constant 15 : i32
    %157 = tpu.dynamic_rotate %144 by %c15_i32_42 dim 1 : vector<8x512xf32>, i32 -> vector<8x512xf32>
    %158 = vector.extract_strided_slice %0 {offsets = [2, 0], sizes = [1, 512], strides = [1, 1]} : vector<9x512xf32> to vector<1x512xf32>
    %159 = vector.broadcast %158 : vector<1x512xf32> to vector<8x512xf32>
    %160 = arith.mulf %157, %159 : vector<8x512xf32>
    %c1_i32_43 = arith.constant 1 : i32
    %161 = tpu.dynamic_rotate %144 by %c1_i32_43 dim 1 : vector<8x512xf32>, i32 -> vector<8x512xf32>
    %162 = vector.extract_strided_slice %0 {offsets = [3, 0], sizes = [1, 512], strides = [1, 1]} : vector<9x512xf32> to vector<1x512xf32>
    %163 = vector.broadcast %162 : vector<1x512xf32> to vector<8x512xf32>
    %164 = arith.mulf %161, %163 : vector<8x512xf32>
    %c511_i32_44 = arith.constant 511 : i32
    %165 = tpu.dynamic_rotate %144 by %c511_i32_44 dim 1 : vector<8x512xf32>, i32 -> vector<8x512xf32>
    %166 = vector.extract_strided_slice %0 {offsets = [5, 0], sizes = [1, 512], strides = [1, 1]} : vector<9x512xf32> to vector<1x512xf32>
    %167 = vector.broadcast %166 : vector<1x512xf32> to vector<8x512xf32>
    %168 = arith.mulf %165, %167 : vector<8x512xf32>
    %c497_i32_45 = arith.constant 497 : i32
    %169 = tpu.dynamic_rotate %144 by %c497_i32_45 dim 1 : vector<8x512xf32>, i32 -> vector<8x512xf32>
    %170 = vector.extract_strided_slice %0 {offsets = [6, 0], sizes = [1, 512], strides = [1, 1]} : vector<9x512xf32> to vector<1x512xf32>
    %171 = vector.broadcast %170 : vector<1x512xf32> to vector<8x512xf32>
    %172 = arith.mulf %169, %171 : vector<8x512xf32>
    %c496_i32_46 = arith.constant 496 : i32
    %173 = tpu.dynamic_rotate %144 by %c496_i32_46 dim 1 : vector<8x512xf32>, i32 -> vector<8x512xf32>
    %174 = vector.extract_strided_slice %0 {offsets = [7, 0], sizes = [1, 512], strides = [1, 1]} : vector<9x512xf32> to vector<1x512xf32>
    %175 = vector.broadcast %174 : vector<1x512xf32> to vector<8x512xf32>
    %176 = arith.mulf %173, %175 : vector<8x512xf32>
    %c495_i32_47 = arith.constant 495 : i32
    %177 = tpu.dynamic_rotate %144 by %c495_i32_47 dim 1 : vector<8x512xf32>, i32 -> vector<8x512xf32>
    %178 = vector.extract_strided_slice %0 {offsets = [8, 0], sizes = [1, 512], strides = [1, 1]} : vector<9x512xf32> to vector<1x512xf32>
    %179 = vector.broadcast %178 : vector<1x512xf32> to vector<8x512xf32>
    %180 = arith.mulf %177, %179 : vector<8x512xf32>
    %181 = tpu.concatenate %152, %156, %160, %164, %144, %168, %172, %176, %180 in 0 : vector<8x512xf32>, vector<8x512xf32>, vector<8x512xf32>, vector<8x512xf32>, vector<8x512xf32>, vector<8x512xf32>, vector<8x512xf32>, vector<8x512xf32>, vector<8x512xf32> -> vector<72x512xf32>
    %182 = arith.truncf %181 : vector<72x512xf32> to vector<72x512xbf16>
    %183 = vector.extract_strided_slice %146 {offsets = [0, 0], sizes = [16, 72], strides = [1, 1]} : vector<32x72xbf16> to vector<16x72xbf16>
    %cst_48 = arith.constant dense<0.000000e+00> : vector<16x512xf32>
    %184 = tpu.matmul %183, %182, %cst_48 {dimension_numbers = #tpu.dot_dimension_numbers<[1], [0], [0], [1], [0, 0, 1, 1], [], []>} : vector<16x72xbf16>, vector<72x512xbf16>, vector<16x512xf32> -> vector<16x512xf32>
    %185 = vector.extract_strided_slice %184 {offsets = [0, 0], sizes = [8, 512], strides = [1, 1]} : vector<16x512xf32> to vector<8x512xf32>
    %186 = vector.extract_strided_slice %148 {offsets = [0, 0], sizes = [8, 1], strides = [1, 1]} : vector<32x1xf32> to vector<8x1xf32>
    %187 = vector.broadcast %186 : vector<8x1xf32> to vector<8x512xf32>
    %188 = arith.addf %185, %187 : vector<8x512xf32>
    %cst_49 = arith.constant 0.000000e+00 : f32
    %189 = vector.broadcast %cst_49 : f32 to vector<8x512xf32>
    %190 = arith.maximumf %188, %189 : vector<8x512xf32>
    %191 = vector.extract_strided_slice %184 {offsets = [8, 0], sizes = [8, 512], strides = [1, 1]} : vector<16x512xf32> to vector<8x512xf32>
    %192 = vector.extract_strided_slice %148 {offsets = [8, 0], sizes = [8, 1], strides = [1, 1]} : vector<32x1xf32> to vector<8x1xf32>
    %193 = vector.broadcast %192 : vector<8x1xf32> to vector<8x512xf32>
    %194 = arith.addf %191, %193 : vector<8x512xf32>
    %195 = vector.extract_strided_slice %146 {offsets = [16, 0], sizes = [8, 72], strides = [1, 1]} : vector<32x72xbf16> to vector<8x72xbf16>
    %c17_i32_50 = arith.constant 17 : i32
    %196 = tpu.dynamic_rotate %190 by %c17_i32_50 dim 1 : vector<8x512xf32>, i32 -> vector<8x512xf32>
    %197 = vector.extract_strided_slice %0 {offsets = [0, 0], sizes = [1, 512], strides = [1, 1]} : vector<9x512xf32> to vector<1x512xf32>
    %198 = vector.broadcast %197 : vector<1x512xf32> to vector<8x512xf32>
    %199 = arith.mulf %196, %198 : vector<8x512xf32>
    %c16_i32_51 = arith.constant 16 : i32
    %200 = tpu.dynamic_rotate %190 by %c16_i32_51 dim 1 : vector<8x512xf32>, i32 -> vector<8x512xf32>
    %201 = vector.extract_strided_slice %0 {offsets = [1, 0], sizes = [1, 512], strides = [1, 1]} : vector<9x512xf32> to vector<1x512xf32>
    %202 = vector.broadcast %201 : vector<1x512xf32> to vector<8x512xf32>
    %203 = arith.mulf %200, %202 : vector<8x512xf32>
    %c15_i32_52 = arith.constant 15 : i32
    %204 = tpu.dynamic_rotate %190 by %c15_i32_52 dim 1 : vector<8x512xf32>, i32 -> vector<8x512xf32>
    %205 = vector.extract_strided_slice %0 {offsets = [2, 0], sizes = [1, 512], strides = [1, 1]} : vector<9x512xf32> to vector<1x512xf32>
    %206 = vector.broadcast %205 : vector<1x512xf32> to vector<8x512xf32>
    %207 = arith.mulf %204, %206 : vector<8x512xf32>
    %c1_i32_53 = arith.constant 1 : i32
    %208 = tpu.dynamic_rotate %190 by %c1_i32_53 dim 1 : vector<8x512xf32>, i32 -> vector<8x512xf32>
    %209 = vector.extract_strided_slice %0 {offsets = [3, 0], sizes = [1, 512], strides = [1, 1]} : vector<9x512xf32> to vector<1x512xf32>
    %210 = vector.broadcast %209 : vector<1x512xf32> to vector<8x512xf32>
    %211 = arith.mulf %208, %210 : vector<8x512xf32>
    %c511_i32_54 = arith.constant 511 : i32
    %212 = tpu.dynamic_rotate %190 by %c511_i32_54 dim 1 : vector<8x512xf32>, i32 -> vector<8x512xf32>
    %213 = vector.extract_strided_slice %0 {offsets = [5, 0], sizes = [1, 512], strides = [1, 1]} : vector<9x512xf32> to vector<1x512xf32>
    %214 = vector.broadcast %213 : vector<1x512xf32> to vector<8x512xf32>
    %215 = arith.mulf %212, %214 : vector<8x512xf32>
    %c497_i32_55 = arith.constant 497 : i32
    %216 = tpu.dynamic_rotate %190 by %c497_i32_55 dim 1 : vector<8x512xf32>, i32 -> vector<8x512xf32>
    %217 = vector.extract_strided_slice %0 {offsets = [6, 0], sizes = [1, 512], strides = [1, 1]} : vector<9x512xf32> to vector<1x512xf32>
    %218 = vector.broadcast %217 : vector<1x512xf32> to vector<8x512xf32>
    %219 = arith.mulf %216, %218 : vector<8x512xf32>
    %c496_i32_56 = arith.constant 496 : i32
    %220 = tpu.dynamic_rotate %190 by %c496_i32_56 dim 1 : vector<8x512xf32>, i32 -> vector<8x512xf32>
    %221 = vector.extract_strided_slice %0 {offsets = [7, 0], sizes = [1, 512], strides = [1, 1]} : vector<9x512xf32> to vector<1x512xf32>
    %222 = vector.broadcast %221 : vector<1x512xf32> to vector<8x512xf32>
    %223 = arith.mulf %220, %222 : vector<8x512xf32>
    %c495_i32_57 = arith.constant 495 : i32
    %224 = tpu.dynamic_rotate %190 by %c495_i32_57 dim 1 : vector<8x512xf32>, i32 -> vector<8x512xf32>
    %225 = vector.extract_strided_slice %0 {offsets = [8, 0], sizes = [1, 512], strides = [1, 1]} : vector<9x512xf32> to vector<1x512xf32>
    %226 = vector.broadcast %225 : vector<1x512xf32> to vector<8x512xf32>
    %227 = arith.mulf %224, %226 : vector<8x512xf32>
    %228 = tpu.concatenate %199, %203, %207, %211, %190, %215, %219, %223, %227 in 0 : vector<8x512xf32>, vector<8x512xf32>, vector<8x512xf32>, vector<8x512xf32>, vector<8x512xf32>, vector<8x512xf32>, vector<8x512xf32>, vector<8x512xf32>, vector<8x512xf32> -> vector<72x512xf32>
    %229 = arith.truncf %228 : vector<72x512xf32> to vector<72x512xbf16>
    %cst_58 = arith.constant dense<0.000000e+00> : vector<8x512xf32>
    %230 = tpu.matmul %195, %229, %cst_58 {dimension_numbers = #tpu.dot_dimension_numbers<[1], [0], [0], [1], [0, 0, 1, 1], [], []>} : vector<8x72xbf16>, vector<72x512xbf16>, vector<8x512xf32> -> vector<8x512xf32>
    %231 = arith.addf %194, %230 : vector<8x512xf32>
    %232 = vector.extract_strided_slice %146 {offsets = [24, 0], sizes = [8, 72], strides = [1, 1]} : vector<32x72xbf16> to vector<8x72xbf16>
    %c17_i32_59 = arith.constant 17 : i32
    %233 = tpu.dynamic_rotate %231 by %c17_i32_59 dim 1 : vector<8x512xf32>, i32 -> vector<8x512xf32>
    %234 = vector.extract_strided_slice %0 {offsets = [0, 0], sizes = [1, 512], strides = [1, 1]} : vector<9x512xf32> to vector<1x512xf32>
    %235 = vector.broadcast %234 : vector<1x512xf32> to vector<8x512xf32>
    %236 = arith.mulf %233, %235 : vector<8x512xf32>
    %c16_i32_60 = arith.constant 16 : i32
    %237 = tpu.dynamic_rotate %231 by %c16_i32_60 dim 1 : vector<8x512xf32>, i32 -> vector<8x512xf32>
    %238 = vector.extract_strided_slice %0 {offsets = [1, 0], sizes = [1, 512], strides = [1, 1]} : vector<9x512xf32> to vector<1x512xf32>
    %239 = vector.broadcast %238 : vector<1x512xf32> to vector<8x512xf32>
    %240 = arith.mulf %237, %239 : vector<8x512xf32>
    %c15_i32_61 = arith.constant 15 : i32
    %241 = tpu.dynamic_rotate %231 by %c15_i32_61 dim 1 : vector<8x512xf32>, i32 -> vector<8x512xf32>
    %242 = vector.extract_strided_slice %0 {offsets = [2, 0], sizes = [1, 512], strides = [1, 1]} : vector<9x512xf32> to vector<1x512xf32>
    %243 = vector.broadcast %242 : vector<1x512xf32> to vector<8x512xf32>
    %244 = arith.mulf %241, %243 : vector<8x512xf32>
    %c1_i32_62 = arith.constant 1 : i32
    %245 = tpu.dynamic_rotate %231 by %c1_i32_62 dim 1 : vector<8x512xf32>, i32 -> vector<8x512xf32>
    %246 = vector.extract_strided_slice %0 {offsets = [3, 0], sizes = [1, 512], strides = [1, 1]} : vector<9x512xf32> to vector<1x512xf32>
    %247 = vector.broadcast %246 : vector<1x512xf32> to vector<8x512xf32>
    %248 = arith.mulf %245, %247 : vector<8x512xf32>
    %c511_i32_63 = arith.constant 511 : i32
    %249 = tpu.dynamic_rotate %231 by %c511_i32_63 dim 1 : vector<8x512xf32>, i32 -> vector<8x512xf32>
    %250 = vector.extract_strided_slice %0 {offsets = [5, 0], sizes = [1, 512], strides = [1, 1]} : vector<9x512xf32> to vector<1x512xf32>
    %251 = vector.broadcast %250 : vector<1x512xf32> to vector<8x512xf32>
    %252 = arith.mulf %249, %251 : vector<8x512xf32>
    %c497_i32_64 = arith.constant 497 : i32
    %253 = tpu.dynamic_rotate %231 by %c497_i32_64 dim 1 : vector<8x512xf32>, i32 -> vector<8x512xf32>
    %254 = vector.extract_strided_slice %0 {offsets = [6, 0], sizes = [1, 512], strides = [1, 1]} : vector<9x512xf32> to vector<1x512xf32>
    %255 = vector.broadcast %254 : vector<1x512xf32> to vector<8x512xf32>
    %256 = arith.mulf %253, %255 : vector<8x512xf32>
    %c496_i32_65 = arith.constant 496 : i32
    %257 = tpu.dynamic_rotate %231 by %c496_i32_65 dim 1 : vector<8x512xf32>, i32 -> vector<8x512xf32>
    %258 = vector.extract_strided_slice %0 {offsets = [7, 0], sizes = [1, 512], strides = [1, 1]} : vector<9x512xf32> to vector<1x512xf32>
    %259 = vector.broadcast %258 : vector<1x512xf32> to vector<8x512xf32>
    %260 = arith.mulf %257, %259 : vector<8x512xf32>
    %c495_i32_66 = arith.constant 495 : i32
    %261 = tpu.dynamic_rotate %231 by %c495_i32_66 dim 1 : vector<8x512xf32>, i32 -> vector<8x512xf32>
    %262 = vector.extract_strided_slice %0 {offsets = [8, 0], sizes = [1, 512], strides = [1, 1]} : vector<9x512xf32> to vector<1x512xf32>
    %263 = vector.broadcast %262 : vector<1x512xf32> to vector<8x512xf32>
    %264 = arith.mulf %261, %263 : vector<8x512xf32>
    %265 = tpu.concatenate %236, %240, %244, %248, %231, %252, %256, %260, %264 in 0 : vector<8x512xf32>, vector<8x512xf32>, vector<8x512xf32>, vector<8x512xf32>, vector<8x512xf32>, vector<8x512xf32>, vector<8x512xf32>, vector<8x512xf32>, vector<8x512xf32> -> vector<72x512xf32>
    %266 = arith.truncf %265 : vector<72x512xf32> to vector<72x512xbf16>
    %cst_67 = arith.constant dense<0.000000e+00> : vector<8x512xf32>
    %267 = tpu.matmul %232, %266, %cst_67 {dimension_numbers = #tpu.dot_dimension_numbers<[1], [0], [0], [1], [0, 0, 1, 1], [], []>} : vector<8x72xbf16>, vector<72x512xbf16>, vector<8x512xf32> -> vector<8x512xf32>
    %268 = vector.extract_strided_slice %148 {offsets = [16, 0], sizes = [8, 1], strides = [1, 1]} : vector<32x1xf32> to vector<8x1xf32>
    %269 = vector.broadcast %268 : vector<8x1xf32> to vector<8x512xf32>
    %270 = arith.addf %267, %269 : vector<8x512xf32>
    %cst_68 = arith.constant 0.000000e+00 : f32
    %271 = vector.broadcast %cst_68 : f32 to vector<8x512xf32>
    %272 = arith.maximumf %270, %271 : vector<8x512xf32>
    %c1_69 = arith.constant 1 : index
    %c0_70 = arith.constant 0 : index
    %c0_71 = arith.constant 0 : index
    %273 = vector.load %arg5[%c1_69, %c0_70, %c0_71] : memref<2x8x8xbf16, #tpu.memory_space<vmem>>, vector<1x8x8xbf16>
    %274 = vector.shape_cast %273 : vector<1x8x8xbf16> to vector<8x8xbf16>
    %275 = arith.truncf %272 : vector<8x512xf32> to vector<8x512xbf16>
    %cst_72 = arith.constant dense<0.000000e+00> : vector<8x512xf32>
    %276 = tpu.matmul %274, %275, %cst_72 {dimension_numbers = #tpu.dot_dimension_numbers<[1], [0], [0], [1], [0, 0, 1, 1], [], []>} : vector<8x8xbf16>, vector<8x512xbf16>, vector<8x512xf32> -> vector<8x512xf32>
    %277 = vector.extract_strided_slice %148 {offsets = [24, 0], sizes = [8, 1], strides = [1, 1]} : vector<32x1xf32> to vector<8x1xf32>
    %278 = vector.broadcast %277 : vector<8x1xf32> to vector<8x512xf32>
    %279 = arith.addf %276, %278 : vector<8x512xf32>
    %280 = arith.negf %279 : vector<8x512xf32>
    %281 = math.exp %280 : vector<8x512xf32>
    %cst_73 = arith.constant 1.000000e+00 : f32
    %282 = vector.broadcast %cst_73 : f32 to vector<8x512xf32>
    %283 = arith.addf %282, %281 : vector<8x512xf32>
    %284 = arith.divf %282, %283 : vector<8x512xf32>
    %285 = arith.mulf %284, %231 : vector<8x512xf32>
    %286 = arith.addf %285, %144 : vector<8x512xf32>
    %c0_74 = arith.constant 0 : index
    %c0_75 = arith.constant 0 : index
    %287 = vector.load %arg6[%c0_74, %c0_75] : memref<8x72xbf16, #tpu.memory_space<vmem>>, vector<8x72xbf16>
    %c17_i32_76 = arith.constant 17 : i32
    %288 = tpu.dynamic_rotate %286 by %c17_i32_76 dim 1 : vector<8x512xf32>, i32 -> vector<8x512xf32>
    %289 = vector.extract_strided_slice %0 {offsets = [0, 0], sizes = [1, 512], strides = [1, 1]} : vector<9x512xf32> to vector<1x512xf32>
    %290 = vector.broadcast %289 : vector<1x512xf32> to vector<8x512xf32>
    %291 = arith.mulf %288, %290 : vector<8x512xf32>
    %c16_i32_77 = arith.constant 16 : i32
    %292 = tpu.dynamic_rotate %286 by %c16_i32_77 dim 1 : vector<8x512xf32>, i32 -> vector<8x512xf32>
    %293 = vector.extract_strided_slice %0 {offsets = [1, 0], sizes = [1, 512], strides = [1, 1]} : vector<9x512xf32> to vector<1x512xf32>
    %294 = vector.broadcast %293 : vector<1x512xf32> to vector<8x512xf32>
    %295 = arith.mulf %292, %294 : vector<8x512xf32>
    %c15_i32_78 = arith.constant 15 : i32
    %296 = tpu.dynamic_rotate %286 by %c15_i32_78 dim 1 : vector<8x512xf32>, i32 -> vector<8x512xf32>
    %297 = vector.extract_strided_slice %0 {offsets = [2, 0], sizes = [1, 512], strides = [1, 1]} : vector<9x512xf32> to vector<1x512xf32>
    %298 = vector.broadcast %297 : vector<1x512xf32> to vector<8x512xf32>
    %299 = arith.mulf %296, %298 : vector<8x512xf32>
    %c1_i32_79 = arith.constant 1 : i32
    %300 = tpu.dynamic_rotate %286 by %c1_i32_79 dim 1 : vector<8x512xf32>, i32 -> vector<8x512xf32>
    %301 = vector.extract_strided_slice %0 {offsets = [3, 0], sizes = [1, 512], strides = [1, 1]} : vector<9x512xf32> to vector<1x512xf32>
    %302 = vector.broadcast %301 : vector<1x512xf32> to vector<8x512xf32>
    %303 = arith.mulf %300, %302 : vector<8x512xf32>
    %c511_i32_80 = arith.constant 511 : i32
    %304 = tpu.dynamic_rotate %286 by %c511_i32_80 dim 1 : vector<8x512xf32>, i32 -> vector<8x512xf32>
    %305 = vector.extract_strided_slice %0 {offsets = [5, 0], sizes = [1, 512], strides = [1, 1]} : vector<9x512xf32> to vector<1x512xf32>
    %306 = vector.broadcast %305 : vector<1x512xf32> to vector<8x512xf32>
    %307 = arith.mulf %304, %306 : vector<8x512xf32>
    %c497_i32_81 = arith.constant 497 : i32
    %308 = tpu.dynamic_rotate %286 by %c497_i32_81 dim 1 : vector<8x512xf32>, i32 -> vector<8x512xf32>
    %309 = vector.extract_strided_slice %0 {offsets = [6, 0], sizes = [1, 512], strides = [1, 1]} : vector<9x512xf32> to vector<1x512xf32>
    %310 = vector.broadcast %309 : vector<1x512xf32> to vector<8x512xf32>
    %311 = arith.mulf %308, %310 : vector<8x512xf32>
    %c496_i32_82 = arith.constant 496 : i32
    %312 = tpu.dynamic_rotate %286 by %c496_i32_82 dim 1 : vector<8x512xf32>, i32 -> vector<8x512xf32>
    %313 = vector.extract_strided_slice %0 {offsets = [7, 0], sizes = [1, 512], strides = [1, 1]} : vector<9x512xf32> to vector<1x512xf32>
    %314 = vector.broadcast %313 : vector<1x512xf32> to vector<8x512xf32>
    %315 = arith.mulf %312, %314 : vector<8x512xf32>
    %c495_i32_83 = arith.constant 495 : i32
    %316 = tpu.dynamic_rotate %286 by %c495_i32_83 dim 1 : vector<8x512xf32>, i32 -> vector<8x512xf32>
    %317 = vector.extract_strided_slice %0 {offsets = [8, 0], sizes = [1, 512], strides = [1, 1]} : vector<9x512xf32> to vector<1x512xf32>
    %318 = vector.broadcast %317 : vector<1x512xf32> to vector<8x512xf32>
    %319 = arith.mulf %316, %318 : vector<8x512xf32>
    %320 = tpu.concatenate %291, %295, %299, %303, %286, %307, %311, %315, %319 in 0 : vector<8x512xf32>, vector<8x512xf32>, vector<8x512xf32>, vector<8x512xf32>, vector<8x512xf32>, vector<8x512xf32>, vector<8x512xf32>, vector<8x512xf32>, vector<8x512xf32> -> vector<72x512xf32>
    %321 = arith.truncf %320 : vector<72x512xf32> to vector<72x512xbf16>
    %cst_84 = arith.constant dense<0.000000e+00> : vector<8x512xf32>
    %322 = tpu.matmul %287, %321, %cst_84 {dimension_numbers = #tpu.dot_dimension_numbers<[1], [0], [0], [1], [0, 0, 1, 1], [], []>} : vector<8x72xbf16>, vector<72x512xbf16>, vector<8x512xf32> -> vector<8x512xf32>
    %c0_85 = arith.constant 0 : index
    %c0_86 = arith.constant 0 : index
    %323 = vector.load %arg7[%c0_85, %c0_86] : memref<8x1xf32, #tpu.memory_space<vmem>>, vector<8x1xf32>
    %324 = vector.broadcast %323 : vector<8x1xf32> to vector<8x512xf32>
    %325 = arith.addf %322, %324 : vector<8x512xf32>
    %326 = arith.addf %325, %2 : vector<8x512xf32>
    %c0_87 = arith.constant 0 : index
    %c0_88 = arith.constant 0 : index
    %c0_89 = arith.constant 0 : index
    %327 = vector.load %arg8[%c0_87, %c0_88, %c0_89] : memref<1x8x512xf32, #tpu.memory_space<vmem>>, vector<1x8x512xf32>
    %328 = vector.shape_cast %327 : vector<1x8x512xf32> to vector<8x512xf32>
    %329 = vector.shape_cast %326 : vector<8x512xf32> to vector<1x8x512xf32>
    tpu.vector_store %arg8[%c0_87, %c0_88, %c0_89], %329 {strides = array<i32>} : memref<1x8x512xf32, #tpu.memory_space<vmem>>, vector<1x8x512xf32>,
    return
  }
  func.func @transform_0(%arg0: i32) -> (i32, i32, i32) {
    %c0_i32 = arith.constant 0 : i32
    %c0_i32_0 = arith.constant 0 : i32
    %c0_i32_1 = arith.constant 0 : i32
    return %arg0, %c0_i32, %c0_i32_0 : i32, i32, i32
  }
  func.func @transform_1(%arg0: i32) -> (i32, i32) {
    %c0_i32 = arith.constant 0 : i32
    %c0_i32_0 = arith.constant 0 : i32
    %c0_i32_1 = arith.constant 0 : i32
    return %c0_i32, %c0_i32_0 : i32, i32
  }
  func.func @transform_2(%arg0: i32) -> (i32, i32, i32) {
    %c0_i32 = arith.constant 0 : i32
    %c0_i32_0 = arith.constant 0 : i32
    %c0_i32_1 = arith.constant 0 : i32
    %c0_i32_2 = arith.constant 0 : i32
    return %c0_i32, %c0_i32_0, %c0_i32_1 : i32, i32, i32
  }
  func.func @transform_3(%arg0: i32) -> (i32, i32, i32) {
    %c0_i32 = arith.constant 0 : i32
    %c0_i32_0 = arith.constant 0 : i32
    %c0_i32_1 = arith.constant 0 : i32
    %c0_i32_2 = arith.constant 0 : i32
    return %c0_i32, %c0_i32_0, %c0_i32_1 : i32, i32, i32
  }
  func.func @transform_4(%arg0: i32) -> (i32, i32, i32) {
    %c0_i32 = arith.constant 0 : i32
    %c0_i32_0 = arith.constant 0 : i32
    %c0_i32_1 = arith.constant 0 : i32
    %c0_i32_2 = arith.constant 0 : i32
    return %c0_i32, %c0_i32_0, %c0_i32_1 : i32, i32, i32
  }
  func.func @transform_5(%arg0: i32) -> (i32, i32) {
    %c0_i32 = arith.constant 0 : i32
    %c0_i32_0 = arith.constant 0 : i32
    %c0_i32_1 = arith.constant 0 : i32
    return %c0_i32, %c0_i32_0 : i32, i32
  }
  func.func @transform_6(%arg0: i32) -> (i32, i32) {
    %c0_i32 = arith.constant 0 : i32
    %c0_i32_0 = arith.constant 0 : i32
    %c0_i32_1 = arith.constant 0 : i32
    return %c0_i32, %c0_i32_0 : i32, i32
  }
  func.func @transform_7(%arg0: i32) -> (i32, i32, i32) {
    %c0_i32 = arith.constant 0 : i32
    %c0_i32_0 = arith.constant 0 : i32
    %c0_i32_1 = arith.constant 0 : i32
    return %arg0, %c0_i32, %c0_i32_0 : i32, i32, i32
  }
}

</mosaic_0001>

<llo_original>
// kernel: _stage_call.1
$region0: #{_stage_call.1}
  #allocation0 [shape = 'u32[]', space=smem, size = 0x4, offset = 0x4, fixed_abs, tag = 'smem constant byte address 0x4 - core index']
  #allocation1 [shape = 'u32[144,128]{1,0:T(1,128)}', space=vmem, size = 0x12000, scoped, tag = 'internal scratch']
  %s0 = inlined_call_operand.vmem [shape: f32[2,8,512], index: 0, kind: input, shape index: {}]
  %s1 = inlined_call_operand.vmem [shape: f32[9,512], index: 1, kind: input, shape index: {}]
  %s2 = inlined_call_operand.vmem [shape: bf16[2,32,72], index: 2, kind: input, shape index: {}]
  %s3 = inlined_call_operand.vmem [shape: f32[2,32,1], index: 3, kind: input, shape index: {}]
  %s4 = inlined_call_operand.vmem [shape: bf16[2,8,8], index: 4, kind: input, shape index: {}]
  %s5 = inlined_call_operand.vmem [shape: bf16[8,72], index: 5, kind: input, shape index: {}]
  %s6 = inlined_call_operand.vmem [shape: f32[8,1], index: 6, kind: input, shape index: {}]
  %s7 = inlined_call_operand.vmem [shape: f32[2,8,512], index: 7, kind: output, shape index: {}]
  %s8 = sld [smem:[#allocation0]]
  $region61: #{_stage_call.1} parent=0
    _
  %s10 = ssub.s32 1, %s8
  %s11 = scalar_select 0, %s10, %s8
  loop: start=0, step=1, limit=4
  $region2: #{_stage_call.1} parent=0 // loop_pre_header
    _
  $region3: #{_stage_call.1} parent=0 // loop_header
    %s13 = sphi 0, %s17
    %p14 = scmp.ge.s32.totalorder %s13, 4
    %s23 = sphi 0, %s25
    %s26 = sphi 0, %s23
    %s27 = sphi 0, %s26
    %s43 = sphi 0, %s27
    %s47 = sphi 0, %s47
    %s49 = sphi 0, %s47
    %s50 = sphi 0, %s49
    %s64 = sphi 0, %s50
    %s68 = sphi 0, %s68
    %s70 = sphi 0, %s68
    %s71 = sphi 0, %s70
    %s85 = sphi 0, %s71
    %s89 = sphi 0, %s89
    %s91 = sphi 0, %s89
    %s92 = sphi 0, %s91
    %s106 = sphi 0, %s92
    %s110 = sphi 0, %s110
    %s112 = sphi 0, %s110
    %s113 = sphi 0, %s112
    %s127 = sphi 0, %s113
    %s131 = sphi 0, %s131
    %s133 = sphi 0, %s131
    %s134 = sphi 0, %s133
    %s148 = sphi 0, %s134
    %s152 = sphi 0, %s152
    %s154 = sphi 0, %s152
    %s155 = sphi 0, %s154
    %s169 = sphi 0, %s155
    %s175 = sphi 0, %s177
    %s178 = sphi 0, %s175
    %s179 = sphi 0, %s178
    %s195 = sphi 0, %s179
  $region4: #{_stage_call.1} parent=0 // loop_header_branch
    %16 = sbr.rel (%p14) target = $region8
  $region5: #{_stage_call.1} parent=0 // loop_body
    %s18 = ssub.s32 %s13, 1
    %s19 = ssub.s32 %s13, 2
    %s20 = sadd.s32 %s13, 1
    %s21 = ssub.s32 %s13, %s20
    %p22 = scmp.eq.s32.totalorder %s21, 0
    %s24 = sadd.s32 %s23, 1
    %s25 = scalar_select %p22, %s23, %s24
    %p28 = pneg %p22
    %p29 = scmp.eq.s32.totalorder %s13, 1
    %p30 = por %p28, %p29
    %p31 = scmp.ne.s32.totalorder %s23, %s26
    %p32 = scmp.eq.s32.totalorder %s13, 0
    %p33 = por %p31, %p32
    %p34 = scmp.ne.s32.totalorder %s23, %s26
    %p35 = scmp.eq.s32.totalorder %s18, 1
    %p36 = por %p34, %p35
    %p37 = scmp.ne.s32.totalorder %s26, %s27
    %p38 = scmp.eq.s32.totalorder %s18, 0
    %p39 = por %p37, %p38
    %p40 = scmp.ne.s32.totalorder %s26, %s27
    %p41 = scmp.eq.s32.totalorder %s19, 1
    %p42 = por %p40, %p41
    %p44 = scmp.ne.s32.totalorder %s27, %s43
    %p45 = scmp.eq.s32.totalorder %s19, 0
    %p46 = por %p44, %p45
    %s48 = sadd.s32 %s47, 1
    %p51 = scmp.eq.s32.totalorder %s13, 1
    %p52 = scmp.ne.s32.totalorder %s47, %s49
    %p53 = scmp.eq.s32.totalorder %s13, 0
    %p54 = por %p52, %p53
    %p55 = scmp.ne.s32.totalorder %s47, %s49
    %p56 = scmp.eq.s32.totalorder %s18, 1
    %p57 = por %p55, %p56
    %p58 = scmp.ne.s32.totalorder %s49, %s50
    %p59 = scmp.eq.s32.totalorder %s18, 0
    %p60 = por %p58, %p59
    %p61 = scmp.ne.s32.totalorder %s49, %s50
    %p62 = scmp.eq.s32.totalorder %s19, 1
    %p63 = por %p61, %p62
    %p65 = scmp.ne.s32.totalorder %s50, %s64
    %p66 = scmp.eq.s32.totalorder %s19, 0
    %p67 = por %p65, %p66
    %s69 = sadd.s32 %s68, 1
    %p72 = scmp.eq.s32.totalorder %s13, 1
    %p73 = scmp.ne.s32.totalorder %s68, %s70
    %p74 = scmp.eq.s32.totalorder %s13, 0
    %p75 = por %p73, %p74
    %p76 = scmp.ne.s32.totalorder %s68, %s70
    %p77 = scmp.eq.s32.totalorder %s18, 1
    %p78 = por %p76, %p77
    %p79 = scmp.ne.s32.totalorder %s70, %s71
    %p80 = scmp.eq.s32.totalorder %s18, 0
    %p81 = por %p79, %p80
    %p82 = scmp.ne.s32.totalorder %s70, %s71
    %p83 = scmp.eq.s32.totalorder %s19, 1
    %p84 = por %p82, %p83
    %p86 = scmp.ne.s32.totalorder %s71, %s85
    %p87 = scmp.eq.s32.totalorder %s19, 0
    %p88 = por %p86, %p87
    %s90 = sadd.s32 %s89, 1
    %p93 = scmp.eq.s32.totalorder %s13, 1
    %p94 = scmp.ne.s32.totalorder %s89, %s91
    %p95 = scmp.eq.s32.totalorder %s13, 0
    %p96 = por %p94, %p95
    %p97 = scmp.ne.s32.totalorder %s89, %s91
    %p98 = scmp.eq.s32.totalorder %s18, 1
    %p99 = por %p97, %p98
    %p100 = scmp.ne.s32.totalorder %s91, %s92
    %p101 = scmp.eq.s32.totalorder %s18, 0
    %p102 = por %p100, %p101
    %p103 = scmp.ne.s32.totalorder %s91, %s92
    %p104 = scmp.eq.s32.totalorder %s19, 1
    %p105 = por %p103, %p104
    %p107 = scmp.ne.s32.totalorder %s92, %s106
    %p108 = scmp.eq.s32.totalorder %s19, 0
    %p109 = por %p107, %p108
    %s111 = sadd.s32 %s110, 1
    %p114 = scmp.eq.s32.totalorder %s13, 1
    %p115 = scmp.ne.s32.totalorder %s110, %s112
    %p116 = scmp.eq.s32.totalorder %s13, 0
    %p117 = por %p115, %p116
    %p118 = scmp.ne.s32.totalorder %s110, %s112
    %p119 = scmp.eq.s32.totalorder %s18, 1
    %p120 = por %p118, %p119
    %p121 = scmp.ne.s32.totalorder %s112, %s113
    %p122 = scmp.eq.s32.totalorder %s18, 0
    %p123 = por %p121, %p122
    %p124 = scmp.ne.s32.totalorder %s112, %s113
    %p125 = scmp.eq.s32.totalorder %s19, 1
    %p126 = por %p124, %p125
    %p128 = scmp.ne.s32.totalorder %s113, %s127
    %p129 = scmp.eq.s32.totalorder %s19, 0
    %p130 = por %p128, %p129
    %s132 = sadd.s32 %s131, 1
    %p135 = scmp.eq.s32.totalorder %s13, 1
    %p136 = scmp.ne.s32.totalorder %s131, %s133
    %p137 = scmp.eq.s32.totalorder %s13, 0
    %p138 = por %p136, %p137
    %p139 = scmp.ne.s32.totalorder %s131, %s133
    %p140 = scmp.eq.s32.totalorder %s18, 1
    %p141 = por %p139, %p140
    %p142 = scmp.ne.s32.totalorder %s133, %s134
    %p143 = scmp.eq.s32.totalorder %s18, 0
    %p144 = por %p142, %p143
    %p145 = scmp.ne.s32.totalorder %s133, %s134
    %p146 = scmp.eq.s32.totalorder %s19, 1
    %p147 = por %p145, %p146
    %p149 = scmp.ne.s32.totalorder %s134, %s148
    %p150 = scmp.eq.s32.totalorder %s19, 0
    %p151 = por %p149, %p150
    %s153 = sadd.s32 %s152, 1
    %p156 = scmp.eq.s32.totalorder %s13, 1
    %p157 = scmp.ne.s32.totalorder %s152, %s154
    %p158 = scmp.eq.s32.totalorder %s13, 0
    %p159 = por %p157, %p158
    %p160 = scmp.ne.s32.totalorder %s152, %s154
    %p161 = scmp.eq.s32.totalorder %s18, 1
    %p162 = por %p160, %p161
    %p163 = scmp.ne.s32.totalorder %s154, %s155
    %p164 = scmp.eq.s32.totalorder %s18, 0
    %p165 = por %p163, %p164
    %p166 = scmp.ne.s32.totalorder %s154, %s155
    %p167 = scmp.eq.s32.totalorder %s19, 1
    %p168 = por %p166, %p167
    %p170 = scmp.ne.s32.totalorder %s155, %s169
    %p171 = scmp.eq.s32.totalorder %s19, 0
    %p172 = por %p170, %p171
    %s173 = ssub.s32 %s13, %s20
    %p174 = scmp.eq.s32.totalorder %s173, 0
    %s176 = sadd.s32 %s175, 1
    %s177 = scalar_select %p174, %s175, %s176
    %p180 = pneg %p174
    %p181 = scmp.eq.s32.totalorder %s13, 1
    %p182 = por %p180, %p181
    %p183 = scmp.ne.s32.totalorder %s175, %s178
    %p184 = scmp.eq.s32.totalorder %s13, 0
    %p185 = por %p183, %p184
    %p186 = scmp.ne.s32.totalorder %s175, %s178
    %p187 = scmp.eq.s32.totalorder %s18, 1
    %p188 = por %p186, %p187
    %p189 = scmp.ne.s32.totalorder %s178, %s179
    %p190 = scmp.eq.s32.totalorder %s18, 0
    %p191 = por %p189, %p190
    %p192 = scmp.ne.s32.totalorder %s178, %s179
    %p193 = scmp.eq.s32.totalorder %s19, 1
    %p194 = por %p192, %p193
    %p196 = scmp.ne.s32.totalorder %s179, %s195
    %p197 = scmp.eq.s32.totalorder %s19, 0
    %p198 = por %p196, %p197
    %p199 = scmp.le.s32.totalorder 1, %s13
    %p200 = scmp.lt.s32.totalorder %s13, 3
    %p201 = pnand %p199, %p200
    %p202 = pneg %p201
    // Predicated region
    $region9: #{_stage_call.1} parent=5 // pred_check
      _
    $region10: #{_stage_call.1} parent=5 // pred_check_branch
      %204 = sbr.rel (%p201) target = $region12
    $region11: #{_stage_call.1} parent=5 // pred_region
      %s205 = ssub.s32 %s13, 1
      // Predicated region
      $region13: #{_stage_call.1} parent=11 // pred_check
        %p206 = pneg %p60
      $region14: #{_stage_call.1} parent=11 // pred_check_branch
        %208 = sbr.rel (%p206) target = $region16
      $region15: #{_stage_call.1} parent=11 // pred_region
        _
      $region16: #{_stage_call.1} parent=11 // pred_fallthru
        _
      // Predicated region
      $region17: #{_stage_call.1} parent=11 // pred_check
        %p209 = pneg %p81
      $region18: #{_stage_call.1} parent=11 // pred_check_branch
        %211 = sbr.rel (%p209) target = $region20
      $region19: #{_stage_call.1} parent=11 // pred_region
        _
      $region20: #{_stage_call.1} parent=11 // pred_fallthru
        _
      // Predicated region
      $region21: #{_stage_call.1} parent=11 // pred_check
        %p212 = pneg %p102
      $region22: #{_stage_call.1} parent=11 // pred_check_branch
        %214 = sbr.rel (%p212) target = $region24
      $region23: #{_stage_call.1} parent=11 // pred_region
        _
      $region24: #{_stage_call.1} parent=11 // pred_fallthru
        _
      // Predicated region
      $region25: #{_stage_call.1} parent=11 // pred_check
        %p215 = pneg %p123
      $region26: #{_stage_call.1} parent=11 // pred_check_branch
        %217 = sbr.rel (%p215) target = $region28
      $region27: #{_stage_call.1} parent=11 // pred_region
        _
      $region28: #{_stage_call.1} parent=11 // pred_fallthru
        _
      // Predicated region
      $region29: #{_stage_call.1} parent=11 // pred_check
        %p218 = pneg %p144
      $region30: #{_stage_call.1} parent=11 // pred_check_branch
        %220 = sbr.rel (%p218) target = $region32
      $region31: #{_stage_call.1} parent=11 // pred_region
        _
      $region32: #{_stage_call.1} parent=11 // pred_fallthru
        _
      // Predicated region
      $region33: #{_stage_call.1} parent=11 // pred_check
        %p221 = pneg %p165
      $region34: #{_stage_call.1} parent=11 // pred_check_branch
        %223 = sbr.rel (%p221) target = $region36
      $region35: #{_stage_call.1} parent=11 // pred_region
        _
      $region36: #{_stage_call.1} parent=11 // pred_fallthru
        _
    $region12: #{_stage_call.1} parent=5 // pred_fallthru
      _
    %p224 = scmp.lt.s32.totalorder %s13, 2
    // Predicated region
    $region37: #{_stage_call.1} parent=5 // pred_check
      %p225 = pneg %p224
    $region38: #{_stage_call.1} parent=5 // pred_check_branch
      %227 = sbr.rel (%p225) target = $region40
    $region39: #{_stage_call.1} parent=5 // pred_region
      // Predicated region
      $region41: #{_stage_call.1} parent=39 // pred_check
        %p228 = pneg %p33
      $region42: #{_stage_call.1} parent=39 // pred_check_branch
        %230 = sbr.rel (%p228) target = $region44
      $region43: #{_stage_call.1} parent=39 // pred_region
        %p231 = scmp.lt.s32.totalorder %s13, 1
        %s232 = scalar_select %p231, %s13, 1
        %s233 = smul.addr %s232, 4
        %s234 = smul.addr %s233, 8
        %s235 = scalar_lea.vmem %s0, %s234
      $region44: #{_stage_call.1} parent=39 // pred_fallthru
        _
    $region40: #{_stage_call.1} parent=5 // pred_fallthru
      _
    %p236 = scmp.le.s32.totalorder 1, %s13
    %p237 = scmp.lt.s32.totalorder %s13, 3
    %p238 = pnand %p236, %p237
    %p239 = pneg %p238
    // Predicated region
    $region45: #{_stage_call.1} parent=5 // pred_check
      _
    $region46: #{_stage_call.1} parent=5 // pred_check_branch
      %241 = sbr.rel (%p238) target = $region48
    $region47: #{_stage_call.1} parent=5 // pred_region
      %s242 = ssub.s32 %s13, 1
      %p243 = scmp.lt.s32.totalorder %s18, 1
      %s244 = scalar_select %p243, %s18, 1
      %s245 = smul.addr %s244, 4
      %s246 = smul.addr %s245, 8
      %s247 = scalar_lea.vmem %s0, %s246
      %p248 = pneg %p39
      %p249 = pneg %p36
      %p250 = pneg %p60
      %p251 = pneg %p57
      %p252 = pneg %p81
      %p253 = pneg %p78
      %p254 = pneg %p102
      %p255 = pneg %p99
      %p256 = pneg %p123
      %p257 = pneg %p120
      %p258 = pneg %p144
      %p259 = pneg %p141
      %p260 = pneg %p165
      %p261 = pneg %p162
      %p262 = pneg %p191
      %p263 = pneg %p188
      %p264 = scmp.lt.s32.totalorder %s18, 1
      %s265 = scalar_select %p264, %s18, 1
      %s266 = smul.addr %s265, 4
      %s267 = smul.addr %s266, 8
      %s268 = scalar_lea.vmem %s7, %s267
      %p269 = scmp.lt.s32.totalorder %s18, 1
      %s270 = scalar_select %p269, %s18, 1
      %s271 = smul.addr %s270, 4
      %s272 = smul.addr %s271, 8
      %s273 = scalar_lea.vmem %s0, %s272
      %p274 = scmp.lt.s32.totalorder %s18, 1
      %s275 = scalar_select %p274, %s18, 1
      %s276 = smul.addr %s275, 4
      %s277 = smul.addr %s276, 8
      %s278 = scalar_lea.vmem %s7, %s277
      %v280 = vld [vmem:[%s1] sm:$0xff]
      %v281 = vld [vmem:[%s1 + $0x8] sm:$0xff]
      %v282 = vld [vmem:[%s1 + $0x10] sm:$0xff]
      %v283 = vld [vmem:[%s1 + $0x18] sm:$0xff]
      %v284 = vld [vmem:[%s1 + $0x20] sm:$0x1]
      %v285 = vld [vmem:[%s1 + $0x28] sm:$0x1]
      %v286 = vld [vmem:[%s1 + $0x30] sm:$0x1]
      %v287 = vld [vmem:[%s1 + $0x38] sm:$0x1]
      %v288 = vld [vmem:[%s273] sm:$0xff]
      %v289 = vld [vmem:[%s273 + $0x8] sm:$0xff]
      %v290 = vld [vmem:[%s273 + $0x10] sm:$0xff]
      %v291 = vld [vmem:[%s273 + $0x18] sm:$0xff]
      %v292 = vld [vmem:[%s2] sm:$0xf]
      %v293 = vld [vmem:[%s2 + $0x4] sm:$0xf]
      %v294 = vld [vmem:[%s2 + $0x8] sm:$0xf]
      %v295 = vld [vmem:[%s2 + $0xc] sm:$0xf]
      %v296 = vld [vmem:[%s3] sm:$0xff]
      %v297 = vld [vmem:[%s3 + $0x8] sm:$0xff]
      %v298 = vld [vmem:[%s3 + $0x10] sm:$0xff]
      %v299 = vld [vmem:[%s3 + $0x18] sm:$0xff]
      %300 = vrot.lane.b32.xlu0 %v288, 17
      %v301 = vpop.permute.xlu0 %300
      %302 = vrot.lane.b32.xlu0 %v289, 17
      %v303 = vpop.permute.xlu0 %302
      %304 = vrot.lane.b32.xlu0 %v290, 17
      %v305 = vpop.permute.xlu0 %304
      %306 = vrot.lane.b32.xlu0 %v291, 17
      %v307 = vpop.permute.xlu0 %306
      %v308 = vlaneseq
      %v309 = vand.u32 %v308, 127
      %vm310 = vcmp.lt.s32.totalorder %v309, 17
      %v311 = vsel %vm310, %v305, %v307
      %v312 = vsel %vm310, %v303, %v305
      %v313 = vsel %vm310, %v301, %v303
      %v314 = vsel %vm310, %v307, %v301
      %v315 = vlaneseq
      %v316 = vshrl.u32 %v315, 7
      %v317 = vsub.s32 0, %v316
      %v318 = vrot.slane %v280, %v317
      %v319 = vlaneseq
      %v320 = vshrl.u32 %v319, 7
      %v321 = vsub.s32 0, %v320
      %v322 = vrot.slane %v281, %v321
      %v323 = vlaneseq
      %v324 = vshrl.u32 %v323, 7
      %v325 = vsub.s32 0, %v324
      %v326 = vrot.slane %v282, %v325
      %v327 = vlaneseq
      %v328 = vshrl.u32 %v327, 7
      %v329 = vsub.s32 0, %v328
      %v330 = vrot.slane %v283, %v329
      %v331 = vmul.f32 %v314, %v318
      %v332 = vmul.f32 %v313, %v322
      %v333 = vmul.f32 %v312, %v326
      %v334 = vmul.f32 %v311, %v330
      %335 = vrot.lane.b32.xlu0 %v288, 16
      %v336 = vpop.permute.xlu0 %335
      %337 = vrot.lane.b32.xlu0 %v289, 16
      %v338 = vpop.permute.xlu0 %337
      %339 = vrot.lane.b32.xlu0 %v290, 16
      %v340 = vpop.permute.xlu0 %339
      %341 = vrot.lane.b32.xlu0 %v291, 16
      %v342 = vpop.permute.xlu0 %341
      %vm343 = vcmp.lt.s32.totalorder %v309, 16
      %v344 = vsel %vm343, %v340, %v342
      %v345 = vsel %vm343, %v338, %v340
      %v346 = vsel %vm343, %v336, %v338
      %v347 = vsel %vm343, %v342, %v336
      %v348 = vlaneseq
      %v349 = vshrl.u32 %v348, 7
      %v350 = vsub.s32 1, %v349
      %v351 = vrot.slane %v280, %v350
      %v352 = vlaneseq
      %v353 = vshrl.u32 %v352, 7
      %v354 = vsub.s32 1, %v353
      %v355 = vrot.slane %v281, %v354
      %v356 = vlaneseq
      %v357 = vshrl.u32 %v356, 7
      %v358 = vsub.s32 1, %v357
      %v359 = vrot.slane %v282, %v358
      %v360 = vlaneseq
      %v361 = vshrl.u32 %v360, 7
      %v362 = vsub.s32 1, %v361
      %v363 = vrot.slane %v283, %v362
      %v364 = vmul.f32 %v347, %v351
      %v365 = vmul.f32 %v346, %v355
      %v366 = vmul.f32 %v345, %v359
      %v367 = vmul.f32 %v344, %v363
      %368 = vrot.lane.b32.xlu0 %v288, 15
      %v369 = vpop.permute.xlu0 %368
      %370 = vrot.lane.b32.xlu0 %v289, 15
      %v371 = vpop.permute.xlu0 %370
      %372 = vrot.lane.b32.xlu0 %v290, 15
      %v373 = vpop.permute.xlu0 %372
      %374 = vrot.lane.b32.xlu0 %v291, 15
      %v375 = vpop.permute.xlu0 %374
      %vm376 = vcmp.lt.s32.totalorder %v309, 15
      %v377 = vsel %vm376, %v373, %v375
      %v378 = vsel %vm376, %v371, %v373
      %v379 = vsel %vm376, %v369, %v371
      %v380 = vsel %vm376, %v375, %v369
      %v381 = vlaneseq
      %v382 = vshrl.u32 %v381, 7
      %v383 = vsub.s32 2, %v382
      %v384 = vrot.slane %v280, %v383
      %v385 = vlaneseq
      %v386 = vshrl.u32 %v385, 7
      %v387 = vsub.s32 2, %v386
      %v388 = vrot.slane %v281, %v387
      %v389 = vlaneseq
      %v390 = vshrl.u32 %v389, 7
      %v391 = vsub.s32 2, %v390
      %v392 = vrot.slane %v282, %v391
      %v393 = vlaneseq
      %v394 = vshrl.u32 %v393, 7
      %v395 = vsub.s32 2, %v394
      %v396 = vrot.slane %v283, %v395
      %v397 = vmul.f32 %v380, %v384
      %v398 = vmul.f32 %v379, %v388
      %v399 = vmul.f32 %v378, %v392
      %v400 = vmul.f32 %v377, %v396
      %401 = vrot.lane.b32.xlu0 %v288, 1
      %v402 = vpop.permute.xlu0 %401
      %403 = vrot.lane.b32.xlu0 %v289, 1
      %v404 = vpop.permute.xlu0 %403
      %405 = vrot.lane.b32.xlu0 %v290, 1
      %v406 = vpop.permute.xlu0 %405
      %407 = vrot.lane.b32.xlu0 %v291, 1
      %v408 = vpop.permute.xlu0 %407
      %vm409 = vcmp.lt.s32.totalorder %v309, 1
      %v410 = vsel %vm409, %v406, %v408
      %v411 = vsel %vm409, %v404, %v406
      %v412 = vsel %vm409, %v402, %v404
      %v413 = vsel %vm409, %v408, %v402
      %v414 = vlaneseq
      %v415 = vshrl.u32 %v414, 7
      %v416 = vsub.s32 3, %v415
      %v417 = vrot.slane %v280, %v416
      %v418 = vlaneseq
      %v419 = vshrl.u32 %v418, 7
      %v420 = vsub.s32 3, %v419
      %v421 = vrot.slane %v281, %v420
      %v422 = vlaneseq
      %v423 = vshrl.u32 %v422, 7
      %v424 = vsub.s32 3, %v423
      %v425 = vrot.slane %v282, %v424
      %v426 = vlaneseq
      %v427 = vshrl.u32 %v426, 7
      %v428 = vsub.s32 3, %v427
      %v429 = vrot.slane %v283, %v428
      %v430 = vmul.f32 %v413, %v417
      %v431 = vmul.f32 %v412, %v421
      %v432 = vmul.f32 %v411, %v425
      %v433 = vmul.f32 %v410, %v429
      %434 = vrot.lane.b32.xlu0 %v288, 127
      %v435 = vpop.permute.xlu0 %434
      %436 = vrot.lane.b32.xlu0 %v289, 127
      %v437 = vpop.permute.xlu0 %436
      %438 = vrot.lane.b32.xlu0 %v290, 127
      %v439 = vpop.permute.xlu0 %438
      %440 = vrot.lane.b32.xlu0 %v291, 127
      %v441 = vpop.permute.xlu0 %440
      %vm442 = vcmp.lt.s32.totalorder %v309, 127
      %v443 = vsel %vm442, %v439, %v441
      %v444 = vsel %vm442, %v437, %v439
      %v445 = vsel %vm442, %v435, %v437
      %v446 = vsel %vm442, %v441, %v435
      %v447 = vlaneseq
      %v448 = vshrl.u32 %v447, 7
      %v449 = vsub.s32 5, %v448
      %v450 = vrot.slane %v280, %v449
      %v451 = vlaneseq
      %v452 = vshrl.u32 %v451, 7
      %v453 = vsub.s32 5, %v452
      %v454 = vrot.slane %v281, %v453
      %v455 = vlaneseq
      %v456 = vshrl.u32 %v455, 7
      %v457 = vsub.s32 5, %v456
      %v458 = vrot.slane %v282, %v457
      %v459 = vlaneseq
      %v460 = vshrl.u32 %v459, 7
      %v461 = vsub.s32 5, %v460
      %v462 = vrot.slane %v283, %v461
      %v463 = vmul.f32 %v445, %v450
      %v464 = vmul.f32 %v444, %v454
      %v465 = vmul.f32 %v443, %v458
      %v466 = vmul.f32 %v446, %v462
      %467 = vrot.lane.b32.xlu0 %v288, 113
      %v468 = vpop.permute.xlu0 %467
      %469 = vrot.lane.b32.xlu0 %v289, 113
      %v470 = vpop.permute.xlu0 %469
      %471 = vrot.lane.b32.xlu0 %v290, 113
      %v472 = vpop.permute.xlu0 %471
      %473 = vrot.lane.b32.xlu0 %v291, 113
      %v474 = vpop.permute.xlu0 %473
      %vm475 = vcmp.lt.s32.totalorder %v309, 113
      %v476 = vsel %vm475, %v472, %v474
      %v477 = vsel %vm475, %v470, %v472
      %v478 = vsel %vm475, %v468, %v470
      %v479 = vsel %vm475, %v474, %v468
      %v480 = vlaneseq
      %v481 = vshrl.u32 %v480, 7
      %v482 = vsub.s32 6, %v481
      %v483 = vrot.slane %v280, %v482
      %v484 = vlaneseq
      %v485 = vshrl.u32 %v484, 7
      %v486 = vsub.s32 6, %v485
      %v487 = vrot.slane %v281, %v486
      %v488 = vlaneseq
      %v489 = vshrl.u32 %v488, 7
      %v490 = vsub.s32 6, %v489
      %v491 = vrot.slane %v282, %v490
      %v492 = vlaneseq
      %v493 = vshrl.u32 %v492, 7
      %v494 = vsub.s32 6, %v493
      %v495 = vrot.slane %v283, %v494
      %v496 = vmul.f32 %v478, %v483
      %v497 = vmul.f32 %v477, %v487
      %v498 = vmul.f32 %v476, %v491
      %v499 = vmul.f32 %v479, %v495
      %500 = vrot.lane.b32.xlu0 %v288, 112
      %v501 = vpop.permute.xlu0 %500
      %502 = vrot.lane.b32.xlu0 %v289, 112
      %v503 = vpop.permute.xlu0 %502
      %504 = vrot.lane.b32.xlu0 %v290, 112
      %v505 = vpop.permute.xlu0 %504
      %506 = vrot.lane.b32.xlu0 %v291, 112
      %v507 = vpop.permute.xlu0 %506
      %vm508 = vcmp.lt.s32.totalorder %v309, 112
      %v509 = vsel %vm508, %v505, %v507
      %v510 = vsel %vm508, %v503, %v505
      %v511 = vsel %vm508, %v501, %v503
      %v512 = vsel %vm508, %v507, %v501
      %v513 = vlaneseq
      %v514 = vshrl.u32 %v513, 7
      %v515 = vsub.s32 7, %v514
      %v516 = vrot.slane %v280, %v515
      %v517 = vlaneseq
      %v518 = vshrl.u32 %v517, 7
      %v519 = vsub.s32 7, %v518
      %v520 = vrot.slane %v281, %v519
      %v521 = vlaneseq
      %v522 = vshrl.u32 %v521, 7
      %v523 = vsub.s32 7, %v522
      %v524 = vrot.slane %v282, %v523
      %v525 = vlaneseq
      %v526 = vshrl.u32 %v525, 7
      %v527 = vsub.s32 7, %v526
      %v528 = vrot.slane %v283, %v527
      %v529 = vmul.f32 %v511, %v516
      %v530 = vmul.f32 %v510, %v520
      %v531 = vmul.f32 %v509, %v524
      %v532 = vmul.f32 %v512, %v528
      %533 = vrot.lane.b32.xlu0 %v288, 111
      %v534 = vpop.permute.xlu0 %533
      %535 = vrot.lane.b32.xlu0 %v289, 111
      %v536 = vpop.permute.xlu0 %535
      %537 = vrot.lane.b32.xlu0 %v290, 111
      %v538 = vpop.permute.xlu0 %537
      %539 = vrot.lane.b32.xlu0 %v291, 111
      %v540 = vpop.permute.xlu0 %539
      %vm541 = vcmp.lt.s32.totalorder %v309, 111
      %v542 = vsel %vm541, %v538, %v540
      %v543 = vsel %vm541, %v536, %v538
      %v544 = vsel %vm541, %v534, %v536
      %v545 = vsel %vm541, %v540, %v534
      %v546 = vlaneseq
      %v547 = vshrl.u32 %v546, 7
      %v548 = vsub.s32 0, %v547
      %v549 = vrot.slane %v284, %v548
      %v550 = vlaneseq
      %v551 = vshrl.u32 %v550, 7
      %v552 = vsub.s32 0, %v551
      %v553 = vrot.slane %v285, %v552
      %v554 = vlaneseq
      %v555 = vshrl.u32 %v554, 7
      %v556 = vsub.s32 0, %v555
      %v557 = vrot.slane %v286, %v556
      %v558 = vlaneseq
      %v559 = vshrl.u32 %v558, 7
      %v560 = vsub.s32 0, %v559
      %v561 = vrot.slane %v287, %v560
      %v562 = vmul.f32 %v544, %v549
      %v563 = vmul.f32 %v543, %v553
      %v564 = vmul.f32 %v542, %v557
      %v565 = vmul.f32 %v545, %v561
      %v566 = vpack.c.bf16 %v364, %v331
      %v567 = vpack.c.bf16 %v365, %v332
      %v568 = vpack.c.bf16 %v366, %v333
      %v569 = vpack.c.bf16 %v367, %v334
      %v570 = vpack.c.bf16 %v430, %v397
      %v571 = vpack.c.bf16 %v431, %v398
      %v572 = vpack.c.bf16 %v432, %v399
      %v573 = vpack.c.bf16 %v433, %v400
      %v574 = vpack.c.bf16 %v463, %v288
      %v575 = vpack.c.bf16 %v464, %v289
      %v576 = vpack.c.bf16 %v465, %v290
      %v577 = vpack.c.bf16 %v466, %v291
      %v578 = vpack.c.bf16 %v529, %v496
      %v579 = vpack.c.bf16 %v530, %v497
      %v580 = vpack.c.bf16 %v531, %v498
      %v581 = vpack.c.bf16 %v532, %v499
      %v582 = vpack.c.bf16 %v562, %v562
      %v583 = vpack.c.bf16 %v563, %v563
      %v584 = vpack.c.bf16 %v564, %v564
      %v585 = vpack.c.bf16 %v565, %v565
      %v588 = vunpack.c.l.b16 %v292
      %v589 = vunpack.c.l.b16 %v293
      %v590 = vpack.c.b16 %v589, %v588
      %vm591 = vcmask 588800
      %v593 = vsel %vm591, %v590, 0
      %vm595 = vcmask 1043456
      %v597 = vsel %vm595, %v582, 0
      %v600 = vsel %vm595, %v583, 0
      %v603 = vsel %vm595, %v584, 0
      %v606 = vsel %vm595, %v585, 0
      %608 = vmatprep.subr.bf16.mxu0 %v567
      %609 = vmatpush1.bf16.msra.mxu0 %v566
      %610 = vmatprep.subr.bf16.mxu0 %v571
      %611 = vmatpush1.bf16.msra.mxu0 %v570
      %612 = vmatprep.subr.bf16.mxu0 %v575
      %613 = vmatpush1.bf16.msra.mxu0 %v574
      %614 = vmatprep.subr.bf16.mxu0 %v579
      %615 = vmatpush1.bf16.msra.mxu0 %v578
      %616 = vmatprep.subr.bf16.mxu0 %v600
      %617 = vmatpush1.bf16.msra.mxu0 %v597
      %618 = vmatprep.subr.bf16.mxu0 0
      %619 = vmatpush1.bf16.msra.mxu0 0
      %620 = vmatprep.subr.bf16.mxu0 0
      %621 = vmatpush1.bf16.msra.mxu0 0
      %622 = vmatprep.subr.bf16.mxu0 0
      %623 = vmatpush1.bf16.msra.mxu0 0
      %624 = vmatprep.subr.bf16.mxu0 0
      %625 = vmatpush1.bf16.msra.mxu0 0
      %626 = vmatprep.subr.bf16.mxu0 0
      %627 = vmatpush1.bf16.msra.mxu0 0
      %628 = vmatprep.subr.bf16.mxu0 0
      %629 = vmatpush1.bf16.msra.mxu0 0
      %630 = vmatprep.subr.bf16.mxu0 0
      %631 = vmatpush1.bf16.msra.mxu0 0
      %632 = vmatprep.subr.bf16.mxu0 0
      %633 = vmatpush1.bf16.msra.mxu0 0
      %634 = vmatprep.subr.bf16.mxu0 0
      %635 = vmatpush1.bf16.msra.mxu0 0
      %636 = vmatprep.subr.bf16.mxu0 0
      %637 = vmatpush1.bf16.msra.mxu0 0
      %638 = vmatprep.subr.bf16.mxu0 0
      %639 = vmatpush1.bf16.msra.mxu0 0
      %640 = vmatprep.mubr.bf16.mxu0 0
      %641 = vmatmul.mubr.bf16.gmra.mrb[0].mxu0 %v593
      %v642 = vpop.f32.mrb[0].mxu0
      %v643 = vadd.f32 0.0, %v642
      %v644 = vpop.f32.mrb[0].mxu0
      %v645 = vadd.f32 0.0, %v644
      %v646 = vpop.f32.mrb[0].mxu0
      %v647 = vadd.f32 0.0, %v646
      %v648 = vpop.f32.mrb[0].mxu0
      %v649 = vadd.f32 0.0, %v648
      %650 = vdwg.mxu0
      %651 = vmatprep.subr.bf16.mxu0 %v569
      %652 = vmatpush1.bf16.msra.mxu0 %v568
      %653 = vmatprep.subr.bf16.mxu0 %v573
      %654 = vmatpush1.bf16.msra.mxu0 %v572
      %655 = vmatprep.subr.bf16.mxu0 %v577
      %656 = vmatpush1.bf16.msra.mxu0 %v576
      %657 = vmatprep.subr.bf16.mxu0 %v581
      %658 = vmatpush1.bf16.msra.mxu0 %v580
      %659 = vmatprep.subr.bf16.mxu0 %v606
      %660 = vmatpush1.bf16.msra.mxu0 %v603
      %661 = vmatprep.subr.bf16.mxu0 0
      %662 = vmatpush1.bf16.msra.mxu0 0
      %663 = vmatprep.subr.bf16.mxu0 0
      %664 = vmatpush1.bf16.msra.mxu0 0
      %665 = vmatprep.subr.bf16.mxu0 0
      %666 = vmatpush1.bf16.msra.mxu0 0
      %667 = vmatprep.subr.bf16.mxu0 0
      %668 = vmatpush1.bf16.msra.mxu0 0
      %669 = vmatprep.subr.bf16.mxu0 0
      %670 = vmatpush1.bf16.msra.mxu0 0
      %671 = vmatprep.subr.bf16.mxu0 0
      %672 = vmatpush1.bf16.msra.mxu0 0
      %673 = vmatprep.subr.bf16.mxu0 0
      %674 = vmatpush1.bf16.msra.mxu0 0
      %675 = vmatprep.subr.bf16.mxu0 0
      %676 = vmatpush1.bf16.msra.mxu0 0
      %677 = vmatprep.subr.bf16.mxu0 0
      %678 = vmatpush1.bf16.msra.mxu0 0
      %679 = vmatprep.subr.bf16.mxu0 0
      %680 = vmatpush1.bf16.msra.mxu0 0
      %681 = vmatprep.subr.bf16.mxu0 0
      %682 = vmatpush1.bf16.msra.mxu0 0
      %683 = vmatprep.mubr.bf16.mxu0 0
      %684 = vmatmul.mubr.bf16.gmra.mrb[0].mxu0 %v593
      %v685 = vpop.f32.mrb[0].mxu0
      %v686 = vadd.f32 0.0, %v685
      %v687 = vpop.f32.mrb[0].mxu0
      %v688 = vadd.f32 0.0, %v687
      %v689 = vpop.f32.mrb[0].mxu0
      %v690 = vadd.f32 0.0, %v689
      %v691 = vpop.f32.mrb[0].mxu0
      %v692 = vadd.f32 0.0, %v691
      %693 = vdwg.mxu0
      %695 = vset.pattern.permute.xlu0 0
      %696 = vperm.xlu0 %695, %v296
      %v697 = vpop.permute.xlu0 %696
      %v699 = vadd.f32 %v643, %v697
      %v700 = vadd.f32 %v645, %v697
      %v701 = vadd.f32 %v686, %v697
      %v702 = vadd.f32 %v688, %v697
      %v703 = vmax.f32 %v699, 0.0
      %v704 = vmax.f32 %v700, 0.0
      %v705 = vmax.f32 %v701, 0.0
      %v706 = vmax.f32 %v702, 0.0
      %708 = vset.pattern.permute.xlu0 0
      %709 = vperm.xlu0 %708, %v297
      %v710 = vpop.permute.xlu0 %709
      %v712 = vadd.f32 %v647, %v710
      %v713 = vadd.f32 %v649, %v710
      %v714 = vadd.f32 %v690, %v710
      %v715 = vadd.f32 %v692, %v710
      %716 = vrot.lane.b32.xlu0 %v703, 17
      %v717 = vpop.permute.xlu0 %716
      %718 = vrot.lane.b32.xlu0 %v704, 17
      %v719 = vpop.permute.xlu0 %718
      %720 = vrot.lane.b32.xlu0 %v705, 17
      %v721 = vpop.permute.xlu0 %720
      %722 = vrot.lane.b32.xlu0 %v706, 17
      %v723 = vpop.permute.xlu0 %722
      %v724 = vsel %vm310, %v721, %v723
      %v725 = vsel %vm310, %v719, %v721
      %v726 = vsel %vm310, %v717, %v719
      %v727 = vsel %vm310, %v723, %v717
      %v728 = vmul.f32 %v727, %v318
      %v729 = vmul.f32 %v726, %v322
      %v730 = vmul.f32 %v725, %v326
      %v731 = vmul.f32 %v724, %v330
      %732 = vrot.lane.b32.xlu0 %v703, 16
      %v733 = vpop.permute.xlu0 %732
      %734 = vrot.lane.b32.xlu0 %v704, 16
      %v735 = vpop.permute.xlu0 %734
      %736 = vrot.lane.b32.xlu0 %v705, 16
      %v737 = vpop.permute.xlu0 %736
      %738 = vrot.lane.b32.xlu0 %v706, 16
      %v739 = vpop.permute.xlu0 %738
      %v740 = vsel %vm343, %v737, %v739
      %v741 = vsel %vm343, %v735, %v737
      %v742 = vsel %vm343, %v733, %v735
      %v743 = vsel %vm343, %v739, %v733
      %v744 = vmul.f32 %v743, %v351
      %v745 = vmul.f32 %v742, %v355
      %v746 = vmul.f32 %v741, %v359
      %v747 = vmul.f32 %v740, %v363
      %748 = vrot.lane.b32.xlu0 %v703, 15
      %v749 = vpop.permute.xlu0 %748
      %750 = vrot.lane.b32.xlu0 %v704, 15
      %v751 = vpop.permute.xlu0 %750
      %752 = vrot.lane.b32.xlu0 %v705, 15
      %v753 = vpop.permute.xlu0 %752
      %754 = vrot.lane.b32.xlu0 %v706, 15
      %v755 = vpop.permute.xlu0 %754
      %v756 = vsel %vm376, %v753, %v755
      %v757 = vsel %vm376, %v751, %v753
      %v758 = vsel %vm376, %v749, %v751
      %v759 = vsel %vm376, %v755, %v749
      %v760 = vmul.f32 %v759, %v384
      %v761 = vmul.f32 %v758, %v388
      %v762 = vmul.f32 %v757, %v392
      %v763 = vmul.f32 %v756, %v396
      %764 = vrot.lane.b32.xlu0 %v703, 1
      %v765 = vpop.permute.xlu0 %764
      %766 = vrot.lane.b32.xlu0 %v704, 1
      %v767 = vpop.permute.xlu0 %766
      %768 = vrot.lane.b32.xlu0 %v705, 1
      %v769 = vpop.permute.xlu0 %768
      %770 = vrot.lane.b32.xlu0 %v706, 1
      %v771 = vpop.permute.xlu0 %770
      %v772 = vsel %vm409, %v769, %v771
      %v773 = vsel %vm409, %v767, %v769
      %v774 = vsel %vm409, %v765, %v767
      %v775 = vsel %vm409, %v771, %v765
      %v776 = vmul.f32 %v775, %v417
      %v777 = vmul.f32 %v774, %v421
      %v778 = vmul.f32 %v773, %v425
      %v779 = vmul.f32 %v772, %v429
      %780 = vrot.lane.b32.xlu0 %v703, 127
      %v781 = vpop.permute.xlu0 %780
      %782 = vrot.lane.b32.xlu0 %v704, 127
      %v783 = vpop.permute.xlu0 %782
      %784 = vrot.lane.b32.xlu0 %v705, 127
      %v785 = vpop.permute.xlu0 %784
      %786 = vrot.lane.b32.xlu0 %v706, 127
      %v787 = vpop.permute.xlu0 %786
      %v788 = vsel %vm442, %v785, %v787
      %v789 = vsel %vm442, %v783, %v785
      %v790 = vsel %vm442, %v781, %v783
      %v791 = vsel %vm442, %v787, %v781
      %v792 = vmul.f32 %v790, %v450
      %v793 = vmul.f32 %v789, %v454
      %v794 = vmul.f32 %v788, %v458
      %v795 = vmul.f32 %v791, %v462
      %796 = vrot.lane.b32.xlu0 %v703, 113
      %v797 = vpop.permute.xlu0 %796
      %798 = vrot.lane.b32.xlu0 %v704, 113
      %v799 = vpop.permute.xlu0 %798
      %800 = vrot.lane.b32.xlu0 %v705, 113
      %v801 = vpop.permute.xlu0 %800
      %802 = vrot.lane.b32.xlu0 %v706, 113
      %v803 = vpop.permute.xlu0 %802
      %v804 = vsel %vm475, %v801, %v803
      %v805 = vsel %vm475, %v799, %v801
      %v806 = vsel %vm475, %v797, %v799
      %v807 = vsel %vm475, %v803, %v797
      %v808 = vmul.f32 %v806, %v483
      %v809 = vmul.f32 %v805, %v487
      %v810 = vmul.f32 %v804, %v491
      %v811 = vmul.f32 %v807, %v495
      %812 = vrot.lane.b32.xlu0 %v703, 112
      %v813 = vpop.permute.xlu0 %812
      %814 = vrot.lane.b32.xlu0 %v704, 112
      %v815 = vpop.permute.xlu0 %814
      %816 = vrot.lane.b32.xlu0 %v705, 112
      %v817 = vpop.permute.xlu0 %816
      %818 = vrot.lane.b32.xlu0 %v706, 112
      %v819 = vpop.permute.xlu0 %818
      %v820 = vsel %vm508, %v817, %v819
      %v821 = vsel %vm508, %v815, %v817
      %v822 = vsel %vm508, %v813, %v815
      %v823 = vsel %vm508, %v819, %v813
      %v824 = vmul.f32 %v822, %v516
      %v825 = vmul.f32 %v821, %v520
      %v826 = vmul.f32 %v820, %v524
      %v827 = vmul.f32 %v823, %v528
      %828 = vrot.lane.b32.xlu0 %v703, 111
      %v829 = vpop.permute.xlu0 %828
      %830 = vrot.lane.b32.xlu0 %v704, 111
      %v831 = vpop.permute.xlu0 %830
      %832 = vrot.lane.b32.xlu0 %v705, 111
      %v833 = vpop.permute.xlu0 %832
      %834 = vrot.lane.b32.xlu0 %v706, 111
      %v835 = vpop.permute.xlu0 %834
      %v836 = vsel %vm541, %v833, %v835
      %v837 = vsel %vm541, %v831, %v833
      %v838 = vsel %vm541, %v829, %v831
      %v839 = vsel %vm541, %v835, %v829
      %v840 = vmul.f32 %v838, %v549
      %v841 = vmul.f32 %v837, %v553
      %v842 = vmul.f32 %v836, %v557
      %v843 = vmul.f32 %v839, %v561
      %v844 = vpack.c.bf16 %v744, %v728
      %v845 = vpack.c.bf16 %v745, %v729
      %v846 = vpack.c.bf16 %v746, %v730
      %v847 = vpack.c.bf16 %v747, %v731
      %v848 = vpack.c.bf16 %v776, %v760
      %v849 = vpack.c.bf16 %v777, %v761
      %v850 = vpack.c.bf16 %v778, %v762
      %v851 = vpack.c.bf16 %v779, %v763
      %v852 = vpack.c.bf16 %v792, %v703
      %v853 = vpack.c.bf16 %v793, %v704
      %v854 = vpack.c.bf16 %v794, %v705
      %v855 = vpack.c.bf16 %v795, %v706
      %v856 = vpack.c.bf16 %v824, %v808
      %v857 = vpack.c.bf16 %v825, %v809
      %v858 = vpack.c.bf16 %v826, %v810
      %v859 = vpack.c.bf16 %v827, %v811
      %v860 = vpack.c.bf16 %v840, %v840
      %v861 = vpack.c.bf16 %v841, %v841
      %v862 = vpack.c.bf16 %v842, %v842
      %v863 = vpack.c.bf16 %v843, %v843
      %v865 = vsel %vm591, %v294, 0
      %v868 = vsel %vm595, %v860, 0
      %v871 = vsel %vm595, %v861, 0
      %v874 = vsel %vm595, %v862, 0
      %v877 = vsel %vm595, %v863, 0
      %879 = vmatprep.subr.bf16.mxu0 %v845
      %880 = vmatpush1.bf16.msra.mxu0 %v844
      %881 = vmatprep.subr.bf16.mxu0 %v849
      %882 = vmatpush1.bf16.msra.mxu0 %v848
      %883 = vmatprep.subr.bf16.mxu0 %v853
      %884 = vmatpush1.bf16.msra.mxu0 %v852
      %885 = vmatprep.subr.bf16.mxu0 %v857
      %886 = vmatpush1.bf16.msra.mxu0 %v856
      %887 = vmatprep.subr.bf16.mxu0 %v871
      %888 = vmatpush1.bf16.msra.mxu0 %v868
      %889 = vmatprep.subr.bf16.mxu0 0
      %890 = vmatpush1.bf16.msra.mxu0 0
      %891 = vmatprep.subr.bf16.mxu0 0
      %892 = vmatpush1.bf16.msra.mxu0 0
      %893 = vmatprep.subr.bf16.mxu0 0
      %894 = vmatpush1.bf16.msra.mxu0 0
      %895 = vmatprep.subr.bf16.mxu0 0
      %896 = vmatpush1.bf16.msra.mxu0 0
      %897 = vmatprep.subr.bf16.mxu0 0
      %898 = vmatpush1.bf16.msra.mxu0 0
      %899 = vmatprep.subr.bf16.mxu0 0
      %900 = vmatpush1.bf16.msra.mxu0 0
      %901 = vmatprep.subr.bf16.mxu0 0
      %902 = vmatpush1.bf16.msra.mxu0 0
      %903 = vmatprep.subr.bf16.mxu0 0
      %904 = vmatpush1.bf16.msra.mxu0 0
      %905 = vmatprep.subr.bf16.mxu0 0
      %906 = vmatpush1.bf16.msra.mxu0 0
      %907 = vmatprep.subr.bf16.mxu0 0
      %908 = vmatpush1.bf16.msra.mxu0 0
      %909 = vmatprep.subr.bf16.mxu0 0
      %910 = vmatpush1.bf16.msra.mxu0 0
      %911 = vmatprep.mubr.bf16.mxu0 0
      %912 = vmatmul.mubr.bf16.gmra.mrb[0].mxu0 %v865
      %v913 = vpop.f32.mrb[0].mxu0
      %v914 = vadd.f32 0.0, %v913
      %v915 = vpop.f32.mrb[0].mxu0
      %v916 = vadd.f32 0.0, %v915
      %v917 = vpop.f32.mrb[0].mxu0
      %v918 = vpop.f32.mrb[0].mxu0
      %919 = vdwg.mxu0
      %920 = vmatprep.subr.bf16.mxu0 %v847
      %921 = vmatpush1.bf16.msra.mxu0 %v846
      %922 = vmatprep.subr.bf16.mxu0 %v851
      %923 = vmatpush1.bf16.msra.mxu0 %v850
      %924 = vmatprep.subr.bf16.mxu0 %v855
      %925 = vmatpush1.bf16.msra.mxu0 %v854
      %926 = vmatprep.subr.bf16.mxu0 %v859
      %927 = vmatpush1.bf16.msra.mxu0 %v858
      %928 = vmatprep.subr.bf16.mxu0 %v877
      %929 = vmatpush1.bf16.msra.mxu0 %v874
      %930 = vmatprep.subr.bf16.mxu0 0
      %931 = vmatpush1.bf16.msra.mxu0 0
      %932 = vmatprep.subr.bf16.mxu0 0
      %933 = vmatpush1.bf16.msra.mxu0 0
      %934 = vmatprep.subr.bf16.mxu0 0
      %935 = vmatpush1.bf16.msra.mxu0 0
      %936 = vmatprep.subr.bf16.mxu0 0
      %937 = vmatpush1.bf16.msra.mxu0 0
      %938 = vmatprep.subr.bf16.mxu0 0
      %939 = vmatpush1.bf16.msra.mxu0 0
      %940 = vmatprep.subr.bf16.mxu0 0
      %941 = vmatpush1.bf16.msra.mxu0 0
      %942 = vmatprep.subr.bf16.mxu0 0
      %943 = vmatpush1.bf16.msra.mxu0 0
      %944 = vmatprep.subr.bf16.mxu0 0
      %945 = vmatpush1.bf16.msra.mxu0 0
      %946 = vmatprep.subr.bf16.mxu0 0
      %947 = vmatpush1.bf16.msra.mxu0 0
      %948 = vmatprep.subr.bf16.mxu0 0
      %949 = vmatpush1.bf16.msra.mxu0 0
      %950 = vmatprep.subr.bf16.mxu0 0
      %951 = vmatpush1.bf16.msra.mxu0 0
      %952 = vmatprep.mubr.bf16.mxu0 0
      %953 = vmatmul.mubr.bf16.gmra.mrb[0].mxu0 %v865
      %v954 = vpop.f32.mrb[0].mxu0
      %v955 = vadd.f32 0.0, %v954
      %v956 = vpop.f32.mrb[0].mxu0
      %v957 = vadd.f32 0.0, %v956
      %v958 = vpop.f32.mrb[0].mxu0
      %v959 = vpop.f32.mrb[0].mxu0
      %960 = vdwg.mxu0
      %v961 = vadd.f32 %v712, %v914
      %v962 = vadd.f32 %v713, %v916
      %v963 = vadd.f32 %v714, %v955
      %v964 = vadd.f32 %v715, %v957
      %965 = vrot.lane.b32.xlu0 %v961, 17
      %v966 = vpop.permute.xlu0 %965
      %967 = vrot.lane.b32.xlu0 %v962, 17
      %v968 = vpop.permute.xlu0 %967
      %969 = vrot.lane.b32.xlu0 %v963, 17
      %v970 = vpop.permute.xlu0 %969
      %971 = vrot.lane.b32.xlu0 %v964, 17
      %v972 = vpop.permute.xlu0 %971
      %v973 = vsel %vm310, %v970, %v972
      %v974 = vsel %vm310, %v968, %v970
      %v975 = vsel %vm310, %v966, %v968
      %v976 = vsel %vm310, %v972, %v966
      %v977 = vmul.f32 %v976, %v318
      %v978 = vmul.f32 %v975, %v322
      %v979 = vmul.f32 %v974, %v326
      %v980 = vmul.f32 %v973, %v330
      %981 = vrot.lane.b32.xlu0 %v961, 16
      %v982 = vpop.permute.xlu0 %981
      %983 = vrot.lane.b32.xlu0 %v962, 16
      %v984 = vpop.permute.xlu0 %983
      %985 = vrot.lane.b32.xlu0 %v963, 16
      %v986 = vpop.permute.xlu0 %985
      %987 = vrot.lane.b32.xlu0 %v964, 16
      %v988 = vpop.permute.xlu0 %987
      %v989 = vsel %vm343, %v986, %v988
      %v990 = vsel %vm343, %v984, %v986
      %v991 = vsel %vm343, %v982, %v984
      %v992 = vsel %vm343, %v988, %v982
      %v993 = vmul.f32 %v992, %v351
      %v994 = vmul.f32 %v991, %v355
      %v995 = vmul.f32 %v990, %v359
      %v996 = vmul.f32 %v989, %v363
      %997 = vrot.lane.b32.xlu0 %v961, 15
      %v998 = vpop.permute.xlu0 %997
      %999 = vrot.lane.b32.xlu0 %v962, 15
      %v1000 = vpop.permute.xlu0 %999
      %1001 = vrot.lane.b32.xlu0 %v963, 15
      %v1002 = vpop.permute.xlu0 %1001
      %1003 = vrot.lane.b32.xlu0 %v964, 15
      %v1004 = vpop.permute.xlu0 %1003
      %v1005 = vsel %vm376, %v1002, %v1004
      %v1006 = vsel %vm376, %v1000, %v1002
      %v1007 = vsel %vm376, %v998, %v1000
      %v1008 = vsel %vm376, %v1004, %v998
      %v1009 = vmul.f32 %v1008, %v384
      %v1010 = vmul.f32 %v1007, %v388
      %v1011 = vmul.f32 %v1006, %v392
      %v1012 = vmul.f32 %v1005, %v396
      %1013 = vrot.lane.b32.xlu0 %v961, 1
      %v1014 = vpop.permute.xlu0 %1013
      %1015 = vrot.lane.b32.xlu0 %v962, 1
      %v1016 = vpop.permute.xlu0 %1015
      %1017 = vrot.lane.b32.xlu0 %v963, 1
      %v1018 = vpop.permute.xlu0 %1017
      %1019 = vrot.lane.b32.xlu0 %v964, 1
      %v1020 = vpop.permute.xlu0 %1019
      %v1021 = vsel %vm409, %v1018, %v1020
      %v1022 = vsel %vm409, %v1016, %v1018
      %v1023 = vsel %vm409, %v1014, %v1016
      %v1024 = vsel %vm409, %v1020, %v1014
      %v1025 = vmul.f32 %v1024, %v417
      %v1026 = vmul.f32 %v1023, %v421
      %v1027 = vmul.f32 %v1022, %v425
      %v1028 = vmul.f32 %v1021, %v429
      %1029 = vrot.lane.b32.xlu0 %v961, 127
      %v1030 = vpop.permute.xlu0 %1029
      %1031 = vrot.lane.b32.xlu0 %v962, 127
      %v1032 = vpop.permute.xlu0 %1031
      %1033 = vrot.lane.b32.xlu0 %v963, 127
      %v1034 = vpop.permute.xlu0 %1033
      %1035 = vrot.lane.b32.xlu0 %v964, 127
      %v1036 = vpop.permute.xlu0 %1035
      %v1037 = vsel %vm442, %v1034, %v1036
      %v1038 = vsel %vm442, %v1032, %v1034
      %v1039 = vsel %vm442, %v1030, %v1032
      %v1040 = vsel %vm442, %v1036, %v1030
      %v1041 = vmul.f32 %v1039, %v450
      %v1042 = vmul.f32 %v1038, %v454
      %v1043 = vmul.f32 %v1037, %v458
      %v1044 = vmul.f32 %v1040, %v462
      %1045 = vrot.lane.b32.xlu0 %v961, 113
      %v1046 = vpop.permute.xlu0 %1045
      %1047 = vrot.lane.b32.xlu0 %v962, 113
      %v1048 = vpop.permute.xlu0 %1047
      %1049 = vrot.lane.b32.xlu0 %v963, 113
      %v1050 = vpop.permute.xlu0 %1049
      %1051 = vrot.lane.b32.xlu0 %v964, 113
      %v1052 = vpop.permute.xlu0 %1051
      %v1053 = vsel %vm475, %v1050, %v1052
      %v1054 = vsel %vm475, %v1048, %v1050
      %v1055 = vsel %vm475, %v1046, %v1048
      %v1056 = vsel %vm475, %v1052, %v1046
      %v1057 = vmul.f32 %v1055, %v483
      %v1058 = vmul.f32 %v1054, %v487
      %v1059 = vmul.f32 %v1053, %v491
      %v1060 = vmul.f32 %v1056, %v495
      %1061 = vrot.lane.b32.xlu0 %v961, 112
      %v1062 = vpop.permute.xlu0 %1061
      %1063 = vrot.lane.b32.xlu0 %v962, 112
      %v1064 = vpop.permute.xlu0 %1063
      %1065 = vrot.lane.b32.xlu0 %v963, 112
      %v1066 = vpop.permute.xlu0 %1065
      %1067 = vrot.lane.b32.xlu0 %v964, 112
      %v1068 = vpop.permute.xlu0 %1067
      %v1069 = vsel %vm508, %v1066, %v1068
      %v1070 = vsel %vm508, %v1064, %v1066
      %v1071 = vsel %vm508, %v1062, %v1064
      %v1072 = vsel %vm508, %v1068, %v1062
      %v1073 = vmul.f32 %v1071, %v516
      %v1074 = vmul.f32 %v1070, %v520
      %v1075 = vmul.f32 %v1069, %v524
      %v1076 = vmul.f32 %v1072, %v528
      %1077 = vrot.lane.b32.xlu0 %v961, 111
      %v1078 = vpop.permute.xlu0 %1077
      %1079 = vrot.lane.b32.xlu0 %v962, 111
      %v1080 = vpop.permute.xlu0 %1079
      %1081 = vrot.lane.b32.xlu0 %v963, 111
      %v1082 = vpop.permute.xlu0 %1081
      %1083 = vrot.lane.b32.xlu0 %v964, 111
      %v1084 = vpop.permute.xlu0 %1083
      %v1085 = vsel %vm541, %v1082, %v1084
      %v1086 = vsel %vm541, %v1080, %v1082
      %v1087 = vsel %vm541, %v1078, %v1080
      %v1088 = vsel %vm541, %v1084, %v1078
      %v1089 = vmul.f32 %v1087, %v549
      %v1090 = vmul.f32 %v1086, %v553
      %v1091 = vmul.f32 %v1085, %v557
      %v1092 = vmul.f32 %v1088, %v561
      %v1093 = vpack.c.bf16 %v993, %v977
      %v1094 = vpack.c.bf16 %v994, %v978
      %v1095 = vpack.c.bf16 %v995, %v979
      %v1096 = vpack.c.bf16 %v996, %v980
      %v1097 = vpack.c.bf16 %v1025, %v1009
      %v1098 = vpack.c.bf16 %v1026, %v1010
      %v1099 = vpack.c.bf16 %v1027, %v1011
      %v1100 = vpack.c.bf16 %v1028, %v1012
      %v1101 = vpack.c.bf16 %v1041, %v961
      %v1102 = vpack.c.bf16 %v1042, %v962
      %v1103 = vpack.c.bf16 %v1043, %v963
      %v1104 = vpack.c.bf16 %v1044, %v964
      %v1105 = vpack.c.bf16 %v1073, %v1057
      %v1106 = vpack.c.bf16 %v1074, %v1058
      %v1107 = vpack.c.bf16 %v1075, %v1059
      %v1108 = vpack.c.bf16 %v1076, %v1060
      %v1109 = vpack.c.bf16 %v1089, %v1089
      %v1110 = vpack.c.bf16 %v1090, %v1090
      %v1111 = vpack.c.bf16 %v1091, %v1091
      %v1112 = vpack.c.bf16 %v1092, %v1092
      %1114 = vset.pattern.permute.xlu0 0
      %1115 = vperm.xlu0 %1114, %v298
      %v1116 = vpop.permute.xlu0 %1115
      %v1119 = vsel %vm591, %v295, 0
      %v1122 = vsel %vm595, %v1109, 0
      %v1125 = vsel %vm595, %v1110, 0
      %v1128 = vsel %vm595, %v1111, 0
      %v1131 = vsel %vm595, %v1112, 0
      %1133 = vmatprep.subr.bf16.mxu0 %v1094
      %1134 = vmatpush1.bf16.msra.mxu0 %v1093
      %1135 = vmatprep.subr.bf16.mxu0 %v1098
      %1136 = vmatpush1.bf16.msra.mxu0 %v1097
      %1137 = vmatprep.subr.bf16.mxu0 %v1102
      %1138 = vmatpush1.bf16.msra.mxu0 %v1101
      %1139 = vmatprep.subr.bf16.mxu0 %v1106
      %1140 = vmatpush1.bf16.msra.mxu0 %v1105
      %1141 = vmatprep.subr.bf16.mxu0 %v1125
      %1142 = vmatpush1.bf16.msra.mxu0 %v1122
      %1143 = vmatprep.subr.bf16.mxu0 0
      %1144 = vmatpush1.bf16.msra.mxu0 0
      %1145 = vmatprep.subr.bf16.mxu0 0
      %1146 = vmatpush1.bf16.msra.mxu0 0
      %1147 = vmatprep.subr.bf16.mxu0 0
      %1148 = vmatpush1.bf16.msra.mxu0 0
      %1149 = vmatprep.subr.bf16.mxu0 0
      %1150 = vmatpush1.bf16.msra.mxu0 0
      %1151 = vmatprep.subr.bf16.mxu0 0
      %1152 = vmatpush1.bf16.msra.mxu0 0
      %1153 = vmatprep.subr.bf16.mxu0 0
      %1154 = vmatpush1.bf16.msra.mxu0 0
      %1155 = vmatprep.subr.bf16.mxu0 0
      %1156 = vmatpush1.bf16.msra.mxu0 0
      %1157 = vmatprep.subr.bf16.mxu0 0
      %1158 = vmatpush1.bf16.msra.mxu0 0
      %1159 = vmatprep.subr.bf16.mxu0 0
      %1160 = vmatpush1.bf16.msra.mxu0 0
      %1161 = vmatprep.subr.bf16.mxu0 0
      %1162 = vmatpush1.bf16.msra.mxu0 0
      %1163 = vmatprep.subr.bf16.mxu0 0
      %1164 = vmatpush1.bf16.msra.mxu0 0
      %1165 = vmatprep.mubr.bf16.mxu0 0
      %1166 = vmatmul.mubr.bf16.gmra.mrb[0].mxu0 %v1119
      %v1167 = vpop.f32.mrb[0].mxu0
      %v1168 = vadd.f32 %v1116, %v1167
      %v1169 = vpop.f32.mrb[0].mxu0
      %v1170 = vadd.f32 %v1116, %v1169
      %v1171 = vpop.f32.mrb[0].mxu0
      %v1172 = vpop.f32.mrb[0].mxu0
      %1173 = vdwg.mxu0
      %1174 = vmatprep.subr.bf16.mxu0 %v1096
      %1175 = vmatpush1.bf16.msra.mxu0 %v1095
      %1176 = vmatprep.subr.bf16.mxu0 %v1100
      %1177 = vmatpush1.bf16.msra.mxu0 %v1099
      %1178 = vmatprep.subr.bf16.mxu0 %v1104
      %1179 = vmatpush1.bf16.msra.mxu0 %v1103
      %1180 = vmatprep.subr.bf16.mxu0 %v1108
      %1181 = vmatpush1.bf16.msra.mxu0 %v1107
      %1182 = vmatprep.subr.bf16.mxu0 %v1131
      %1183 = vmatpush1.bf16.msra.mxu0 %v1128
      %1184 = vmatprep.subr.bf16.mxu0 0
      %1185 = vmatpush1.bf16.msra.mxu0 0
      %1186 = vmatprep.subr.bf16.mxu0 0
      %1187 = vmatpush1.bf16.msra.mxu0 0
      %1188 = vmatprep.subr.bf16.mxu0 0
      %1189 = vmatpush1.bf16.msra.mxu0 0
      %1190 = vmatprep.subr.bf16.mxu0 0
      %1191 = vmatpush1.bf16.msra.mxu0 0
      %1192 = vmatprep.subr.bf16.mxu0 0
      %1193 = vmatpush1.bf16.msra.mxu0 0
      %1194 = vmatprep.subr.bf16.mxu0 0
      %1195 = vmatpush1.bf16.msra.mxu0 0
      %1196 = vmatprep.subr.bf16.mxu0 0
      %1197 = vmatpush1.bf16.msra.mxu0 0
      %1198 = vmatprep.subr.bf16.mxu0 0
      %1199 = vmatpush1.bf16.msra.mxu0 0
      %1200 = vmatprep.subr.bf16.mxu0 0
      %1201 = vmatpush1.bf16.msra.mxu0 0
      %1202 = vmatprep.subr.bf16.mxu0 0
      %1203 = vmatpush1.bf16.msra.mxu0 0
      %1204 = vmatprep.subr.bf16.mxu0 0
      %1205 = vmatpush1.bf16.msra.mxu0 0
      %1206 = vmatprep.mubr.bf16.mxu0 0
      %1207 = vmatmul.mubr.bf16.gmra.mrb[0].mxu0 %v1119
      %v1208 = vpop.f32.mrb[0].mxu0
      %v1209 = vadd.f32 %v1116, %v1208
      %v1210 = vpop.f32.mrb[0].mxu0
      %v1211 = vadd.f32 %v1116, %v1210
      %v1212 = vpop.f32.mrb[0].mxu0
      %v1213 = vpop.f32.mrb[0].mxu0
      %1214 = vdwg.mxu0
      %v1215 = vmax.f32 %v1168, 0.0
      %v1216 = vmax.f32 %v1170, 0.0
      %v1217 = vmax.f32 %v1209, 0.0
      %v1218 = vmax.f32 %v1211, 0.0
      %v1219 = vld [vmem:[%s4] sm:$0xf]
      %v1220 = vpack.c.bf16 %v1215, %v1215
      %v1221 = vpack.c.bf16 %v1216, %v1216
      %v1222 = vpack.c.bf16 %v1217, %v1217
      %v1223 = vpack.c.bf16 %v1218, %v1218
      %1225 = vset.pattern.permute.xlu0 0
      %1226 = vperm.xlu0 %1225, %v299
      %v1227 = vpop.permute.xlu0 %1226
      %vm1229 = vcmask 64512
      %v1231 = vsel %vm1229, %v1219, 0
      %v1234 = vsel %vm595, %v1220, 0
      %v1237 = vsel %vm595, %v1221, 0
      %v1240 = vsel %vm595, %v1222, 0
      %v1243 = vsel %vm595, %v1223, 0
      %1245 = vmatprep.subr.bf16.mxu0 %v1237
      %1246 = vmatpush1.bf16.msra.mxu0 %v1234
      %1247 = vmatprep.subr.bf16.mxu0 0
      %1248 = vmatpush1.bf16.msra.mxu0 0
      %1249 = vmatprep.subr.bf16.mxu0 0
      %1250 = vmatpush1.bf16.msra.mxu0 0
      %1251 = vmatprep.subr.bf16.mxu0 0
      %1252 = vmatpush1.bf16.msra.mxu0 0
      %1253 = vmatprep.subr.bf16.mxu0 0
      %1254 = vmatpush1.bf16.msra.mxu0 0
      %1255 = vmatprep.subr.bf16.mxu0 0
      %1256 = vmatpush1.bf16.msra.mxu0 0
      %1257 = vmatprep.subr.bf16.mxu0 0
      %1258 = vmatpush1.bf16.msra.mxu0 0
      %1259 = vmatprep.subr.bf16.mxu0 0
      %1260 = vmatpush1.bf16.msra.mxu0 0
      %1261 = vmatprep.subr.bf16.mxu0 0
      %1262 = vmatpush1.bf16.msra.mxu0 0
      %1263 = vmatprep.subr.bf16.mxu0 0
      %1264 = vmatpush1.bf16.msra.mxu0 0
      %1265 = vmatprep.subr.bf16.mxu0 0
      %1266 = vmatpush1.bf16.msra.mxu0 0
      %1267 = vmatprep.subr.bf16.mxu0 0
      %1268 = vmatpush1.bf16.msra.mxu0 0
      %1269 = vmatprep.subr.bf16.mxu0 0
      %1270 = vmatpush1.bf16.msra.mxu0 0
      %1271 = vmatprep.subr.bf16.mxu0 0
      %1272 = vmatpush1.bf16.msra.mxu0 0
      %1273 = vmatprep.subr.bf16.mxu0 0
      %1274 = vmatpush1.bf16.msra.mxu0 0
      %1275 = vmatprep.subr.bf16.mxu0 0
      %1276 = vmatpush1.bf16.msra.mxu0 0
      %1277 = vmatprep.mubr.bf16.mxu0 0
      %1278 = vmatmul.mubr.bf16.gmra.mrb[0].mxu0 %v1231
      %v1279 = vpop.f32.mrb[0].mxu0
      %v1280 = vadd.f32 %v1227, %v1279
      %v1281 = vpop.f32.mrb[0].mxu0
      %v1282 = vadd.f32 %v1227, %v1281
      %v1283 = vpop.f32.mrb[0].mxu0
      %v1284 = vpop.f32.mrb[0].mxu0
      %1285 = vdwg.mxu0
      %1286 = vmatprep.subr.bf16.mxu0 %v1243
      %1287 = vmatpush1.bf16.msra.mxu0 %v1240
      %1288 = vmatprep.subr.bf16.mxu0 0
      %1289 = vmatpush1.bf16.msra.mxu0 0
      %1290 = vmatprep.subr.bf16.mxu0 0
      %1291 = vmatpush1.bf16.msra.mxu0 0
      %1292 = vmatprep.subr.bf16.mxu0 0
      %1293 = vmatpush1.bf16.msra.mxu0 0
      %1294 = vmatprep.subr.bf16.mxu0 0
      %1295 = vmatpush1.bf16.msra.mxu0 0
      %1296 = vmatprep.subr.bf16.mxu0 0
      %1297 = vmatpush1.bf16.msra.mxu0 0
      %1298 = vmatprep.subr.bf16.mxu0 0
      %1299 = vmatpush1.bf16.msra.mxu0 0
      %1300 = vmatprep.subr.bf16.mxu0 0
      %1301 = vmatpush1.bf16.msra.mxu0 0
      %1302 = vmatprep.subr.bf16.mxu0 0
      %1303 = vmatpush1.bf16.msra.mxu0 0
      %1304 = vmatprep.subr.bf16.mxu0 0
      %1305 = vmatpush1.bf16.msra.mxu0 0
      %1306 = vmatprep.subr.bf16.mxu0 0
      %1307 = vmatpush1.bf16.msra.mxu0 0
      %1308 = vmatprep.subr.bf16.mxu0 0
      %1309 = vmatpush1.bf16.msra.mxu0 0
      %1310 = vmatprep.subr.bf16.mxu0 0
      %1311 = vmatpush1.bf16.msra.mxu0 0
      %1312 = vmatprep.subr.bf16.mxu0 0
      %1313 = vmatpush1.bf16.msra.mxu0 0
      %1314 = vmatprep.subr.bf16.mxu0 0
      %1315 = vmatpush1.bf16.msra.mxu0 0
      %1316 = vmatprep.subr.bf16.mxu0 0
      %1317 = vmatpush1.bf16.msra.mxu0 0
      %1318 = vmatprep.mubr.bf16.mxu0 0
      %1319 = vmatmul.mubr.bf16.gmra.mrb[0].mxu0 %v1231
      %v1320 = vpop.f32.mrb[0].mxu0
      %v1321 = vadd.f32 %v1227, %v1320
      %v1322 = vpop.f32.mrb[0].mxu0
      %v1323 = vadd.f32 %v1227, %v1322
      %v1324 = vpop.f32.mrb[0].mxu0
      %v1325 = vpop.f32.mrb[0].mxu0
      %1326 = vdwg.mxu0
      %v1327 = vxor.u32 %v1280, 2147483648
      %v1328 = vxor.u32 %v1282, 2147483648
      %v1329 = vxor.u32 %v1321, 2147483648
      %v1330 = vxor.u32 %v1323, 2147483648
      %v1331 = vmul.f32 %v1327, 1.442695
      %v1332 = vpow.pop %v1331
      %v1333 = vmul.f32 %v1328, 1.442695
      %v1334 = vpow.pop %v1333
      %v1335 = vmul.f32 %v1329, 1.442695
      %v1336 = vpow.pop %v1335
      %v1337 = vmul.f32 %v1330, 1.442695
      %v1338 = vpow.pop %v1337
      %v1339 = vadd.f32 %v1332, 1.0
      %v1340 = vadd.f32 %v1334, 1.0
      %v1341 = vadd.f32 %v1336, 1.0
      %v1342 = vadd.f32 %v1338, 1.0
      %v1343 = vrcp.pop %v1339
      %v1344 = vmul.f32 1.0, %v1343
      %v1345 = vrcp.pop %v1340
      %v1346 = vmul.f32 1.0, %v1345
      %v1347 = vrcp.pop %v1341
      %v1348 = vmul.f32 1.0, %v1347
      %v1349 = vrcp.pop %v1342
      %v1350 = vmul.f32 1.0, %v1349
      %v1351 = vmul.f32 %v1344, %v961
      %v1352 = vmul.f32 %v1346, %v962
      %v1353 = vmul.f32 %v1348, %v963
      %v1354 = vmul.f32 %v1350, %v964
      %v1355 = vadd.f32 %v1351, %v288
      %v1356 = vadd.f32 %v1352, %v289
      %v1357 = vadd.f32 %v1353, %v290
      %v1358 = vadd.f32 %v1354, %v291
      %s1359 = scalar_lea.vmem %s2, 16
      %v1360 = vld [vmem:[%s1359] sm:$0xf]
      %v1361 = vld [vmem:[%s1359 + $0x4] sm:$0xf]
      %v1362 = vld [vmem:[%s1359 + $0x8] sm:$0xf]
      %v1363 = vld [vmem:[%s1359 + $0xc] sm:$0xf]
      %s1364 = scalar_lea.vmem %s3, 32
      %v1365 = vld [vmem:[%s1364] sm:$0xff]
      %v1366 = vld [vmem:[%s1364 + $0x8] sm:$0xff]
      %v1367 = vld [vmem:[%s1364 + $0x10] sm:$0xff]
      %v1368 = vld [vmem:[%s1364 + $0x18] sm:$0xff]
      %1369 = vrot.lane.b32.xlu0 %v1355, 17
      %v1370 = vpop.permute.xlu0 %1369
      %1371 = vrot.lane.b32.xlu0 %v1356, 17
      %v1372 = vpop.permute.xlu0 %1371
      %1373 = vrot.lane.b32.xlu0 %v1357, 17
      %v1374 = vpop.permute.xlu0 %1373
      %1375 = vrot.lane.b32.xlu0 %v1358, 17
      %v1376 = vpop.permute.xlu0 %1375
      %v1377 = vsel %vm310, %v1374, %v1376
      %v1378 = vsel %vm310, %v1372, %v1374
      %v1379 = vsel %vm310, %v1370, %v1372
      %v1380 = vsel %vm310, %v1376, %v1370
      %v1381 = vmul.f32 %v1380, %v318
      %v1382 = vmul.f32 %v1379, %v322
      %v1383 = vmul.f32 %v1378, %v326
      %v1384 = vmul.f32 %v1377, %v330
      %1385 = vrot.lane.b32.xlu0 %v1355, 16
      %v1386 = vpop.permute.xlu0 %1385
      %1387 = vrot.lane.b32.xlu0 %v1356, 16
      %v1388 = vpop.permute.xlu0 %1387
      %1389 = vrot.lane.b32.xlu0 %v1357, 16
      %v1390 = vpop.permute.xlu0 %1389
      %1391 = vrot.lane.b32.xlu0 %v1358, 16
      %v1392 = vpop.permute.xlu0 %1391
      %v1393 = vsel %vm343, %v1390, %v1392
      %v1394 = vsel %vm343, %v1388, %v1390
      %v1395 = vsel %vm343, %v1386, %v1388
      %v1396 = vsel %vm343, %v1392, %v1386
      %v1397 = vmul.f32 %v1396, %v351
      %v1398 = vmul.f32 %v1395, %v355
      %v1399 = vmul.f32 %v1394, %v359
      %v1400 = vmul.f32 %v1393, %v363
      %1401 = vrot.lane.b32.xlu0 %v1355, 15
      %v1402 = vpop.permute.xlu0 %1401
      %1403 = vrot.lane.b32.xlu0 %v1356, 15
      %v1404 = vpop.permute.xlu0 %1403
      %1405 = vrot.lane.b32.xlu0 %v1357, 15
      %v1406 = vpop.permute.xlu0 %1405
      %1407 = vrot.lane.b32.xlu0 %v1358, 15
      %v1408 = vpop.permute.xlu0 %1407
      %v1409 = vsel %vm376, %v1406, %v1408
      %v1410 = vsel %vm376, %v1404, %v1406
      %v1411 = vsel %vm376, %v1402, %v1404
      %v1412 = vsel %vm376, %v1408, %v1402
      %v1413 = vmul.f32 %v1412, %v384
      %v1414 = vmul.f32 %v1411, %v388
      %v1415 = vmul.f32 %v1410, %v392
      %v1416 = vmul.f32 %v1409, %v396
      %1417 = vrot.lane.b32.xlu0 %v1355, 1
      %v1418 = vpop.permute.xlu0 %1417
      %1419 = vrot.lane.b32.xlu0 %v1356, 1
      %v1420 = vpop.permute.xlu0 %1419
      %1421 = vrot.lane.b32.xlu0 %v1357, 1
      %v1422 = vpop.permute.xlu0 %1421
      %1423 = vrot.lane.b32.xlu0 %v1358, 1
      %v1424 = vpop.permute.xlu0 %1423
      %v1425 = vsel %vm409, %v1422, %v1424
      %v1426 = vsel %vm409, %v1420, %v1422
      %v1427 = vsel %vm409, %v1418, %v1420
      %v1428 = vsel %vm409, %v1424, %v1418
      %v1429 = vmul.f32 %v1428, %v417
      %v1430 = vmul.f32 %v1427, %v421
      %v1431 = vmul.f32 %v1426, %v425
      %v1432 = vmul.f32 %v1425, %v429
      %1433 = vrot.lane.b32.xlu0 %v1355, 127
      %v1434 = vpop.permute.xlu0 %1433
      %1435 = vrot.lane.b32.xlu0 %v1356, 127
      %v1436 = vpop.permute.xlu0 %1435
      %1437 = vrot.lane.b32.xlu0 %v1357, 127
      %v1438 = vpop.permute.xlu0 %1437
      %1439 = vrot.lane.b32.xlu0 %v1358, 127
      %v1440 = vpop.permute.xlu0 %1439
      %v1441 = vsel %vm442, %v1438, %v1440
      %v1442 = vsel %vm442, %v1436, %v1438
      %v1443 = vsel %vm442, %v1434, %v1436
      %v1444 = vsel %vm442, %v1440, %v1434
      %v1445 = vmul.f32 %v1443, %v450
      %v1446 = vmul.f32 %v1442, %v454
      %v1447 = vmul.f32 %v1441, %v458
      %v1448 = vmul.f32 %v1444, %v462
      %1449 = vrot.lane.b32.xlu0 %v1355, 113
      %v1450 = vpop.permute.xlu0 %1449
      %1451 = vrot.lane.b32.xlu0 %v1356, 113
      %v1452 = vpop.permute.xlu0 %1451
      %1453 = vrot.lane.b32.xlu0 %v1357, 113
      %v1454 = vpop.permute.xlu0 %1453
      %1455 = vrot.lane.b32.xlu0 %v1358, 113
      %v1456 = vpop.permute.xlu0 %1455
      %v1457 = vsel %vm475, %v1454, %v1456
      %v1458 = vsel %vm475, %v1452, %v1454
      %v1459 = vsel %vm475, %v1450, %v1452
      %v1460 = vsel %vm475, %v1456, %v1450
      %v1461 = vmul.f32 %v1459, %v483
      %v1462 = vmul.f32 %v1458, %v487
      %v1463 = vmul.f32 %v1457, %v491
      %v1464 = vmul.f32 %v1460, %v495
      %1465 = vrot.lane.b32.xlu0 %v1355, 112
      %v1466 = vpop.permute.xlu0 %1465
      %1467 = vrot.lane.b32.xlu0 %v1356, 112
      %v1468 = vpop.permute.xlu0 %1467
      %1469 = vrot.lane.b32.xlu0 %v1357, 112
      %v1470 = vpop.permute.xlu0 %1469
      %1471 = vrot.lane.b32.xlu0 %v1358, 112
      %v1472 = vpop.permute.xlu0 %1471
      %v1473 = vsel %vm508, %v1470, %v1472
      %v1474 = vsel %vm508, %v1468, %v1470
      %v1475 = vsel %vm508, %v1466, %v1468
      %v1476 = vsel %vm508, %v1472, %v1466
      %v1477 = vmul.f32 %v1475, %v516
      %v1478 = vmul.f32 %v1474, %v520
      %v1479 = vmul.f32 %v1473, %v524
      %v1480 = vmul.f32 %v1476, %v528
      %1481 = vrot.lane.b32.xlu0 %v1355, 111
      %v1482 = vpop.permute.xlu0 %1481
      %1483 = vrot.lane.b32.xlu0 %v1356, 111
      %v1484 = vpop.permute.xlu0 %1483
      %1485 = vrot.lane.b32.xlu0 %v1357, 111
      %v1486 = vpop.permute.xlu0 %1485
      %1487 = vrot.lane.b32.xlu0 %v1358, 111
      %v1488 = vpop.permute.xlu0 %1487
      %v1489 = vsel %vm541, %v1486, %v1488
      %v1490 = vsel %vm541, %v1484, %v1486
      %v1491 = vsel %vm541, %v1482, %v1484
      %v1492 = vsel %vm541, %v1488, %v1482
      %v1493 = vmul.f32 %v1491, %v549
      %v1494 = vmul.f32 %v1490, %v553
      %v1495 = vmul.f32 %v1489, %v557
      %v1496 = vmul.f32 %v1492, %v561
      %v1497 = vpack.c.bf16 %v1397, %v1381
      %v1498 = vpack.c.bf16 %v1398, %v1382
      %v1499 = vpack.c.bf16 %v1399, %v1383
      %v1500 = vpack.c.bf16 %v1400, %v1384
      %v1501 = vpack.c.bf16 %v1429, %v1413
      %v1502 = vpack.c.bf16 %v1430, %v1414
      %v1503 = vpack.c.bf16 %v1431, %v1415
      %v1504 = vpack.c.bf16 %v1432, %v1416
      %v1505 = vpack.c.bf16 %v1445, %v1355
      %v1506 = vpack.c.bf16 %v1446, %v1356
      %v1507 = vpack.c.bf16 %v1447, %v1357
      %v1508 = vpack.c.bf16 %v1448, %v1358
      %v1509 = vpack.c.bf16 %v1477, %v1461
      %v1510 = vpack.c.bf16 %v1478, %v1462
      %v1511 = vpack.c.bf16 %v1479, %v1463
      %v1512 = vpack.c.bf16 %v1480, %v1464
      %v1513 = vpack.c.bf16 %v1493, %v1493
      %v1514 = vpack.c.bf16 %v1494, %v1494
      %v1515 = vpack.c.bf16 %v1495, %v1495
      %v1516 = vpack.c.bf16 %v1496, %v1496
      %v1519 = vunpack.c.l.b16 %v1360
      %v1520 = vunpack.c.l.b16 %v1361
      %v1521 = vpack.c.b16 %v1520, %v1519
      %v1523 = vsel %vm591, %v1521, 0
      %v1526 = vsel %vm595, %v1513, 0
      %v1529 = vsel %vm595, %v1514, 0
      %v1532 = vsel %vm595, %v1515, 0
      %v1535 = vsel %vm595, %v1516, 0
      %1537 = vmatprep.subr.bf16.mxu0 %v1498
      %1538 = vmatpush1.bf16.msra.mxu0 %v1497
      %1539 = vmatprep.subr.bf16.mxu0 %v1502
      %1540 = vmatpush1.bf16.msra.mxu0 %v1501
      %1541 = vmatprep.subr.bf16.mxu0 %v1506
      %1542 = vmatpush1.bf16.msra.mxu0 %v1505
      %1543 = vmatprep.subr.bf16.mxu0 %v1510
      %1544 = vmatpush1.bf16.msra.mxu0 %v1509
      %1545 = vmatprep.subr.bf16.mxu0 %v1529
      %1546 = vmatpush1.bf16.msra.mxu0 %v1526
      %1547 = vmatprep.subr.bf16.mxu0 0
      %1548 = vmatpush1.bf16.msra.mxu0 0
      %1549 = vmatprep.subr.bf16.mxu0 0
      %1550 = vmatpush1.bf16.msra.mxu0 0
      %1551 = vmatprep.subr.bf16.mxu0 0
      %1552 = vmatpush1.bf16.msra.mxu0 0
      %1553 = vmatprep.subr.bf16.mxu0 0
      %1554 = vmatpush1.bf16.msra.mxu0 0
      %1555 = vmatprep.subr.bf16.mxu0 0
      %1556 = vmatpush1.bf16.msra.mxu0 0
      %1557 = vmatprep.subr.bf16.mxu0 0
      %1558 = vmatpush1.bf16.msra.mxu0 0
      %1559 = vmatprep.subr.bf16.mxu0 0
      %1560 = vmatpush1.bf16.msra.mxu0 0
      %1561 = vmatprep.subr.bf16.mxu0 0
      %1562 = vmatpush1.bf16.msra.mxu0 0
      %1563 = vmatprep.subr.bf16.mxu0 0
      %1564 = vmatpush1.bf16.msra.mxu0 0
      %1565 = vmatprep.subr.bf16.mxu0 0
      %1566 = vmatpush1.bf16.msra.mxu0 0
      %1567 = vmatprep.subr.bf16.mxu0 0
      %1568 = vmatpush1.bf16.msra.mxu0 0
      %1569 = vmatprep.mubr.bf16.mxu0 0
      %1570 = vmatmul.mubr.bf16.gmra.mrb[0].mxu0 %v1523
      %v1571 = vpop.f32.mrb[0].mxu0
      %v1572 = vadd.f32 0.0, %v1571
      %v1573 = vpop.f32.mrb[0].mxu0
      %v1574 = vadd.f32 0.0, %v1573
      %v1575 = vpop.f32.mrb[0].mxu0
      %v1576 = vadd.f32 0.0, %v1575
      %v1577 = vpop.f32.mrb[0].mxu0
      %v1578 = vadd.f32 0.0, %v1577
      %1579 = vdwg.mxu0
      %1580 = vmatprep.subr.bf16.mxu0 %v1500
      %1581 = vmatpush1.bf16.msra.mxu0 %v1499
      %1582 = vmatprep.subr.bf16.mxu0 %v1504
      %1583 = vmatpush1.bf16.msra.mxu0 %v1503
      %1584 = vmatprep.subr.bf16.mxu0 %v1508
      %1585 = vmatpush1.bf16.msra.mxu0 %v1507
      %1586 = vmatprep.subr.bf16.mxu0 %v1512
      %1587 = vmatpush1.bf16.msra.mxu0 %v1511
      %1588 = vmatprep.subr.bf16.mxu0 %v1535
      %1589 = vmatpush1.bf16.msra.mxu0 %v1532
      %1590 = vmatprep.subr.bf16.mxu0 0
      %1591 = vmatpush1.bf16.msra.mxu0 0
      %1592 = vmatprep.subr.bf16.mxu0 0
      %1593 = vmatpush1.bf16.msra.mxu0 0
      %1594 = vmatprep.subr.bf16.mxu0 0
      %1595 = vmatpush1.bf16.msra.mxu0 0
      %1596 = vmatprep.subr.bf16.mxu0 0
      %1597 = vmatpush1.bf16.msra.mxu0 0
      %1598 = vmatprep.subr.bf16.mxu0 0
      %1599 = vmatpush1.bf16.msra.mxu0 0
      %1600 = vmatprep.subr.bf16.mxu0 0
      %1601 = vmatpush1.bf16.msra.mxu0 0
      %1602 = vmatprep.subr.bf16.mxu0 0
      %1603 = vmatpush1.bf16.msra.mxu0 0
      %1604 = vmatprep.subr.bf16.mxu0 0
      %1605 = vmatpush1.bf16.msra.mxu0 0
      %1606 = vmatprep.subr.bf16.mxu0 0
      %1607 = vmatpush1.bf16.msra.mxu0 0
      %1608 = vmatprep.subr.bf16.mxu0 0
      %1609 = vmatpush1.bf16.msra.mxu0 0
      %1610 = vmatprep.subr.bf16.mxu0 0
      %1611 = vmatpush1.bf16.msra.mxu0 0
      %1612 = vmatprep.mubr.bf16.mxu0 0
      %1613 = vmatmul.mubr.bf16.gmra.mrb[0].mxu0 %v1523
      %v1614 = vpop.f32.mrb[0].mxu0
      %v1615 = vadd.f32 0.0, %v1614
      %v1616 = vpop.f32.mrb[0].mxu0
      %v1617 = vadd.f32 0.0, %v1616
      %v1618 = vpop.f32.mrb[0].mxu0
      %v1619 = vadd.f32 0.0, %v1618
      %v1620 = vpop.f32.mrb[0].mxu0
      %v1621 = vadd.f32 0.0, %v1620
      %1622 = vdwg.mxu0
      %1624 = vset.pattern.permute.xlu0 0
      %1625 = vperm.xlu0 %1624, %v1365
      %v1626 = vpop.permute.xlu0 %1625
      %v1628 = vadd.f32 %v1572, %v1626
      %v1629 = vadd.f32 %v1574, %v1626
      %v1630 = vadd.f32 %v1615, %v1626
      %v1631 = vadd.f32 %v1617, %v1626
      %v1632 = vmax.f32 %v1628, 0.0
      %v1633 = vmax.f32 %v1629, 0.0
      %v1634 = vmax.f32 %v1630, 0.0
      %v1635 = vmax.f32 %v1631, 0.0
      %1637 = vset.pattern.permute.xlu0 0
      %1638 = vperm.xlu0 %1637, %v1366
      %v1639 = vpop.permute.xlu0 %1638
      %v1641 = vadd.f32 %v1576, %v1639
      %v1642 = vadd.f32 %v1578, %v1639
      %v1643 = vadd.f32 %v1619, %v1639
      %v1644 = vadd.f32 %v1621, %v1639
      %1645 = vrot.lane.b32.xlu0 %v1632, 17
      %v1646 = vpop.permute.xlu0 %1645
      %1647 = vrot.lane.b32.xlu0 %v1633, 17
      %v1648 = vpop.permute.xlu0 %1647
      %1649 = vrot.lane.b32.xlu0 %v1634, 17
      %v1650 = vpop.permute.xlu0 %1649
      %1651 = vrot.lane.b32.xlu0 %v1635, 17
      %v1652 = vpop.permute.xlu0 %1651
      %v1653 = vsel %vm310, %v1650, %v1652
      %v1654 = vsel %vm310, %v1648, %v1650
      %v1655 = vsel %vm310, %v1646, %v1648
      %v1656 = vsel %vm310, %v1652, %v1646
      %v1657 = vmul.f32 %v1656, %v318
      %v1658 = vmul.f32 %v1655, %v322
      %v1659 = vmul.f32 %v1654, %v326
      %v1660 = vmul.f32 %v1653, %v330
      %1661 = vrot.lane.b32.xlu0 %v1632, 16
      %v1662 = vpop.permute.xlu0 %1661
      %1663 = vrot.lane.b32.xlu0 %v1633, 16
      %v1664 = vpop.permute.xlu0 %1663
      %1665 = vrot.lane.b32.xlu0 %v1634, 16
      %v1666 = vpop.permute.xlu0 %1665
      %1667 = vrot.lane.b32.xlu0 %v1635, 16
      %v1668 = vpop.permute.xlu0 %1667
      %v1669 = vsel %vm343, %v1666, %v1668
      %v1670 = vsel %vm343, %v1664, %v1666
      %v1671 = vsel %vm343, %v1662, %v1664
      %v1672 = vsel %vm343, %v1668, %v1662
      %v1673 = vmul.f32 %v1672, %v351
      %v1674 = vmul.f32 %v1671, %v355
      %v1675 = vmul.f32 %v1670, %v359
      %v1676 = vmul.f32 %v1669, %v363
      %1677 = vrot.lane.b32.xlu0 %v1632, 15
      %v1678 = vpop.permute.xlu0 %1677
      %1679 = vrot.lane.b32.xlu0 %v1633, 15
      %v1680 = vpop.permute.xlu0 %1679
      %1681 = vrot.lane.b32.xlu0 %v1634, 15
      %v1682 = vpop.permute.xlu0 %1681
      %1683 = vrot.lane.b32.xlu0 %v1635, 15
      %v1684 = vpop.permute.xlu0 %1683
      %v1685 = vsel %vm376, %v1682, %v1684
      %v1686 = vsel %vm376, %v1680, %v1682
      %v1687 = vsel %vm376, %v1678, %v1680
      %v1688 = vsel %vm376, %v1684, %v1678
      %v1689 = vmul.f32 %v1688, %v384
      %v1690 = vmul.f32 %v1687, %v388
      %v1691 = vmul.f32 %v1686, %v392
      %v1692 = vmul.f32 %v1685, %v396
      %1693 = vrot.lane.b32.xlu0 %v1632, 1
      %v1694 = vpop.permute.xlu0 %1693
      %1695 = vrot.lane.b32.xlu0 %v1633, 1
      %v1696 = vpop.permute.xlu0 %1695
      %1697 = vrot.lane.b32.xlu0 %v1634, 1
      %v1698 = vpop.permute.xlu0 %1697
      %1699 = vrot.lane.b32.xlu0 %v1635, 1
      %v1700 = vpop.permute.xlu0 %1699
      %v1701 = vsel %vm409, %v1698, %v1700
      %v1702 = vsel %vm409, %v1696, %v1698
      %v1703 = vsel %vm409, %v1694, %v1696
      %v1704 = vsel %vm409, %v1700, %v1694
      %v1705 = vmul.f32 %v1704, %v417
      %v1706 = vmul.f32 %v1703, %v421
      %v1707 = vmul.f32 %v1702, %v425
      %v1708 = vmul.f32 %v1701, %v429
      %1709 = vrot.lane.b32.xlu0 %v1632, 127
      %v1710 = vpop.permute.xlu0 %1709
      %1711 = vrot.lane.b32.xlu0 %v1633, 127
      %v1712 = vpop.permute.xlu0 %1711
      %1713 = vrot.lane.b32.xlu0 %v1634, 127
      %v1714 = vpop.permute.xlu0 %1713
      %1715 = vrot.lane.b32.xlu0 %v1635, 127
      %v1716 = vpop.permute.xlu0 %1715
      %v1717 = vsel %vm442, %v1714, %v1716
      %v1718 = vsel %vm442, %v1712, %v1714
      %v1719 = vsel %vm442, %v1710, %v1712
      %v1720 = vsel %vm442, %v1716, %v1710
      %v1721 = vmul.f32 %v1719, %v450
      %v1722 = vmul.f32 %v1718, %v454
      %v1723 = vmul.f32 %v1717, %v458
      %v1724 = vmul.f32 %v1720, %v462
      %1725 = vrot.lane.b32.xlu0 %v1632, 113
      %v1726 = vpop.permute.xlu0 %1725
      %1727 = vrot.lane.b32.xlu0 %v1633, 113
      %v1728 = vpop.permute.xlu0 %1727
      %1729 = vrot.lane.b32.xlu0 %v1634, 113
      %v1730 = vpop.permute.xlu0 %1729
      %1731 = vrot.lane.b32.xlu0 %v1635, 113
      %v1732 = vpop.permute.xlu0 %1731
      %v1733 = vsel %vm475, %v1730, %v1732
      %v1734 = vsel %vm475, %v1728, %v1730
      %v1735 = vsel %vm475, %v1726, %v1728
      %v1736 = vsel %vm475, %v1732, %v1726
      %v1737 = vmul.f32 %v1735, %v483
      %v1738 = vmul.f32 %v1734, %v487
      %v1739 = vmul.f32 %v1733, %v491
      %v1740 = vmul.f32 %v1736, %v495
      %1741 = vrot.lane.b32.xlu0 %v1632, 112
      %v1742 = vpop.permute.xlu0 %1741
      %1743 = vrot.lane.b32.xlu0 %v1633, 112
      %v1744 = vpop.permute.xlu0 %1743
      %1745 = vrot.lane.b32.xlu0 %v1634, 112
      %v1746 = vpop.permute.xlu0 %1745
      %1747 = vrot.lane.b32.xlu0 %v1635, 112
      %v1748 = vpop.permute.xlu0 %1747
      %v1749 = vsel %vm508, %v1746, %v1748
      %v1750 = vsel %vm508, %v1744, %v1746
      %v1751 = vsel %vm508, %v1742, %v1744
      %v1752 = vsel %vm508, %v1748, %v1742
      %v1753 = vmul.f32 %v1751, %v516
      %v1754 = vmul.f32 %v1750, %v520
      %v1755 = vmul.f32 %v1749, %v524
      %v1756 = vmul.f32 %v1752, %v528
      %1757 = vrot.lane.b32.xlu0 %v1632, 111
      %v1758 = vpop.permute.xlu0 %1757
      %1759 = vrot.lane.b32.xlu0 %v1633, 111
      %v1760 = vpop.permute.xlu0 %1759
      %1761 = vrot.lane.b32.xlu0 %v1634, 111
      %v1762 = vpop.permute.xlu0 %1761
      %1763 = vrot.lane.b32.xlu0 %v1635, 111
      %v1764 = vpop.permute.xlu0 %1763
      %v1765 = vsel %vm541, %v1762, %v1764
      %v1766 = vsel %vm541, %v1760, %v1762
      %v1767 = vsel %vm541, %v1758, %v1760
      %v1768 = vsel %vm541, %v1764, %v1758
      %v1769 = vmul.f32 %v1767, %v549
      %v1770 = vmul.f32 %v1766, %v553
      %v1771 = vmul.f32 %v1765, %v557
      %v1772 = vmul.f32 %v1768, %v561
      %v1773 = vpack.c.bf16 %v1673, %v1657
      %v1774 = vpack.c.bf16 %v1674, %v1658
      %v1775 = vpack.c.bf16 %v1675, %v1659
      %v1776 = vpack.c.bf16 %v1676, %v1660
      %v1777 = vpack.c.bf16 %v1705, %v1689
      %v1778 = vpack.c.bf16 %v1706, %v1690
      %v1779 = vpack.c.bf16 %v1707, %v1691
      %v1780 = vpack.c.bf16 %v1708, %v1692
      %v1781 = vpack.c.bf16 %v1721, %v1632
      %v1782 = vpack.c.bf16 %v1722, %v1633
      %v1783 = vpack.c.bf16 %v1723, %v1634
      %v1784 = vpack.c.bf16 %v1724, %v1635
      %v1785 = vpack.c.bf16 %v1753, %v1737
      %v1786 = vpack.c.bf16 %v1754, %v1738
      %v1787 = vpack.c.bf16 %v1755, %v1739
      %v1788 = vpack.c.bf16 %v1756, %v1740
      %v1789 = vpack.c.bf16 %v1769, %v1769
      %v1790 = vpack.c.bf16 %v1770, %v1770
      %v1791 = vpack.c.bf16 %v1771, %v1771
      %v1792 = vpack.c.bf16 %v1772, %v1772
      %v1794 = vsel %vm591, %v1362, 0
      %v1797 = vsel %vm595, %v1789, 0
      %v1800 = vsel %vm595, %v1790, 0
      %v1803 = vsel %vm595, %v1791, 0
      %v1806 = vsel %vm595, %v1792, 0
      %1808 = vmatprep.subr.bf16.mxu0 %v1774
      %1809 = vmatpush1.bf16.msra.mxu0 %v1773
      %1810 = vmatprep.subr.bf16.mxu0 %v1778
      %1811 = vmatpush1.bf16.msra.mxu0 %v1777
      %1812 = vmatprep.subr.bf16.mxu0 %v1782
      %1813 = vmatpush1.bf16.msra.mxu0 %v1781
      %1814 = vmatprep.subr.bf16.mxu0 %v1786
      %1815 = vmatpush1.bf16.msra.mxu0 %v1785
      %1816 = vmatprep.subr.bf16.mxu0 %v1800
      %1817 = vmatpush1.bf16.msra.mxu0 %v1797
      %1818 = vmatprep.subr.bf16.mxu0 0
      %1819 = vmatpush1.bf16.msra.mxu0 0
      %1820 = vmatprep.subr.bf16.mxu0 0
      %1821 = vmatpush1.bf16.msra.mxu0 0
      %1822 = vmatprep.subr.bf16.mxu0 0
      %1823 = vmatpush1.bf16.msra.mxu0 0
      %1824 = vmatprep.subr.bf16.mxu0 0
      %1825 = vmatpush1.bf16.msra.mxu0 0
      %1826 = vmatprep.subr.bf16.mxu0 0
      %1827 = vmatpush1.bf16.msra.mxu0 0
      %1828 = vmatprep.subr.bf16.mxu0 0
      %1829 = vmatpush1.bf16.msra.mxu0 0
      %1830 = vmatprep.subr.bf16.mxu0 0
      %1831 = vmatpush1.bf16.msra.mxu0 0
      %1832 = vmatprep.subr.bf16.mxu0 0
      %1833 = vmatpush1.bf16.msra.mxu0 0
      %1834 = vmatprep.subr.bf16.mxu0 0
      %1835 = vmatpush1.bf16.msra.mxu0 0
      %1836 = vmatprep.subr.bf16.mxu0 0
      %1837 = vmatpush1.bf16.msra.mxu0 0
      %1838 = vmatprep.subr.bf16.mxu0 0
      %1839 = vmatpush1.bf16.msra.mxu0 0
      %1840 = vmatprep.mubr.bf16.mxu0 0
      %1841 = vmatmul.mubr.bf16.gmra.mrb[0].mxu0 %v1794
      %v1842 = vpop.f32.mrb[0].mxu0
      %v1843 = vadd.f32 0.0, %v1842
      %v1844 = vpop.f32.mrb[0].mxu0
      %v1845 = vadd.f32 0.0, %v1844
      %v1846 = vpop.f32.mrb[0].mxu0
      %v1847 = vpop.f32.mrb[0].mxu0
      %1848 = vdwg.mxu0
      %1849 = vmatprep.subr.bf16.mxu0 %v1776
      %1850 = vmatpush1.bf16.msra.mxu0 %v1775
      %1851 = vmatprep.subr.bf16.mxu0 %v1780
      %1852 = vmatpush1.bf16.msra.mxu0 %v1779
      %1853 = vmatprep.subr.bf16.mxu0 %v1784
      %1854 = vmatpush1.bf16.msra.mxu0 %v1783
      %1855 = vmatprep.subr.bf16.mxu0 %v1788
      %1856 = vmatpush1.bf16.msra.mxu0 %v1787
      %1857 = vmatprep.subr.bf16.mxu0 %v1806
      %1858 = vmatpush1.bf16.msra.mxu0 %v1803
      %1859 = vmatprep.subr.bf16.mxu0 0
      %1860 = vmatpush1.bf16.msra.mxu0 0
      %1861 = vmatprep.subr.bf16.mxu0 0
      %1862 = vmatpush1.bf16.msra.mxu0 0
      %1863 = vmatprep.subr.bf16.mxu0 0
      %1864 = vmatpush1.bf16.msra.mxu0 0
      %1865 = vmatprep.subr.bf16.mxu0 0
      %1866 = vmatpush1.bf16.msra.mxu0 0
      %1867 = vmatprep.subr.bf16.mxu0 0
      %1868 = vmatpush1.bf16.msra.mxu0 0
      %1869 = vmatprep.subr.bf16.mxu0 0
      %1870 = vmatpush1.bf16.msra.mxu0 0
      %1871 = vmatprep.subr.bf16.mxu0 0
      %1872 = vmatpush1.bf16.msra.mxu0 0
      %1873 = vmatprep.subr.bf16.mxu0 0
      %1874 = vmatpush1.bf16.msra.mxu0 0
      %1875 = vmatprep.subr.bf16.mxu0 0
      %1876 = vmatpush1.bf16.msra.mxu0 0
      %1877 = vmatprep.subr.bf16.mxu0 0
      %1878 = vmatpush1.bf16.msra.mxu0 0
      %1879 = vmatprep.subr.bf16.mxu0 0
      %1880 = vmatpush1.bf16.msra.mxu0 0
      %1881 = vmatprep.mubr.bf16.mxu0 0
      %1882 = vmatmul.mubr.bf16.gmra.mrb[0].mxu0 %v1794
      %v1883 = vpop.f32.mrb[0].mxu0
      %v1884 = vadd.f32 0.0, %v1883
      %v1885 = vpop.f32.mrb[0].mxu0
      %v1886 = vadd.f32 0.0, %v1885
      %v1887 = vpop.f32.mrb[0].mxu0
      %v1888 = vpop.f32.mrb[0].mxu0
      %1889 = vdwg.mxu0
      %v1890 = vadd.f32 %v1641, %v1843
      %v1891 = vadd.f32 %v1642, %v1845
      %v1892 = vadd.f32 %v1643, %v1884
      %v1893 = vadd.f32 %v1644, %v1886
      %1894 = vrot.lane.b32.xlu0 %v1890, 17
      %v1895 = vpop.permute.xlu0 %1894
      %1896 = vrot.lane.b32.xlu0 %v1891, 17
      %v1897 = vpop.permute.xlu0 %1896
      %1898 = vrot.lane.b32.xlu0 %v1892, 17
      %v1899 = vpop.permute.xlu0 %1898
      %1900 = vrot.lane.b32.xlu0 %v1893, 17
      %v1901 = vpop.permute.xlu0 %1900
      %v1902 = vsel %vm310, %v1899, %v1901
      %v1903 = vsel %vm310, %v1897, %v1899
      %v1904 = vsel %vm310, %v1895, %v1897
      %v1905 = vsel %vm310, %v1901, %v1895
      %v1906 = vmul.f32 %v1905, %v318
      %v1907 = vmul.f32 %v1904, %v322
      %v1908 = vmul.f32 %v1903, %v326
      %v1909 = vmul.f32 %v1902, %v330
      %1910 = vrot.lane.b32.xlu0 %v1890, 16
      %v1911 = vpop.permute.xlu0 %1910
      %1912 = vrot.lane.b32.xlu0 %v1891, 16
      %v1913 = vpop.permute.xlu0 %1912
      %1914 = vrot.lane.b32.xlu0 %v1892, 16
      %v1915 = vpop.permute.xlu0 %1914
      %1916 = vrot.lane.b32.xlu0 %v1893, 16
      %v1917 = vpop.permute.xlu0 %1916
      %v1918 = vsel %vm343, %v1915, %v1917
      %v1919 = vsel %vm343, %v1913, %v1915
      %v1920 = vsel %vm343, %v1911, %v1913
      %v1921 = vsel %vm343, %v1917, %v1911
      %v1922 = vmul.f32 %v1921, %v351
      %v1923 = vmul.f32 %v1920, %v355
      %v1924 = vmul.f32 %v1919, %v359
      %v1925 = vmul.f32 %v1918, %v363
      %1926 = vrot.lane.b32.xlu0 %v1890, 15
      %v1927 = vpop.permute.xlu0 %1926
      %1928 = vrot.lane.b32.xlu0 %v1891, 15
      %v1929 = vpop.permute.xlu0 %1928
      %1930 = vrot.lane.b32.xlu0 %v1892, 15
      %v1931 = vpop.permute.xlu0 %1930
      %1932 = vrot.lane.b32.xlu0 %v1893, 15
      %v1933 = vpop.permute.xlu0 %1932
      %v1934 = vsel %vm376, %v1931, %v1933
      %v1935 = vsel %vm376, %v1929, %v1931
      %v1936 = vsel %vm376, %v1927, %v1929
      %v1937 = vsel %vm376, %v1933, %v1927
      %v1938 = vmul.f32 %v1937, %v384
      %v1939 = vmul.f32 %v1936, %v388
      %v1940 = vmul.f32 %v1935, %v392
      %v1941 = vmul.f32 %v1934, %v396
      %1942 = vrot.lane.b32.xlu0 %v1890, 1
      %v1943 = vpop.permute.xlu0 %1942
      %1944 = vrot.lane.b32.xlu0 %v1891, 1
      %v1945 = vpop.permute.xlu0 %1944
      %1946 = vrot.lane.b32.xlu0 %v1892, 1
      %v1947 = vpop.permute.xlu0 %1946
      %1948 = vrot.lane.b32.xlu0 %v1893, 1
      %v1949 = vpop.permute.xlu0 %1948
      %v1950 = vsel %vm409, %v1947, %v1949
      %v1951 = vsel %vm409, %v1945, %v1947
      %v1952 = vsel %vm409, %v1943, %v1945
      %v1953 = vsel %vm409, %v1949, %v1943
      %v1954 = vmul.f32 %v1953, %v417
      %v1955 = vmul.f32 %v1952, %v421
      %v1956 = vmul.f32 %v1951, %v425
      %v1957 = vmul.f32 %v1950, %v429
      %1958 = vrot.lane.b32.xlu0 %v1890, 127
      %v1959 = vpop.permute.xlu0 %1958
      %1960 = vrot.lane.b32.xlu0 %v1891, 127
      %v1961 = vpop.permute.xlu0 %1960
      %1962 = vrot.lane.b32.xlu0 %v1892, 127
      %v1963 = vpop.permute.xlu0 %1962
      %1964 = vrot.lane.b32.xlu0 %v1893, 127
      %v1965 = vpop.permute.xlu0 %1964
      %v1966 = vsel %vm442, %v1963, %v1965
      %v1967 = vsel %vm442, %v1961, %v1963
      %v1968 = vsel %vm442, %v1959, %v1961
      %v1969 = vsel %vm442, %v1965, %v1959
      %v1970 = vmul.f32 %v1968, %v450
      %v1971 = vmul.f32 %v1967, %v454
      %v1972 = vmul.f32 %v1966, %v458
      %v1973 = vmul.f32 %v1969, %v462
      %1974 = vrot.lane.b32.xlu0 %v1890, 113
      %v1975 = vpop.permute.xlu0 %1974
      %1976 = vrot.lane.b32.xlu0 %v1891, 113
      %v1977 = vpop.permute.xlu0 %1976
      %1978 = vrot.lane.b32.xlu0 %v1892, 113
      %v1979 = vpop.permute.xlu0 %1978
      %1980 = vrot.lane.b32.xlu0 %v1893, 113
      %v1981 = vpop.permute.xlu0 %1980
      %v1982 = vsel %vm475, %v1979, %v1981
      %v1983 = vsel %vm475, %v1977, %v1979
      %v1984 = vsel %vm475, %v1975, %v1977
      %v1985 = vsel %vm475, %v1981, %v1975
      %v1986 = vmul.f32 %v1984, %v483
      %v1987 = vmul.f32 %v1983, %v487
      %v1988 = vmul.f32 %v1982, %v491
      %v1989 = vmul.f32 %v1985, %v495
      %1990 = vrot.lane.b32.xlu0 %v1890, 112
      %v1991 = vpop.permute.xlu0 %1990
      %1992 = vrot.lane.b32.xlu0 %v1891, 112
      %v1993 = vpop.permute.xlu0 %1992
      %1994 = vrot.lane.b32.xlu0 %v1892, 112
      %v1995 = vpop.permute.xlu0 %1994
      %1996 = vrot.lane.b32.xlu0 %v1893, 112
      %v1997 = vpop.permute.xlu0 %1996
      %v1998 = vsel %vm508, %v1995, %v1997
      %v1999 = vsel %vm508, %v1993, %v1995
      %v2000 = vsel %vm508, %v1991, %v1993
      %v2001 = vsel %vm508, %v1997, %v1991
      %v2002 = vmul.f32 %v2000, %v516
      %v2003 = vmul.f32 %v1999, %v520
      %v2004 = vmul.f32 %v1998, %v524
      %v2005 = vmul.f32 %v2001, %v528
      %2006 = vrot.lane.b32.xlu0 %v1890, 111
      %v2007 = vpop.permute.xlu0 %2006
      %2008 = vrot.lane.b32.xlu0 %v1891, 111
      %v2009 = vpop.permute.xlu0 %2008
      %2010 = vrot.lane.b32.xlu0 %v1892, 111
      %v2011 = vpop.permute.xlu0 %2010
      %2012 = vrot.lane.b32.xlu0 %v1893, 111
      %v2013 = vpop.permute.xlu0 %2012
      %v2014 = vsel %vm541, %v2011, %v2013
      %v2015 = vsel %vm541, %v2009, %v2011
      %v2016 = vsel %vm541, %v2007, %v2009
      %v2017 = vsel %vm541, %v2013, %v2007
      %v2018 = vmul.f32 %v2016, %v549
      %v2019 = vmul.f32 %v2015, %v553
      %v2020 = vmul.f32 %v2014, %v557
      %v2021 = vmul.f32 %v2017, %v561
      %v2022 = vpack.c.bf16 %v1922, %v1906
      %v2023 = vpack.c.bf16 %v1923, %v1907
      %v2024 = vpack.c.bf16 %v1924, %v1908
      %v2025 = vpack.c.bf16 %v1925, %v1909
      %v2026 = vpack.c.bf16 %v1954, %v1938
      %v2027 = vpack.c.bf16 %v1955, %v1939
      %v2028 = vpack.c.bf16 %v1956, %v1940
      %v2029 = vpack.c.bf16 %v1957, %v1941
      %v2030 = vpack.c.bf16 %v1970, %v1890
      %v2031 = vpack.c.bf16 %v1971, %v1891
      %v2032 = vpack.c.bf16 %v1972, %v1892
      %v2033 = vpack.c.bf16 %v1973, %v1893
      %v2034 = vpack.c.bf16 %v2002, %v1986
      %v2035 = vpack.c.bf16 %v2003, %v1987
      %v2036 = vpack.c.bf16 %v2004, %v1988
      %v2037 = vpack.c.bf16 %v2005, %v1989
      %v2038 = vpack.c.bf16 %v2018, %v2018
      %v2039 = vpack.c.bf16 %v2019, %v2019
      %v2040 = vpack.c.bf16 %v2020, %v2020
      %v2041 = vpack.c.bf16 %v2021, %v2021
      %2043 = vset.pattern.permute.xlu0 0
      %2044 = vperm.xlu0 %2043, %v1367
      %v2045 = vpop.permute.xlu0 %2044
      %v2048 = vsel %vm591, %v1363, 0
      %v2051 = vsel %vm595, %v2038, 0
      %v2054 = vsel %vm595, %v2039, 0
      %v2057 = vsel %vm595, %v2040, 0
      %v2060 = vsel %vm595, %v2041, 0
      %2062 = vmatprep.subr.bf16.mxu0 %v2023
      %2063 = vmatpush1.bf16.msra.mxu0 %v2022
      %2064 = vmatprep.subr.bf16.mxu0 %v2027
      %2065 = vmatpush1.bf16.msra.mxu0 %v2026
      %2066 = vmatprep.subr.bf16.mxu0 %v2031
      %2067 = vmatpush1.bf16.msra.mxu0 %v2030
      %2068 = vmatprep.subr.bf16.mxu0 %v2035
      %2069 = vmatpush1.bf16.msra.mxu0 %v2034
      %2070 = vmatprep.subr.bf16.mxu0 %v2054
      %2071 = vmatpush1.bf16.msra.mxu0 %v2051
      %2072 = vmatprep.subr.bf16.mxu0 0
      %2073 = vmatpush1.bf16.msra.mxu0 0
      %2074 = vmatprep.subr.bf16.mxu0 0
      %2075 = vmatpush1.bf16.msra.mxu0 0
      %2076 = vmatprep.subr.bf16.mxu0 0
      %2077 = vmatpush1.bf16.msra.mxu0 0
      %2078 = vmatprep.subr.bf16.mxu0 0
      %2079 = vmatpush1.bf16.msra.mxu0 0
      %2080 = vmatprep.subr.bf16.mxu0 0
      %2081 = vmatpush1.bf16.msra.mxu0 0
      %2082 = vmatprep.subr.bf16.mxu0 0
      %2083 = vmatpush1.bf16.msra.mxu0 0
      %2084 = vmatprep.subr.bf16.mxu0 0
      %2085 = vmatpush1.bf16.msra.mxu0 0
      %2086 = vmatprep.subr.bf16.mxu0 0
      %2087 = vmatpush1.bf16.msra.mxu0 0
      %2088 = vmatprep.subr.bf16.mxu0 0
      %2089 = vmatpush1.bf16.msra.mxu0 0
      %2090 = vmatprep.subr.bf16.mxu0 0
      %2091 = vmatpush1.bf16.msra.mxu0 0
      %2092 = vmatprep.subr.bf16.mxu0 0
      %2093 = vmatpush1.bf16.msra.mxu0 0
      %2094 = vmatprep.mubr.bf16.mxu0 0
      %2095 = vmatmul.mubr.bf16.gmra.mrb[0].mxu0 %v2048
      %v2096 = vpop.f32.mrb[0].mxu0
      %v2097 = vadd.f32 %v2045, %v2096
      %v2098 = vpop.f32.mrb[0].mxu0
      %v2099 = vadd.f32 %v2045, %v2098
      %v2100 = vpop.f32.mrb[0].mxu0
      %v2101 = vpop.f32.mrb[0].mxu0
      %2102 = vdwg.mxu0
      %2103 = vmatprep.subr.bf16.mxu0 %v2025
      %2104 = vmatpush1.bf16.msra.mxu0 %v2024
      %2105 = vmatprep.subr.bf16.mxu0 %v2029
      %2106 = vmatpush1.bf16.msra.mxu0 %v2028
      %2107 = vmatprep.subr.bf16.mxu0 %v2033
      %2108 = vmatpush1.bf16.msra.mxu0 %v2032
      %2109 = vmatprep.subr.bf16.mxu0 %v2037
      %2110 = vmatpush1.bf16.msra.mxu0 %v2036
      %2111 = vmatprep.subr.bf16.mxu0 %v2060
      %2112 = vmatpush1.bf16.msra.mxu0 %v2057
      %2113 = vmatprep.subr.bf16.mxu0 0
      %2114 = vmatpush1.bf16.msra.mxu0 0
      %2115 = vmatprep.subr.bf16.mxu0 0
      %2116 = vmatpush1.bf16.msra.mxu0 0
      %2117 = vmatprep.subr.bf16.mxu0 0
      %2118 = vmatpush1.bf16.msra.mxu0 0
      %2119 = vmatprep.subr.bf16.mxu0 0
      %2120 = vmatpush1.bf16.msra.mxu0 0
      %2121 = vmatprep.subr.bf16.mxu0 0
      %2122 = vmatpush1.bf16.msra.mxu0 0
      %2123 = vmatprep.subr.bf16.mxu0 0
      %2124 = vmatpush1.bf16.msra.mxu0 0
      %2125 = vmatprep.subr.bf16.mxu0 0
      %2126 = vmatpush1.bf16.msra.mxu0 0
      %2127 = vmatprep.subr.bf16.mxu0 0
      %2128 = vmatpush1.bf16.msra.mxu0 0
      %2129 = vmatprep.subr.bf16.mxu0 0
      %2130 = vmatpush1.bf16.msra.mxu0 0
      %2131 = vmatprep.subr.bf16.mxu0 0
      %2132 = vmatpush1.bf16.msra.mxu0 0
      %2133 = vmatprep.subr.bf16.mxu0 0
      %2134 = vmatpush1.bf16.msra.mxu0 0
      %2135 = vmatprep.mubr.bf16.mxu0 0
      %2136 = vmatmul.mubr.bf16.gmra.mrb[0].mxu0 %v2048
      %v2137 = vpop.f32.mrb[0].mxu0
      %v2138 = vadd.f32 %v2045, %v2137
      %v2139 = vpop.f32.mrb[0].mxu0
      %v2140 = vadd.f32 %v2045, %v2139
      %v2141 = vpop.f32.mrb[0].mxu0
      %v2142 = vpop.f32.mrb[0].mxu0
      %2143 = vdwg.mxu0
      %v2144 = vmax.f32 %v2097, 0.0
      %v2145 = vmax.f32 %v2099, 0.0
      %v2146 = vmax.f32 %v2138, 0.0
      %v2147 = vmax.f32 %v2140, 0.0
      %s2148 = scalar_lea.vmem %s4, 4
      %v2149 = vld [vmem:[%s2148] sm:$0xf]
      %v2150 = vpack.c.bf16 %v2144, %v2144
      %v2151 = vpack.c.bf16 %v2145, %v2145
      %v2152 = vpack.c.bf16 %v2146, %v2146
      %v2153 = vpack.c.bf16 %v2147, %v2147
      %2155 = vset.pattern.permute.xlu0 0
      %2156 = vperm.xlu0 %2155, %v1368
      %v2157 = vpop.permute.xlu0 %2156
      %v2160 = vsel %vm1229, %v2149, 0
      %v2163 = vsel %vm595, %v2150, 0
      %v2166 = vsel %vm595, %v2151, 0
      %v2169 = vsel %vm595, %v2152, 0
      %v2172 = vsel %vm595, %v2153, 0
      %2174 = vmatprep.subr.bf16.mxu0 %v2166
      %2175 = vmatpush1.bf16.msra.mxu0 %v2163
      %2176 = vmatprep.subr.bf16.mxu0 0
      %2177 = vmatpush1.bf16.msra.mxu0 0
      %2178 = vmatprep.subr.bf16.mxu0 0
      %2179 = vmatpush1.bf16.msra.mxu0 0
      %2180 = vmatprep.subr.bf16.mxu0 0
      %2181 = vmatpush1.bf16.msra.mxu0 0
      %2182 = vmatprep.subr.bf16.mxu0 0
      %2183 = vmatpush1.bf16.msra.mxu0 0
      %2184 = vmatprep.subr.bf16.mxu0 0
      %2185 = vmatpush1.bf16.msra.mxu0 0
      %2186 = vmatprep.subr.bf16.mxu0 0
      %2187 = vmatpush1.bf16.msra.mxu0 0
      %2188 = vmatprep.subr.bf16.mxu0 0
      %2189 = vmatpush1.bf16.msra.mxu0 0
      %2190 = vmatprep.subr.bf16.mxu0 0
      %2191 = vmatpush1.bf16.msra.mxu0 0
      %2192 = vmatprep.subr.bf16.mxu0 0
      %2193 = vmatpush1.bf16.msra.mxu0 0
      %2194 = vmatprep.subr.bf16.mxu0 0
      %2195 = vmatpush1.bf16.msra.mxu0 0
      %2196 = vmatprep.subr.bf16.mxu0 0
      %2197 = vmatpush1.bf16.msra.mxu0 0
      %2198 = vmatprep.subr.bf16.mxu0 0
      %2199 = vmatpush1.bf16.msra.mxu0 0
      %2200 = vmatprep.subr.bf16.mxu0 0
      %2201 = vmatpush1.bf16.msra.mxu0 0
      %2202 = vmatprep.subr.bf16.mxu0 0
      %2203 = vmatpush1.bf16.msra.mxu0 0
      %2204 = vmatprep.subr.bf16.mxu0 0
      %2205 = vmatpush1.bf16.msra.mxu0 0
      %2206 = vmatprep.mubr.bf16.mxu0 0
      %2207 = vmatmul.mubr.bf16.gmra.mrb[0].mxu0 %v2160
      %v2208 = vpop.f32.mrb[0].mxu0
      %v2209 = vadd.f32 %v2157, %v2208
      %v2210 = vpop.f32.mrb[0].mxu0
      %v2211 = vadd.f32 %v2157, %v2210
      %v2212 = vpop.f32.mrb[0].mxu0
      %v2213 = vpop.f32.mrb[0].mxu0
      %2214 = vdwg.mxu0
      %2215 = vmatprep.subr.bf16.mxu0 %v2172
      %2216 = vmatpush1.bf16.msra.mxu0 %v2169
      %2217 = vmatprep.subr.bf16.mxu0 0
      %2218 = vmatpush1.bf16.msra.mxu0 0
      %2219 = vmatprep.subr.bf16.mxu0 0
      %2220 = vmatpush1.bf16.msra.mxu0 0
      %2221 = vmatprep.subr.bf16.mxu0 0
      %2222 = vmatpush1.bf16.msra.mxu0 0
      %2223 = vmatprep.subr.bf16.mxu0 0
      %2224 = vmatpush1.bf16.msra.mxu0 0
      %2225 = vmatprep.subr.bf16.mxu0 0
      %2226 = vmatpush1.bf16.msra.mxu0 0
      %2227 = vmatprep.subr.bf16.mxu0 0
      %2228 = vmatpush1.bf16.msra.mxu0 0
      %2229 = vmatprep.subr.bf16.mxu0 0
      %2230 = vmatpush1.bf16.msra.mxu0 0
      %2231 = vmatprep.subr.bf16.mxu0 0
      %2232 = vmatpush1.bf16.msra.mxu0 0
      %2233 = vmatprep.subr.bf16.mxu0 0
      %2234 = vmatpush1.bf16.msra.mxu0 0
      %2235 = vmatprep.subr.bf16.mxu0 0
      %2236 = vmatpush1.bf16.msra.mxu0 0
      %2237 = vmatprep.subr.bf16.mxu0 0
      %2238 = vmatpush1.bf16.msra.mxu0 0
      %2239 = vmatprep.subr.bf16.mxu0 0
      %2240 = vmatpush1.bf16.msra.mxu0 0
      %2241 = vmatprep.subr.bf16.mxu0 0
      %2242 = vmatpush1.bf16.msra.mxu0 0
      %2243 = vmatprep.subr.bf16.mxu0 0
      %2244 = vmatpush1.bf16.msra.mxu0 0
      %2245 = vmatprep.subr.bf16.mxu0 0
      %2246 = vmatpush1.bf16.msra.mxu0 0
      %2247 = vmatprep.mubr.bf16.mxu0 0
      %2248 = vmatmul.mubr.bf16.gmra.mrb[0].mxu0 %v2160
      %v2249 = vpop.f32.mrb[0].mxu0
      %v2250 = vadd.f32 %v2157, %v2249
      %v2251 = vpop.f32.mrb[0].mxu0
      %v2252 = vadd.f32 %v2157, %v2251
      %v2253 = vpop.f32.mrb[0].mxu0
      %v2254 = vpop.f32.mrb[0].mxu0
      %2255 = vdwg.mxu0
      %v2256 = vxor.u32 %v2209, 2147483648
      %v2257 = vxor.u32 %v2211, 2147483648
      %v2258 = vxor.u32 %v2250, 2147483648
      %v2259 = vxor.u32 %v2252, 2147483648
      %v2260 = vmul.f32 %v2256, 1.442695
      %v2261 = vpow.pop %v2260
      %v2262 = vmul.f32 %v2257, 1.442695
      %v2263 = vpow.pop %v2262
      %v2264 = vmul.f32 %v2258, 1.442695
      %v2265 = vpow.pop %v2264
      %v2266 = vmul.f32 %v2259, 1.442695
      %v2267 = vpow.pop %v2266
      %v2268 = vadd.f32 %v2261, 1.0
      %v2269 = vadd.f32 %v2263, 1.0
      %v2270 = vadd.f32 %v2265, 1.0
      %v2271 = vadd.f32 %v2267, 1.0
      %v2272 = vrcp.pop %v2268
      %v2273 = vmul.f32 1.0, %v2272
      %v2274 = vrcp.pop %v2269
      %v2275 = vmul.f32 1.0, %v2274
      %v2276 = vrcp.pop %v2270
      %v2277 = vmul.f32 1.0, %v2276
      %v2278 = vrcp.pop %v2271
      %v2279 = vmul.f32 1.0, %v2278
      %v2280 = vmul.f32 %v2273, %v1890
      %v2281 = vmul.f32 %v2275, %v1891
      %v2282 = vmul.f32 %v2277, %v1892
      %v2283 = vmul.f32 %v2279, %v1893
      %v2284 = vadd.f32 %v2280, %v1355
      %v2285 = vadd.f32 %v2281, %v1356
      %v2286 = vadd.f32 %v2282, %v1357
      %v2287 = vadd.f32 %v2283, %v1358
      %v2288 = vld [vmem:[%s5] sm:$0xf]
      %2289 = vrot.lane.b32.xlu0 %v2284, 17
      %v2290 = vpop.permute.xlu0 %2289
      %2291 = vrot.lane.b32.xlu0 %v2285, 17
      %v2292 = vpop.permute.xlu0 %2291
      %2293 = vrot.lane.b32.xlu0 %v2286, 17
      %v2294 = vpop.permute.xlu0 %2293
      %2295 = vrot.lane.b32.xlu0 %v2287, 17
      %v2296 = vpop.permute.xlu0 %2295
      %v2297 = vsel %vm310, %v2294, %v2296
      %v2298 = vsel %vm310, %v2292, %v2294
      %v2299 = vsel %vm310, %v2290, %v2292
      %v2300 = vsel %vm310, %v2296, %v2290
      %v2301 = vmul.f32 %v2300, %v318
      %v2302 = vmul.f32 %v2299, %v322
      %v2303 = vmul.f32 %v2298, %v326
      %v2304 = vmul.f32 %v2297, %v330
      %2305 = vrot.lane.b32.xlu0 %v2284, 16
      %v2306 = vpop.permute.xlu0 %2305
      %2307 = vrot.lane.b32.xlu0 %v2285, 16
      %v2308 = vpop.permute.xlu0 %2307
      %2309 = vrot.lane.b32.xlu0 %v2286, 16
      %v2310 = vpop.permute.xlu0 %2309
      %2311 = vrot.lane.b32.xlu0 %v2287, 16
      %v2312 = vpop.permute.xlu0 %2311
      %v2313 = vsel %vm343, %v2310, %v2312
      %v2314 = vsel %vm343, %v2308, %v2310
      %v2315 = vsel %vm343, %v2306, %v2308
      %v2316 = vsel %vm343, %v2312, %v2306
      %v2317 = vmul.f32 %v2316, %v351
      %v2318 = vmul.f32 %v2315, %v355
      %v2319 = vmul.f32 %v2314, %v359
      %v2320 = vmul.f32 %v2313, %v363
      %2321 = vrot.lane.b32.xlu0 %v2284, 15
      %v2322 = vpop.permute.xlu0 %2321
      %2323 = vrot.lane.b32.xlu0 %v2285, 15
      %v2324 = vpop.permute.xlu0 %2323
      %2325 = vrot.lane.b32.xlu0 %v2286, 15
      %v2326 = vpop.permute.xlu0 %2325
      %2327 = vrot.lane.b32.xlu0 %v2287, 15
      %v2328 = vpop.permute.xlu0 %2327
      %v2329 = vsel %vm376, %v2326, %v2328
      %v2330 = vsel %vm376, %v2324, %v2326
      %v2331 = vsel %vm376, %v2322, %v2324
      %v2332 = vsel %vm376, %v2328, %v2322
      %v2333 = vmul.f32 %v2332, %v384
      %v2334 = vmul.f32 %v2331, %v388
      %v2335 = vmul.f32 %v2330, %v392
      %v2336 = vmul.f32 %v2329, %v396
      %2337 = vrot.lane.b32.xlu0 %v2284, 1
      %v2338 = vpop.permute.xlu0 %2337
      %2339 = vrot.lane.b32.xlu0 %v2285, 1
      %v2340 = vpop.permute.xlu0 %2339
      %2341 = vrot.lane.b32.xlu0 %v2286, 1
      %v2342 = vpop.permute.xlu0 %2341
      %2343 = vrot.lane.b32.xlu0 %v2287, 1
      %v2344 = vpop.permute.xlu0 %2343
      %v2345 = vsel %vm409, %v2342, %v2344
      %v2346 = vsel %vm409, %v2340, %v2342
      %v2347 = vsel %vm409, %v2338, %v2340
      %v2348 = vsel %vm409, %v2344, %v2338
      %v2349 = vmul.f32 %v2348, %v417
      %v2350 = vmul.f32 %v2347, %v421
      %v2351 = vmul.f32 %v2346, %v425
      %v2352 = vmul.f32 %v2345, %v429
      %2353 = vrot.lane.b32.xlu0 %v2284, 127
      %v2354 = vpop.permute.xlu0 %2353
      %2355 = vrot.lane.b32.xlu0 %v2285, 127
      %v2356 = vpop.permute.xlu0 %2355
      %2357 = vrot.lane.b32.xlu0 %v2286, 127
      %v2358 = vpop.permute.xlu0 %2357
      %2359 = vrot.lane.b32.xlu0 %v2287, 127
      %v2360 = vpop.permute.xlu0 %2359
      %v2361 = vsel %vm442, %v2358, %v2360
      %v2362 = vsel %vm442, %v2356, %v2358
      %v2363 = vsel %vm442, %v2354, %v2356
      %v2364 = vsel %vm442, %v2360, %v2354
      %v2365 = vmul.f32 %v2363, %v450
      %v2366 = vmul.f32 %v2362, %v454
      %v2367 = vmul.f32 %v2361, %v458
      %v2368 = vmul.f32 %v2364, %v462
      %2369 = vrot.lane.b32.xlu0 %v2284, 113
      %v2370 = vpop.permute.xlu0 %2369
      %2371 = vrot.lane.b32.xlu0 %v2285, 113
      %v2372 = vpop.permute.xlu0 %2371
      %2373 = vrot.lane.b32.xlu0 %v2286, 113
      %v2374 = vpop.permute.xlu0 %2373
      %2375 = vrot.lane.b32.xlu0 %v2287, 113
      %v2376 = vpop.permute.xlu0 %2375
      %v2377 = vsel %vm475, %v2374, %v2376
      %v2378 = vsel %vm475, %v2372, %v2374
      %v2379 = vsel %vm475, %v2370, %v2372
      %v2380 = vsel %vm475, %v2376, %v2370
      %v2381 = vmul.f32 %v2379, %v483
      %v2382 = vmul.f32 %v2378, %v487
      %v2383 = vmul.f32 %v2377, %v491
      %v2384 = vmul.f32 %v2380, %v495
      %2385 = vrot.lane.b32.xlu0 %v2284, 112
      %v2386 = vpop.permute.xlu0 %2385
      %2387 = vrot.lane.b32.xlu0 %v2285, 112
      %v2388 = vpop.permute.xlu0 %2387
      %2389 = vrot.lane.b32.xlu0 %v2286, 112
      %v2390 = vpop.permute.xlu0 %2389
      %2391 = vrot.lane.b32.xlu0 %v2287, 112
      %v2392 = vpop.permute.xlu0 %2391
      %v2393 = vsel %vm508, %v2390, %v2392
      %v2394 = vsel %vm508, %v2388, %v2390
      %v2395 = vsel %vm508, %v2386, %v2388
      %v2396 = vsel %vm508, %v2392, %v2386
      %v2397 = vmul.f32 %v2395, %v516
      %v2398 = vmul.f32 %v2394, %v520
      %v2399 = vmul.f32 %v2393, %v524
      %v2400 = vmul.f32 %v2396, %v528
      %2401 = vrot.lane.b32.xlu0 %v2284, 111
      %v2402 = vpop.permute.xlu0 %2401
      %2403 = vrot.lane.b32.xlu0 %v2285, 111
      %v2404 = vpop.permute.xlu0 %2403
      %2405 = vrot.lane.b32.xlu0 %v2286, 111
      %v2406 = vpop.permute.xlu0 %2405
      %2407 = vrot.lane.b32.xlu0 %v2287, 111
      %v2408 = vpop.permute.xlu0 %2407
      %v2409 = vsel %vm541, %v2406, %v2408
      %v2410 = vsel %vm541, %v2404, %v2406
      %v2411 = vsel %vm541, %v2402, %v2404
      %v2412 = vsel %vm541, %v2408, %v2402
      %v2413 = vmul.f32 %v2411, %v549
      %v2414 = vmul.f32 %v2410, %v553
      %v2415 = vmul.f32 %v2409, %v557
      %v2416 = vmul.f32 %v2412, %v561
      %v2417 = vpack.c.bf16 %v2317, %v2301
      %v2418 = vpack.c.bf16 %v2318, %v2302
      %v2419 = vpack.c.bf16 %v2319, %v2303
      %v2420 = vpack.c.bf16 %v2320, %v2304
      %v2421 = vpack.c.bf16 %v2349, %v2333
      %v2422 = vpack.c.bf16 %v2350, %v2334
      %v2423 = vpack.c.bf16 %v2351, %v2335
      %v2424 = vpack.c.bf16 %v2352, %v2336
      %v2425 = vpack.c.bf16 %v2365, %v2284
      %v2426 = vpack.c.bf16 %v2366, %v2285
      %v2427 = vpack.c.bf16 %v2367, %v2286
      %v2428 = vpack.c.bf16 %v2368, %v2287
      %v2429 = vpack.c.bf16 %v2397, %v2381
      %v2430 = vpack.c.bf16 %v2398, %v2382
      %v2431 = vpack.c.bf16 %v2399, %v2383
      %v2432 = vpack.c.bf16 %v2400, %v2384
      %v2433 = vpack.c.bf16 %v2413, %v2413
      %v2434 = vpack.c.bf16 %v2414, %v2414
      %v2435 = vpack.c.bf16 %v2415, %v2415
      %v2436 = vpack.c.bf16 %v2416, %v2416
      %v2437 = vld [vmem:[%s6] sm:$0xff]
      %2439 = vset.pattern.permute.xlu0 0
      %2440 = vperm.xlu0 %2439, %v2437
      %v2441 = vpop.permute.xlu0 %2440
      %v2444 = vsel %vm591, %v2288, 0
      %v2447 = vsel %vm595, %v2433, 0
      %v2450 = vsel %vm595, %v2434, 0
      %v2453 = vsel %vm595, %v2435, 0
      %v2456 = vsel %vm595, %v2436, 0
      %2458 = vmatprep.subr.bf16.mxu0 %v2418
      %2459 = vmatpush1.bf16.msra.mxu0 %v2417
      %2460 = vmatprep.subr.bf16.mxu0 %v2422
      %2461 = vmatpush1.bf16.msra.mxu0 %v2421
      %2462 = vmatprep.subr.bf16.mxu0 %v2426
      %2463 = vmatpush1.bf16.msra.mxu0 %v2425
      %2464 = vmatprep.subr.bf16.mxu0 %v2430
      %2465 = vmatpush1.bf16.msra.mxu0 %v2429
      %2466 = vmatprep.subr.bf16.mxu0 %v2450
      %2467 = vmatpush1.bf16.msra.mxu0 %v2447
      %2468 = vmatprep.subr.bf16.mxu0 0
      %2469 = vmatpush1.bf16.msra.mxu0 0
      %2470 = vmatprep.subr.bf16.mxu0 0
      %2471 = vmatpush1.bf16.msra.mxu0 0
      %2472 = vmatprep.subr.bf16.mxu0 0
      %2473 = vmatpush1.bf16.msra.mxu0 0
      %2474 = vmatprep.subr.bf16.mxu0 0
      %2475 = vmatpush1.bf16.msra.mxu0 0
      %2476 = vmatprep.subr.bf16.mxu0 0
      %2477 = vmatpush1.bf16.msra.mxu0 0
      %2478 = vmatprep.subr.bf16.mxu0 0
      %2479 = vmatpush1.bf16.msra.mxu0 0
      %2480 = vmatprep.subr.bf16.mxu0 0
      %2481 = vmatpush1.bf16.msra.mxu0 0
      %2482 = vmatprep.subr.bf16.mxu0 0
      %2483 = vmatpush1.bf16.msra.mxu0 0
      %2484 = vmatprep.subr.bf16.mxu0 0
      %2485 = vmatpush1.bf16.msra.mxu0 0
      %2486 = vmatprep.subr.bf16.mxu0 0
      %2487 = vmatpush1.bf16.msra.mxu0 0
      %2488 = vmatprep.subr.bf16.mxu0 0
      %2489 = vmatpush1.bf16.msra.mxu0 0
      %2490 = vmatprep.mubr.bf16.mxu0 0
      %2491 = vmatmul.mubr.bf16.gmra.mrb[0].mxu0 %v2444
      %v2492 = vpop.f32.mrb[0].mxu0
      %v2493 = vadd.f32 %v2441, %v2492
      %v2494 = vpop.f32.mrb[0].mxu0
      %v2495 = vadd.f32 %v2441, %v2494
      %v2496 = vpop.f32.mrb[0].mxu0
      %v2497 = vpop.f32.mrb[0].mxu0
      %2498 = vdwg.mxu0
      %2499 = vmatprep.subr.bf16.mxu0 %v2420
      %2500 = vmatpush1.bf16.msra.mxu0 %v2419
      %2501 = vmatprep.subr.bf16.mxu0 %v2424
      %2502 = vmatpush1.bf16.msra.mxu0 %v2423
      %2503 = vmatprep.subr.bf16.mxu0 %v2428
      %2504 = vmatpush1.bf16.msra.mxu0 %v2427
      %2505 = vmatprep.subr.bf16.mxu0 %v2432
      %2506 = vmatpush1.bf16.msra.mxu0 %v2431
      %2507 = vmatprep.subr.bf16.mxu0 %v2456
      %2508 = vmatpush1.bf16.msra.mxu0 %v2453
      %2509 = vmatprep.subr.bf16.mxu0 0
      %2510 = vmatpush1.bf16.msra.mxu0 0
      %2511 = vmatprep.subr.bf16.mxu0 0
      %2512 = vmatpush1.bf16.msra.mxu0 0
      %2513 = vmatprep.subr.bf16.mxu0 0
      %2514 = vmatpush1.bf16.msra.mxu0 0
      %2515 = vmatprep.subr.bf16.mxu0 0
      %2516 = vmatpush1.bf16.msra.mxu0 0
      %2517 = vmatprep.subr.bf16.mxu0 0
      %2518 = vmatpush1.bf16.msra.mxu0 0
      %2519 = vmatprep.subr.bf16.mxu0 0
      %2520 = vmatpush1.bf16.msra.mxu0 0
      %2521 = vmatprep.subr.bf16.mxu0 0
      %2522 = vmatpush1.bf16.msra.mxu0 0
      %2523 = vmatprep.subr.bf16.mxu0 0
      %2524 = vmatpush1.bf16.msra.mxu0 0
      %2525 = vmatprep.subr.bf16.mxu0 0
      %2526 = vmatpush1.bf16.msra.mxu0 0
      %2527 = vmatprep.subr.bf16.mxu0 0
      %2528 = vmatpush1.bf16.msra.mxu0 0
      %2529 = vmatprep.subr.bf16.mxu0 0
      %2530 = vmatpush1.bf16.msra.mxu0 0
      %2531 = vmatprep.mubr.bf16.mxu0 0
      %2532 = vmatmul.mubr.bf16.gmra.mrb[0].mxu0 %v2444
      %v2533 = vpop.f32.mrb[0].mxu0
      %v2534 = vadd.f32 %v2441, %v2533
      %v2535 = vpop.f32.mrb[0].mxu0
      %v2536 = vadd.f32 %v2441, %v2535
      %v2537 = vpop.f32.mrb[0].mxu0
      %v2538 = vpop.f32.mrb[0].mxu0
      %2539 = vdwg.mxu0
      %v2540 = vadd.f32 %v2493, %v288
      %v2541 = vadd.f32 %v2495, %v289
      %v2542 = vadd.f32 %v2534, %v290
      %v2543 = vadd.f32 %v2536, %v291
      %2544 = vst [vmem:[%s278] sm:$0xff] %v2540
      %2545 = vst [vmem:[%s278 + $0x8] sm:$0xff] %v2541
      %2546 = vst [vmem:[%s278 + $0x10] sm:$0xff] %v2542
      %2547 = vst [vmem:[%s278 + $0x18] sm:$0xff] %v2543
      %p2548 = scmp.lt.s32.totalorder %s18, 1
      %s2549 = scalar_select %p2548, %s18, 1
      %s2550 = smul.addr %s2549, 4
      %s2551 = smul.addr %s2550, 8
      %s2552 = scalar_lea.vmem %s7, %s2551
      // Predicated region
      $region49: #{_stage_call.1} parent=47 // pred_check
        %p2553 = pneg %p188
      $region50: #{_stage_call.1} parent=47 // pred_check_branch
        %2555 = sbr.rel (%p2553) target = $region52
      $region51: #{_stage_call.1} parent=47 // pred_region
        _
      $region52: #{_stage_call.1} parent=47 // pred_fallthru
        _
    $region48: #{_stage_call.1} parent=5 // pred_fallthru
      _
    %p2556 = scmp.le.s32.totalorder 2, %s13
    // Predicated region
    $region53: #{_stage_call.1} parent=5 // pred_check
      %p2557 = pneg %p2556
    $region54: #{_stage_call.1} parent=5 // pred_check_branch
      %2559 = sbr.rel (%p2557) target = $region56
    $region55: #{_stage_call.1} parent=5 // pred_region
      %s2560 = ssub.s32 %s13, 2
      // Predicated region
      $region57: #{_stage_call.1} parent=55 // pred_check
        %p2561 = pneg %p194
      $region58: #{_stage_call.1} parent=55 // pred_check_branch
        %2563 = sbr.rel (%p2561) target = $region60
      $region59: #{_stage_call.1} parent=55 // pred_region
        %p2564 = scmp.lt.s32.totalorder %s19, 1
        %s2565 = scalar_select %p2564, %s19, 1
        %s2566 = smul.addr %s2565, 4
        %s2567 = smul.addr %s2566, 8
        %s2568 = scalar_lea.vmem %s7, %s2567
      $region60: #{_stage_call.1} parent=55 // pred_fallthru
        _
    $region56: #{_stage_call.1} parent=5 // pred_fallthru
      _
  $region6: #{_stage_call.1} parent=0 // loop_footer
    %s17 = sadd.s32 1, %s13
  $region7: #{_stage_call.1} parent=0 // loop_footer_branch
    %12 = sbr.rel target = $region3
  $region8: #{_stage_call.1} parent=0 // loop_exit
    _

</llo_original>
